<compile_context>
chip_gen: v7x
topology: tpu7x:2x2x1
jax: 0.10.0
libtpu: 0.0.40
codegen_flags: <defaults>
</compile_context>

<pallas_src>
import functools

import jax
import jax.numpy as jnp
from jax import lax
from jax.experimental import pallas as pl
from jax.experimental.pallas import tpu as pltpu


def _round_up(x, m):
    return (x + m - 1) // m * m


# ----------------------------------------------------------------------------
# Fused kernel: 4x ("same" Conv1d [+ ReLU]) for one batch chunk.
# ----------------------------------------------------------------------------
def _generator_kernel(*refs, n_layers, K, pad, body0, Bb, T, dims, relu_flags):
    """refs = (x_ref, w1, b1, ..., wn, bn, o_ref, slab).

    x_ref : (Bb, T, Cin0)   input block
    w{i}  : (K, Cin_i, Cout_i), b{i}: (1, Cout_i)   VMEM-resident weights
    o_ref : (Bb, T, Cout_last)
    slab  : (Bb, body0 + T + pad, Cmax) f32 VMEM padded-activation scratch;
            valid rows are [body0, body0 + T), halos are the pad rows on
            either side of that window.
    """
    x_ref = refs[0]
    o_ref = refs[1 + 2 * n_layers]
    slab = refs[2 + 2 * n_layers]
    M = Bb * T
    cmax = slab.shape[2]

    # Halo-only zeroing (per step, NOT program_id==0 -- grid axis is parallel).
    zeros_halo = jnp.zeros((Bb, pad, cmax), slab.dtype)
    slab[:, body0 - pad:body0, :] = zeros_halo
    slab[:, body0 + T:body0 + T + pad, :] = zeros_halo

    # Stage the input into the sublane-aligned slab body.
    slab[:, body0:body0 + T, :dims[0][0]] = x_ref[...].astype(slab.dtype)

    for li in range(n_layers):
        cin, cout = dims[li]
        w_ref = refs[1 + 2 * li]          # (K, cin, cout)
        b_ref = refs[2 + 2 * li]          # (1, cout)

        # K shifted matmuls accumulated in f32 (no im2col concatenate).
        acc = jnp.zeros((M, cout), jnp.float32)
        for k in range(K):
            r0 = body0 - pad + k
            tap = slab[:, r0:r0 + T, :cin].reshape(M, cin)
            acc = acc + jnp.dot(tap, w_ref[k],
                                preferred_element_type=jnp.float32)
        acc = acc + b_ref[...].astype(jnp.float32)
        if relu_flags[li]:
            acc = jnp.maximum(acc, 0.0)

        if li + 1 < n_layers:
            # Write back into the slab body for the next layer's taps.
            slab[:, body0:body0 + T, :cout] = (
                acc.reshape(Bb, T, cout).astype(slab.dtype))
        else:
            o_ref[...] = acc.reshape(Bb, T, cout).astype(o_ref.dtype)


# ----------------------------------------------------------------------------
# Wrapper: one pallas_call for the whole Generator forward.
# ----------------------------------------------------------------------------
def generator_forward(params, traj, traj_rel, *, pad=2):
    """params: list of (w (K,Cin,Cout), b (1,Cout)); traj_rel: (B,T,2) -> (B,T,2)."""
    del traj  # unused in the reference forward, kept for signature parity
    x = traj_rel.astype(jnp.float32)
    B, T, C0 = x.shape
    K = int(params[0][0].shape[0])
    assert K == 2 * pad + 1, "'same' conv requires K == 2*pad + 1"
    n_layers = len(params)
    dims = tuple((int(w.shape[1]), int(w.shape[2])) for w, _ in params)
    assert dims[0][0] == C0
    cmax = max(max(ci, co) for ci, co in dims)
    cout_last = dims[-1][1]
    relu_flags = tuple([True] * (n_layers - 1) + [False])   # ReLU after 1..n-1

    # Batch chunking: ~1024 matmul rows per grid step; pad B instead of
    # requiring Bb | B.  (For large B this leaves many parallel grid steps;
    # for tiny B we cap Bb at round_up(B, 8) to avoid gross over-padding.)
    Bb = max(1, 1024 // T)
    Bb = min(Bb, _round_up(B, 8))
    B_pad = _round_up(B, Bb)
    if B_pad != B:
        x = jnp.concatenate([x, jnp.zeros((B_pad - B, T, C0), x.dtype)], axis=0)
    steps = B_pad // Bb

    # Body rows start at a sublane-aligned offset inside the padded slab.
    body0 = _round_up(pad, 8)
    slab_rows = body0 + T + pad

    in_specs = [pl.BlockSpec((Bb, T, C0), lambda i: (i, 0, 0))]
    flat = []
    for (w, b), (ci, co) in zip(params, dims):
        flat += [w.astype(jnp.float32), b.astype(jnp.float32).reshape(1, co)]
        in_specs += [pl.BlockSpec((K, ci, co), lambda i: (0, 0, 0)),
                     pl.BlockSpec((1, co), lambda i: (0, 0))]

    kernel = functools.partial(
        _generator_kernel, n_layers=n_layers, K=K, pad=pad, body0=body0,
        Bb=Bb, T=T, dims=dims, relu_flags=relu_flags)

    out = pl.pallas_call(
        kernel,
        out_shape=jax.ShapeDtypeStruct((B_pad, T, cout_last), jnp.float32),
        grid=(steps,),
        in_specs=in_specs,
        out_specs=pl.BlockSpec((Bb, T, cout_last), lambda i: (i, 0, 0)),
        scratch_shapes=[pltpu.VMEM((Bb, slab_rows, cmax), jnp.float32)],
        compiler_params=pltpu.CompilerParams(
            dimension_semantics=("parallel",)),   # v7x: split batch over 2 TCs
    )(x, *flat)
    return out[:B]


# ----------------------------------------------------------------------------
# Parameter setup (mirrors the PyTorch module: 2->32->64->32->2, K=5, pad=2)
# ----------------------------------------------------------------------------
def init_generator_params(key, g_conv_dim=64, k_size=5):
    layer_dims = [(2, g_conv_dim // 2),
                  (g_conv_dim // 2, g_conv_dim),
                  (g_conv_dim, g_conv_dim // 2),
                  (g_conv_dim // 2, 2)]
    params = []
    for (cin, cout) in layer_dims:
        key, kw, kb = jax.random.split(key, 3)
        s = 1.0 / jnp.sqrt(cin * k_size)          # ~PyTorch uniform scale
        w = jax.random.uniform(kw, (k_size, cin, cout), jnp.float32, -s, s)
        b = jax.random.uniform(kb, (1, cout), jnp.float32, -s, s)
        params.append((w, b))
    return params


# ----------------------------------------------------------------------------
# Pure-JAX reference (lax.conv) for the correctness check
# ----------------------------------------------------------------------------
def generator_ref(params, traj_rel, *, pad=2):
    x = traj_rel
    relu_flags = [True] * (len(params) - 1) + [False]
    dn = ("NWC", "WIO", "NWC")
    for (w, b), relu in zip(params, relu_flags):
        x = lax.conv_general_dilated(x, w, window_strides=(1,),
                                     padding=[(pad, pad)],
                                     dimension_numbers=dn)
        x = x + b[0]
        if relu:
            x = jnp.maximum(x, 0.0)
    return x


if __name__ == "__main__":
    key = jax.random.PRNGKey(0)
    kp, k1, k2 = jax.random.split(key, 3)

    params = init_generator_params(kp)

    B, T = 2, 8
    traj = jax.random.normal(k1, (B, T, 2), jnp.float32)
    traj_rel = jax.random.normal(k2, (B, T, 2), jnp.float32)

    out = generator_forward(params, traj, traj_rel)
    out = jax.block_until_ready(out)

    ref = generator_ref(params, traj_rel)
    assert out.shape == (B, T, 2)
    assert jnp.allclose(out, ref, atol=1e-5, rtol=1e-5), "mismatch vs JAX reference"

    print("KERNEL_OK")
</pallas_src>

<mosaic_0001>
module attributes {stable_mosaic.version = 11 : i64} {
  func.func @_generator_kernel(%arg0: i32, %arg1: memref<8x8x2xf32, #tpu.memory_space<vmem>>, %arg2: memref<5x2x32xf32, #tpu.memory_space<vmem>>, %arg3: memref<1x32xf32, #tpu.memory_space<vmem>>, %arg4: memref<5x32x64xf32, #tpu.memory_space<vmem>>, %arg5: memref<1x64xf32, #tpu.memory_space<vmem>>, %arg6: memref<5x64x32xf32, #tpu.memory_space<vmem>>, %arg7: memref<1x32xf32, #tpu.memory_space<vmem>>, %arg8: memref<5x32x2xf32, #tpu.memory_space<vmem>>, %arg9: memref<1x2xf32, #tpu.memory_space<vmem>>, %arg10: memref<8x8x2xf32, #tpu.memory_space<vmem>>, %arg11: memref<8x18x64xf32, #tpu.memory_space<vmem>>) attributes {dimension_semantics = [#tpu.dimension_semantics<parallel>], iteration_bounds = array<i64: 1>, scalar_prefetch = 0 : i64, scratch_operands = 1 : i64, tpu.core_type = #tpu.core_type<tc>, window_params = [{transform_indices = @transform_0, window_bounds = array<i64: 8, 8, 2>}, {pipeline_mode = #tpu.pipeline_mode<synchronous>, transform_indices = @transform_1, window_bounds = array<i64: 5, 2, 32>}, {pipeline_mode = #tpu.pipeline_mode<synchronous>, transform_indices = @transform_2, window_bounds = array<i64: 1, 32>}, {pipeline_mode = #tpu.pipeline_mode<synchronous>, transform_indices = @transform_3, window_bounds = array<i64: 5, 32, 64>}, {pipeline_mode = #tpu.pipeline_mode<synchronous>, transform_indices = @transform_4, window_bounds = array<i64: 1, 64>}, {pipeline_mode = #tpu.pipeline_mode<synchronous>, transform_indices = @transform_5, window_bounds = array<i64: 5, 64, 32>}, {pipeline_mode = #tpu.pipeline_mode<synchronous>, transform_indices = @transform_6, window_bounds = array<i64: 1, 32>}, {pipeline_mode = #tpu.pipeline_mode<synchronous>, transform_indices = @transform_7, window_bounds = array<i64: 5, 32, 2>}, {pipeline_mode = #tpu.pipeline_mode<synchronous>, transform_indices = @transform_8, window_bounds = array<i64: 1, 2>}, {transform_indices = @transform_9, window_bounds = array<i64: 8, 8, 2>}]} {
    %cst = arith.constant 0.000000e+00 : f32
    %0 = vector.broadcast %cst : f32 to vector<8x2x64xf32>
    %c0 = arith.constant 0 : index
    %c6 = arith.constant 6 : index
    %c0_0 = arith.constant 0 : index
    %1 = vector.load %arg11[%c0, %c6, %c0_0] : memref<8x18x64xf32, #tpu.memory_space<vmem>>, vector<8x2x64xf32>
    tpu.vector_store %arg11[%c0, %c6, %c0_0], %0 {strides = array<i32>} : memref<8x18x64xf32, #tpu.memory_space<vmem>>, vector<8x2x64xf32>,
    %c0_1 = arith.constant 0 : index
    %c16 = arith.constant 16 : index
    %c0_2 = arith.constant 0 : index
    %2 = vector.load %arg11[%c0_1, %c16, %c0_2] : memref<8x18x64xf32, #tpu.memory_space<vmem>>, vector<8x2x64xf32>
    tpu.vector_store %arg11[%c0_1, %c16, %c0_2], %0 {strides = array<i32>} : memref<8x18x64xf32, #tpu.memory_space<vmem>>, vector<8x2x64xf32>,
    %c0_3 = arith.constant 0 : index
    %c0_4 = arith.constant 0 : index
    %c0_5 = arith.constant 0 : index
    %3 = vector.load %arg1[%c0_3, %c0_4, %c0_5] : memref<8x8x2xf32, #tpu.memory_space<vmem>>, vector<8x8x2xf32>
    %c0_6 = arith.constant 0 : index
    %c8 = arith.constant 8 : index
    %c0_7 = arith.constant 0 : index
    %4 = vector.load %arg11[%c0_6, %c8, %c0_7] : memref<8x18x64xf32, #tpu.memory_space<vmem>>, vector<8x8x2xf32>
    tpu.vector_store %arg11[%c0_6, %c8, %c0_7], %3 {strides = array<i32>} : memref<8x18x64xf32, #tpu.memory_space<vmem>>, vector<8x8x2xf32>,
    %cst_8 = arith.constant 0.000000e+00 : f32
    %5 = vector.broadcast %cst_8 : f32 to vector<64x32xf32>
    %c0_9 = arith.constant 0 : index
    %c6_10 = arith.constant 6 : index
    %c0_11 = arith.constant 0 : index
    %6 = vector.load %arg11[%c0_9, %c6_10, %c0_11] : memref<8x18x64xf32, #tpu.memory_space<vmem>>, vector<8x8x2xf32>
    %7 = vector.shape_cast %6 : vector<8x8x2xf32> to vector<64x2xf32>
    %c0_12 = arith.constant 0 : index
    %c0_13 = arith.constant 0 : index
    %c0_14 = arith.constant 0 : index
    %8 = vector.load %arg2[%c0_12, %c0_13, %c0_14] : memref<5x2x32xf32, #tpu.memory_space<vmem>>, vector<1x2x32xf32>
    %9 = vector.shape_cast %8 : vector<1x2x32xf32> to vector<2x32xf32>
    %cst_15 = arith.constant dense<0.000000e+00> : vector<64x32xf32>
    %10 = tpu.matmul %7, %9, %cst_15 {dimension_numbers = #tpu.dot_dimension_numbers<[1], [0], [0], [1], [0, 0, 1, 1], [], []>} : vector<64x2xf32>, vector<2x32xf32>, vector<64x32xf32> -> vector<64x32xf32>
    %11 = arith.addf %5, %10 : vector<64x32xf32>
    %c0_16 = arith.constant 0 : index
    %c7 = arith.constant 7 : index
    %c0_17 = arith.constant 0 : index
    %12 = vector.load %arg11[%c0_16, %c7, %c0_17] : memref<8x18x64xf32, #tpu.memory_space<vmem>>, vector<8x8x2xf32>
    %13 = vector.shape_cast %12 : vector<8x8x2xf32> to vector<64x2xf32>
    %c1 = arith.constant 1 : index
    %c0_18 = arith.constant 0 : index
    %c0_19 = arith.constant 0 : index
    %14 = vector.load %arg2[%c1, %c0_18, %c0_19] : memref<5x2x32xf32, #tpu.memory_space<vmem>>, vector<1x2x32xf32>
    %15 = vector.shape_cast %14 : vector<1x2x32xf32> to vector<2x32xf32>
    %cst_20 = arith.constant dense<0.000000e+00> : vector<64x32xf32>
    %16 = tpu.matmul %13, %15, %cst_20 {dimension_numbers = #tpu.dot_dimension_numbers<[1], [0], [0], [1], [0, 0, 1, 1], [], []>} : vector<64x2xf32>, vector<2x32xf32>, vector<64x32xf32> -> vector<64x32xf32>
    %17 = arith.addf %11, %16 : vector<64x32xf32>
    %c0_21 = arith.constant 0 : index
    %c8_22 = arith.constant 8 : index
    %c0_23 = arith.constant 0 : index
    %18 = vector.load %arg11[%c0_21, %c8_22, %c0_23] : memref<8x18x64xf32, #tpu.memory_space<vmem>>, vector<8x8x2xf32>
    %19 = vector.shape_cast %18 : vector<8x8x2xf32> to vector<64x2xf32>
    %c2 = arith.constant 2 : index
    %c0_24 = arith.constant 0 : index
    %c0_25 = arith.constant 0 : index
    %20 = vector.load %arg2[%c2, %c0_24, %c0_25] : memref<5x2x32xf32, #tpu.memory_space<vmem>>, vector<1x2x32xf32>
    %21 = vector.shape_cast %20 : vector<1x2x32xf32> to vector<2x32xf32>
    %cst_26 = arith.constant dense<0.000000e+00> : vector<64x32xf32>
    %22 = tpu.matmul %19, %21, %cst_26 {dimension_numbers = #tpu.dot_dimension_numbers<[1], [0], [0], [1], [0, 0, 1, 1], [], []>} : vector<64x2xf32>, vector<2x32xf32>, vector<64x32xf32> -> vector<64x32xf32>
    %23 = arith.addf %17, %22 : vector<64x32xf32>
    %c0_27 = arith.constant 0 : index
    %c9 = arith.constant 9 : index
    %c0_28 = arith.constant 0 : index
    %24 = vector.load %arg11[%c0_27, %c9, %c0_28] : memref<8x18x64xf32, #tpu.memory_space<vmem>>, vector<8x8x2xf32>
    %25 = vector.shape_cast %24 : vector<8x8x2xf32> to vector<64x2xf32>
    %c3 = arith.constant 3 : index
    %c0_29 = arith.constant 0 : index
    %c0_30 = arith.constant 0 : index
    %26 = vector.load %arg2[%c3, %c0_29, %c0_30] : memref<5x2x32xf32, #tpu.memory_space<vmem>>, vector<1x2x32xf32>
    %27 = vector.shape_cast %26 : vector<1x2x32xf32> to vector<2x32xf32>
    %cst_31 = arith.constant dense<0.000000e+00> : vector<64x32xf32>
    %28 = tpu.matmul %25, %27, %cst_31 {dimension_numbers = #tpu.dot_dimension_numbers<[1], [0], [0], [1], [0, 0, 1, 1], [], []>} : vector<64x2xf32>, vector<2x32xf32>, vector<64x32xf32> -> vector<64x32xf32>
    %29 = arith.addf %23, %28 : vector<64x32xf32>
    %c0_32 = arith.constant 0 : index
    %c10 = arith.constant 10 : index
    %c0_33 = arith.constant 0 : index
    %30 = vector.load %arg11[%c0_32, %c10, %c0_33] : memref<8x18x64xf32, #tpu.memory_space<vmem>>, vector<8x8x2xf32>
    %31 = vector.shape_cast %30 : vector<8x8x2xf32> to vector<64x2xf32>
    %c4 = arith.constant 4 : index
    %c0_34 = arith.constant 0 : index
    %c0_35 = arith.constant 0 : index
    %32 = vector.load %arg2[%c4, %c0_34, %c0_35] : memref<5x2x32xf32, #tpu.memory_space<vmem>>, vector<1x2x32xf32>
    %33 = vector.shape_cast %32 : vector<1x2x32xf32> to vector<2x32xf32>
    %cst_36 = arith.constant dense<0.000000e+00> : vector<64x32xf32>
    %34 = tpu.matmul %31, %33, %cst_36 {dimension_numbers = #tpu.dot_dimension_numbers<[1], [0], [0], [1], [0, 0, 1, 1], [], []>} : vector<64x2xf32>, vector<2x32xf32>, vector<64x32xf32> -> vector<64x32xf32>
    %35 = arith.addf %29, %34 : vector<64x32xf32>
    %c0_37 = arith.constant 0 : index
    %c0_38 = arith.constant 0 : index
    %36 = vector.load %arg3[%c0_37, %c0_38] : memref<1x32xf32, #tpu.memory_space<vmem>>, vector<1x32xf32>
    %37 = vector.broadcast %36 : vector<1x32xf32> to vector<64x32xf32>
    %38 = arith.addf %35, %37 : vector<64x32xf32>
    %cst_39 = arith.constant 0.000000e+00 : f32
    %39 = vector.broadcast %cst_39 : f32 to vector<64x32xf32>
    %40 = arith.maximumf %38, %39 : vector<64x32xf32>
    %41 = vector.shape_cast %40 : vector<64x32xf32> to vector<8x8x32xf32>
    %c0_40 = arith.constant 0 : index
    %c8_41 = arith.constant 8 : index
    %c0_42 = arith.constant 0 : index
    %42 = vector.load %arg11[%c0_40, %c8_41, %c0_42] : memref<8x18x64xf32, #tpu.memory_space<vmem>>, vector<8x8x32xf32>
    tpu.vector_store %arg11[%c0_40, %c8_41, %c0_42], %41 {strides = array<i32>} : memref<8x18x64xf32, #tpu.memory_space<vmem>>, vector<8x8x32xf32>,
    %cst_43 = arith.constant 0.000000e+00 : f32
    %43 = vector.broadcast %cst_43 : f32 to vector<64x64xf32>
    %c0_44 = arith.constant 0 : index
    %c6_45 = arith.constant 6 : index
    %c0_46 = arith.constant 0 : index
    %44 = vector.load %arg11[%c0_44, %c6_45, %c0_46] : memref<8x18x64xf32, #tpu.memory_space<vmem>>, vector<8x8x32xf32>
    %45 = vector.shape_cast %44 : vector<8x8x32xf32> to vector<64x32xf32>
    %c0_47 = arith.constant 0 : index
    %c0_48 = arith.constant 0 : index
    %c0_49 = arith.constant 0 : index
    %46 = vector.load %arg4[%c0_47, %c0_48, %c0_49] : memref<5x32x64xf32, #tpu.memory_space<vmem>>, vector<1x32x64xf32>
    %47 = vector.shape_cast %46 : vector<1x32x64xf32> to vector<32x64xf32>
    %cst_50 = arith.constant dense<0.000000e+00> : vector<64x64xf32>
    %48 = tpu.matmul %45, %47, %cst_50 {dimension_numbers = #tpu.dot_dimension_numbers<[1], [0], [0], [1], [0, 0, 1, 1], [], []>} : vector<64x32xf32>, vector<32x64xf32>, vector<64x64xf32> -> vector<64x64xf32>
    %49 = arith.addf %43, %48 : vector<64x64xf32>
    %c0_51 = arith.constant 0 : index
    %c7_52 = arith.constant 7 : index
    %c0_53 = arith.constant 0 : index
    %50 = vector.load %arg11[%c0_51, %c7_52, %c0_53] : memref<8x18x64xf32, #tpu.memory_space<vmem>>, vector<8x8x32xf32>
    %51 = vector.shape_cast %50 : vector<8x8x32xf32> to vector<64x32xf32>
    %c1_54 = arith.constant 1 : index
    %c0_55 = arith.constant 0 : index
    %c0_56 = arith.constant 0 : index
    %52 = vector.load %arg4[%c1_54, %c0_55, %c0_56] : memref<5x32x64xf32, #tpu.memory_space<vmem>>, vector<1x32x64xf32>
    %53 = vector.shape_cast %52 : vector<1x32x64xf32> to vector<32x64xf32>
    %cst_57 = arith.constant dense<0.000000e+00> : vector<64x64xf32>
    %54 = tpu.matmul %51, %53, %cst_57 {dimension_numbers = #tpu.dot_dimension_numbers<[1], [0], [0], [1], [0, 0, 1, 1], [], []>} : vector<64x32xf32>, vector<32x64xf32>, vector<64x64xf32> -> vector<64x64xf32>
    %55 = arith.addf %49, %54 : vector<64x64xf32>
    %c0_58 = arith.constant 0 : index
    %c8_59 = arith.constant 8 : index
    %c0_60 = arith.constant 0 : index
    %56 = vector.load %arg11[%c0_58, %c8_59, %c0_60] : memref<8x18x64xf32, #tpu.memory_space<vmem>>, vector<8x8x32xf32>
    %57 = vector.shape_cast %56 : vector<8x8x32xf32> to vector<64x32xf32>
    %c2_61 = arith.constant 2 : index
    %c0_62 = arith.constant 0 : index
    %c0_63 = arith.constant 0 : index
    %58 = vector.load %arg4[%c2_61, %c0_62, %c0_63] : memref<5x32x64xf32, #tpu.memory_space<vmem>>, vector<1x32x64xf32>
    %59 = vector.shape_cast %58 : vector<1x32x64xf32> to vector<32x64xf32>
    %cst_64 = arith.constant dense<0.000000e+00> : vector<64x64xf32>
    %60 = tpu.matmul %57, %59, %cst_64 {dimension_numbers = #tpu.dot_dimension_numbers<[1], [0], [0], [1], [0, 0, 1, 1], [], []>} : vector<64x32xf32>, vector<32x64xf32>, vector<64x64xf32> -> vector<64x64xf32>
    %61 = arith.addf %55, %60 : vector<64x64xf32>
    %c0_65 = arith.constant 0 : index
    %c9_66 = arith.constant 9 : index
    %c0_67 = arith.constant 0 : index
    %62 = vector.load %arg11[%c0_65, %c9_66, %c0_67] : memref<8x18x64xf32, #tpu.memory_space<vmem>>, vector<8x8x32xf32>
    %63 = vector.shape_cast %62 : vector<8x8x32xf32> to vector<64x32xf32>
    %c3_68 = arith.constant 3 : index
    %c0_69 = arith.constant 0 : index
    %c0_70 = arith.constant 0 : index
    %64 = vector.load %arg4[%c3_68, %c0_69, %c0_70] : memref<5x32x64xf32, #tpu.memory_space<vmem>>, vector<1x32x64xf32>
    %65 = vector.shape_cast %64 : vector<1x32x64xf32> to vector<32x64xf32>
    %cst_71 = arith.constant dense<0.000000e+00> : vector<64x64xf32>
    %66 = tpu.matmul %63, %65, %cst_71 {dimension_numbers = #tpu.dot_dimension_numbers<[1], [0], [0], [1], [0, 0, 1, 1], [], []>} : vector<64x32xf32>, vector<32x64xf32>, vector<64x64xf32> -> vector<64x64xf32>
    %67 = arith.addf %61, %66 : vector<64x64xf32>
    %c0_72 = arith.constant 0 : index
    %c10_73 = arith.constant 10 : index
    %c0_74 = arith.constant 0 : index
    %68 = vector.load %arg11[%c0_72, %c10_73, %c0_74] : memref<8x18x64xf32, #tpu.memory_space<vmem>>, vector<8x8x32xf32>
    %69 = vector.shape_cast %68 : vector<8x8x32xf32> to vector<64x32xf32>
    %c4_75 = arith.constant 4 : index
    %c0_76 = arith.constant 0 : index
    %c0_77 = arith.constant 0 : index
    %70 = vector.load %arg4[%c4_75, %c0_76, %c0_77] : memref<5x32x64xf32, #tpu.memory_space<vmem>>, vector<1x32x64xf32>
    %71 = vector.shape_cast %70 : vector<1x32x64xf32> to vector<32x64xf32>
    %cst_78 = arith.constant dense<0.000000e+00> : vector<64x64xf32>
    %72 = tpu.matmul %69, %71, %cst_78 {dimension_numbers = #tpu.dot_dimension_numbers<[1], [0], [0], [1], [0, 0, 1, 1], [], []>} : vector<64x32xf32>, vector<32x64xf32>, vector<64x64xf32> -> vector<64x64xf32>
    %73 = arith.addf %67, %72 : vector<64x64xf32>
    %c0_79 = arith.constant 0 : index
    %c0_80 = arith.constant 0 : index
    %74 = vector.load %arg5[%c0_79, %c0_80] : memref<1x64xf32, #tpu.memory_space<vmem>>, vector<1x64xf32>
    %75 = vector.broadcast %74 : vector<1x64xf32> to vector<64x64xf32>
    %76 = arith.addf %73, %75 : vector<64x64xf32>
    %cst_81 = arith.constant 0.000000e+00 : f32
    %77 = vector.broadcast %cst_81 : f32 to vector<64x64xf32>
    %78 = arith.maximumf %76, %77 : vector<64x64xf32>
    %79 = vector.shape_cast %78 : vector<64x64xf32> to vector<8x8x64xf32>
    %c0_82 = arith.constant 0 : index
    %c8_83 = arith.constant 8 : index
    %c0_84 = arith.constant 0 : index
    %80 = vector.load %arg11[%c0_82, %c8_83, %c0_84] : memref<8x18x64xf32, #tpu.memory_space<vmem>>, vector<8x8x64xf32>
    tpu.vector_store %arg11[%c0_82, %c8_83, %c0_84], %79 {strides = array<i32>} : memref<8x18x64xf32, #tpu.memory_space<vmem>>, vector<8x8x64xf32>,
    %cst_85 = arith.constant 0.000000e+00 : f32
    %81 = vector.broadcast %cst_85 : f32 to vector<64x32xf32>
    %c0_86 = arith.constant 0 : index
    %c6_87 = arith.constant 6 : index
    %c0_88 = arith.constant 0 : index
    %82 = vector.load %arg11[%c0_86, %c6_87, %c0_88] : memref<8x18x64xf32, #tpu.memory_space<vmem>>, vector<8x8x64xf32>
    %83 = vector.shape_cast %82 : vector<8x8x64xf32> to vector<64x64xf32>
    %c0_89 = arith.constant 0 : index
    %c0_90 = arith.constant 0 : index
    %c0_91 = arith.constant 0 : index
    %84 = vector.load %arg6[%c0_89, %c0_90, %c0_91] : memref<5x64x32xf32, #tpu.memory_space<vmem>>, vector<1x64x32xf32>
    %85 = vector.shape_cast %84 : vector<1x64x32xf32> to vector<64x32xf32>
    %cst_92 = arith.constant dense<0.000000e+00> : vector<64x32xf32>
    %86 = tpu.matmul %83, %85, %cst_92 {dimension_numbers = #tpu.dot_dimension_numbers<[1], [0], [0], [1], [0, 0, 1, 1], [], []>} : vector<64x64xf32>, vector<64x32xf32>, vector<64x32xf32> -> vector<64x32xf32>
    %87 = arith.addf %81, %86 : vector<64x32xf32>
    %c0_93 = arith.constant 0 : index
    %c7_94 = arith.constant 7 : index
    %c0_95 = arith.constant 0 : index
    %88 = vector.load %arg11[%c0_93, %c7_94, %c0_95] : memref<8x18x64xf32, #tpu.memory_space<vmem>>, vector<8x8x64xf32>
    %89 = vector.shape_cast %88 : vector<8x8x64xf32> to vector<64x64xf32>
    %c1_96 = arith.constant 1 : index
    %c0_97 = arith.constant 0 : index
    %c0_98 = arith.constant 0 : index
    %90 = vector.load %arg6[%c1_96, %c0_97, %c0_98] : memref<5x64x32xf32, #tpu.memory_space<vmem>>, vector<1x64x32xf32>
    %91 = vector.shape_cast %90 : vector<1x64x32xf32> to vector<64x32xf32>
    %cst_99 = arith.constant dense<0.000000e+00> : vector<64x32xf32>
    %92 = tpu.matmul %89, %91, %cst_99 {dimension_numbers = #tpu.dot_dimension_numbers<[1], [0], [0], [1], [0, 0, 1, 1], [], []>} : vector<64x64xf32>, vector<64x32xf32>, vector<64x32xf32> -> vector<64x32xf32>
    %93 = arith.addf %87, %92 : vector<64x32xf32>
    %c0_100 = arith.constant 0 : index
    %c8_101 = arith.constant 8 : index
    %c0_102 = arith.constant 0 : index
    %94 = vector.load %arg11[%c0_100, %c8_101, %c0_102] : memref<8x18x64xf32, #tpu.memory_space<vmem>>, vector<8x8x64xf32>
    %95 = vector.shape_cast %94 : vector<8x8x64xf32> to vector<64x64xf32>
    %c2_103 = arith.constant 2 : index
    %c0_104 = arith.constant 0 : index
    %c0_105 = arith.constant 0 : index
    %96 = vector.load %arg6[%c2_103, %c0_104, %c0_105] : memref<5x64x32xf32, #tpu.memory_space<vmem>>, vector<1x64x32xf32>
    %97 = vector.shape_cast %96 : vector<1x64x32xf32> to vector<64x32xf32>
    %cst_106 = arith.constant dense<0.000000e+00> : vector<64x32xf32>
    %98 = tpu.matmul %95, %97, %cst_106 {dimension_numbers = #tpu.dot_dimension_numbers<[1], [0], [0], [1], [0, 0, 1, 1], [], []>} : vector<64x64xf32>, vector<64x32xf32>, vector<64x32xf32> -> vector<64x32xf32>
    %99 = arith.addf %93, %98 : vector<64x32xf32>
    %c0_107 = arith.constant 0 : index
    %c9_108 = arith.constant 9 : index
    %c0_109 = arith.constant 0 : index
    %100 = vector.load %arg11[%c0_107, %c9_108, %c0_109] : memref<8x18x64xf32, #tpu.memory_space<vmem>>, vector<8x8x64xf32>
    %101 = vector.shape_cast %100 : vector<8x8x64xf32> to vector<64x64xf32>
    %c3_110 = arith.constant 3 : index
    %c0_111 = arith.constant 0 : index
    %c0_112 = arith.constant 0 : index
    %102 = vector.load %arg6[%c3_110, %c0_111, %c0_112] : memref<5x64x32xf32, #tpu.memory_space<vmem>>, vector<1x64x32xf32>
    %103 = vector.shape_cast %102 : vector<1x64x32xf32> to vector<64x32xf32>
    %cst_113 = arith.constant dense<0.000000e+00> : vector<64x32xf32>
    %104 = tpu.matmul %101, %103, %cst_113 {dimension_numbers = #tpu.dot_dimension_numbers<[1], [0], [0], [1], [0, 0, 1, 1], [], []>} : vector<64x64xf32>, vector<64x32xf32>, vector<64x32xf32> -> vector<64x32xf32>
    %105 = arith.addf %99, %104 : vector<64x32xf32>
    %c0_114 = arith.constant 0 : index
    %c10_115 = arith.constant 10 : index
    %c0_116 = arith.constant 0 : index
    %106 = vector.load %arg11[%c0_114, %c10_115, %c0_116] : memref<8x18x64xf32, #tpu.memory_space<vmem>>, vector<8x8x64xf32>
    %107 = vector.shape_cast %106 : vector<8x8x64xf32> to vector<64x64xf32>
    %c4_117 = arith.constant 4 : index
    %c0_118 = arith.constant 0 : index
    %c0_119 = arith.constant 0 : index
    %108 = vector.load %arg6[%c4_117, %c0_118, %c0_119] : memref<5x64x32xf32, #tpu.memory_space<vmem>>, vector<1x64x32xf32>
    %109 = vector.shape_cast %108 : vector<1x64x32xf32> to vector<64x32xf32>
    %cst_120 = arith.constant dense<0.000000e+00> : vector<64x32xf32>
    %110 = tpu.matmul %107, %109, %cst_120 {dimension_numbers = #tpu.dot_dimension_numbers<[1], [0], [0], [1], [0, 0, 1, 1], [], []>} : vector<64x64xf32>, vector<64x32xf32>, vector<64x32xf32> -> vector<64x32xf32>
    %111 = arith.addf %105, %110 : vector<64x32xf32>
    %c0_121 = arith.constant 0 : index
    %c0_122 = arith.constant 0 : index
    %112 = vector.load %arg7[%c0_121, %c0_122] : memref<1x32xf32, #tpu.memory_space<vmem>>, vector<1x32xf32>
    %113 = vector.broadcast %112 : vector<1x32xf32> to vector<64x32xf32>
    %114 = arith.addf %111, %113 : vector<64x32xf32>
    %cst_123 = arith.constant 0.000000e+00 : f32
    %115 = vector.broadcast %cst_123 : f32 to vector<64x32xf32>
    %116 = arith.maximumf %114, %115 : vector<64x32xf32>
    %117 = vector.shape_cast %116 : vector<64x32xf32> to vector<8x8x32xf32>
    %c0_124 = arith.constant 0 : index
    %c8_125 = arith.constant 8 : index
    %c0_126 = arith.constant 0 : index
    %118 = vector.load %arg11[%c0_124, %c8_125, %c0_126] : memref<8x18x64xf32, #tpu.memory_space<vmem>>, vector<8x8x32xf32>
    tpu.vector_store %arg11[%c0_124, %c8_125, %c0_126], %117 {strides = array<i32>} : memref<8x18x64xf32, #tpu.memory_space<vmem>>, vector<8x8x32xf32>,
    %cst_127 = arith.constant 0.000000e+00 : f32
    %119 = vector.broadcast %cst_127 : f32 to vector<64x2xf32>
    %c0_128 = arith.constant 0 : index
    %c6_129 = arith.constant 6 : index
    %c0_130 = arith.constant 0 : index
    %120 = vector.load %arg11[%c0_128, %c6_129, %c0_130] : memref<8x18x64xf32, #tpu.memory_space<vmem>>, vector<8x8x32xf32>
    %121 = vector.shape_cast %120 : vector<8x8x32xf32> to vector<64x32xf32>
    %c0_131 = arith.constant 0 : index
    %c0_132 = arith.constant 0 : index
    %c0_133 = arith.constant 0 : index
    %122 = vector.load %arg8[%c0_131, %c0_132, %c0_133] : memref<5x32x2xf32, #tpu.memory_space<vmem>>, vector<1x32x2xf32>
    %123 = vector.shape_cast %122 : vector<1x32x2xf32> to vector<32x2xf32>
    %cst_134 = arith.constant dense<0.000000e+00> : vector<64x2xf32>
    %124 = tpu.matmul %121, %123, %cst_134 {dimension_numbers = #tpu.dot_dimension_numbers<[1], [0], [0], [1], [0, 0, 1, 1], [], []>} : vector<64x32xf32>, vector<32x2xf32>, vector<64x2xf32> -> vector<64x2xf32>
    %125 = arith.addf %119, %124 : vector<64x2xf32>
    %c0_135 = arith.constant 0 : index
    %c7_136 = arith.constant 7 : index
    %c0_137 = arith.constant 0 : index
    %126 = vector.load %arg11[%c0_135, %c7_136, %c0_137] : memref<8x18x64xf32, #tpu.memory_space<vmem>>, vector<8x8x32xf32>
    %127 = vector.shape_cast %126 : vector<8x8x32xf32> to vector<64x32xf32>
    %c1_138 = arith.constant 1 : index
    %c0_139 = arith.constant 0 : index
    %c0_140 = arith.constant 0 : index
    %128 = vector.load %arg8[%c1_138, %c0_139, %c0_140] : memref<5x32x2xf32, #tpu.memory_space<vmem>>, vector<1x32x2xf32>
    %129 = vector.shape_cast %128 : vector<1x32x2xf32> to vector<32x2xf32>
    %cst_141 = arith.constant dense<0.000000e+00> : vector<64x2xf32>
    %130 = tpu.matmul %127, %129, %cst_141 {dimension_numbers = #tpu.dot_dimension_numbers<[1], [0], [0], [1], [0, 0, 1, 1], [], []>} : vector<64x32xf32>, vector<32x2xf32>, vector<64x2xf32> -> vector<64x2xf32>
    %131 = arith.addf %125, %130 : vector<64x2xf32>
    %c0_142 = arith.constant 0 : index
    %c8_143 = arith.constant 8 : index
    %c0_144 = arith.constant 0 : index
    %132 = vector.load %arg11[%c0_142, %c8_143, %c0_144] : memref<8x18x64xf32, #tpu.memory_space<vmem>>, vector<8x8x32xf32>
    %133 = vector.shape_cast %132 : vector<8x8x32xf32> to vector<64x32xf32>
    %c2_145 = arith.constant 2 : index
    %c0_146 = arith.constant 0 : index
    %c0_147 = arith.constant 0 : index
    %134 = vector.load %arg8[%c2_145, %c0_146, %c0_147] : memref<5x32x2xf32, #tpu.memory_space<vmem>>, vector<1x32x2xf32>
    %135 = vector.shape_cast %134 : vector<1x32x2xf32> to vector<32x2xf32>
    %cst_148 = arith.constant dense<0.000000e+00> : vector<64x2xf32>
    %136 = tpu.matmul %133, %135, %cst_148 {dimension_numbers = #tpu.dot_dimension_numbers<[1], [0], [0], [1], [0, 0, 1, 1], [], []>} : vector<64x32xf32>, vector<32x2xf32>, vector<64x2xf32> -> vector<64x2xf32>
    %137 = arith.addf %131, %136 : vector<64x2xf32>
    %c0_149 = arith.constant 0 : index
    %c9_150 = arith.constant 9 : index
    %c0_151 = arith.constant 0 : index
    %138 = vector.load %arg11[%c0_149, %c9_150, %c0_151] : memref<8x18x64xf32, #tpu.memory_space<vmem>>, vector<8x8x32xf32>
    %139 = vector.shape_cast %138 : vector<8x8x32xf32> to vector<64x32xf32>
    %c3_152 = arith.constant 3 : index
    %c0_153 = arith.constant 0 : index
    %c0_154 = arith.constant 0 : index
    %140 = vector.load %arg8[%c3_152, %c0_153, %c0_154] : memref<5x32x2xf32, #tpu.memory_space<vmem>>, vector<1x32x2xf32>
    %141 = vector.shape_cast %140 : vector<1x32x2xf32> to vector<32x2xf32>
    %cst_155 = arith.constant dense<0.000000e+00> : vector<64x2xf32>
    %142 = tpu.matmul %139, %141, %cst_155 {dimension_numbers = #tpu.dot_dimension_numbers<[1], [0], [0], [1], [0, 0, 1, 1], [], []>} : vector<64x32xf32>, vector<32x2xf32>, vector<64x2xf32> -> vector<64x2xf32>
    %143 = arith.addf %137, %142 : vector<64x2xf32>
    %c0_156 = arith.constant 0 : index
    %c10_157 = arith.constant 10 : index
    %c0_158 = arith.constant 0 : index
    %144 = vector.load %arg11[%c0_156, %c10_157, %c0_158] : memref<8x18x64xf32, #tpu.memory_space<vmem>>, vector<8x8x32xf32>
    %145 = vector.shape_cast %144 : vector<8x8x32xf32> to vector<64x32xf32>
    %c4_159 = arith.constant 4 : index
    %c0_160 = arith.constant 0 : index
    %c0_161 = arith.constant 0 : index
    %146 = vector.load %arg8[%c4_159, %c0_160, %c0_161] : memref<5x32x2xf32, #tpu.memory_space<vmem>>, vector<1x32x2xf32>
    %147 = vector.shape_cast %146 : vector<1x32x2xf32> to vector<32x2xf32>
    %cst_162 = arith.constant dense<0.000000e+00> : vector<64x2xf32>
    %148 = tpu.matmul %145, %147, %cst_162 {dimension_numbers = #tpu.dot_dimension_numbers<[1], [0], [0], [1], [0, 0, 1, 1], [], []>} : vector<64x32xf32>, vector<32x2xf32>, vector<64x2xf32> -> vector<64x2xf32>
    %149 = arith.addf %143, %148 : vector<64x2xf32>
    %c0_163 = arith.constant 0 : index
    %c0_164 = arith.constant 0 : index
    %150 = vector.load %arg9[%c0_163, %c0_164] : memref<1x2xf32, #tpu.memory_space<vmem>>, vector<1x2xf32>
    %151 = vector.broadcast %150 : vector<1x2xf32> to vector<64x2xf32>
    %152 = arith.addf %149, %151 : vector<64x2xf32>
    %153 = vector.shape_cast %152 : vector<64x2xf32> to vector<8x8x2xf32>
    %c0_165 = arith.constant 0 : index
    %c0_166 = arith.constant 0 : index
    %c0_167 = arith.constant 0 : index
    %154 = vector.load %arg10[%c0_165, %c0_166, %c0_167] : memref<8x8x2xf32, #tpu.memory_space<vmem>>, vector<8x8x2xf32>
    tpu.vector_store %arg10[%c0_165, %c0_166, %c0_167], %153 {strides = array<i32>} : memref<8x8x2xf32, #tpu.memory_space<vmem>>, vector<8x8x2xf32>,
    return
  }
  func.func @transform_0(%arg0: i32) -> (i32, i32, i32) {
    %c0_i32 = arith.constant 0 : i32
    %c0_i32_0 = arith.constant 0 : i32
    %c0_i32_1 = arith.constant 0 : i32
    return %arg0, %c0_i32, %c0_i32_0 : i32, i32, i32
  }
  func.func @transform_1(%arg0: i32) -> (i32, i32, i32) {
    %c0_i32 = arith.constant 0 : i32
    %c0_i32_0 = arith.constant 0 : i32
    %c0_i32_1 = arith.constant 0 : i32
    %c0_i32_2 = arith.constant 0 : i32
    return %c0_i32, %c0_i32_0, %c0_i32_1 : i32, i32, i32
  }
  func.func @transform_2(%arg0: i32) -> (i32, i32) {
    %c0_i32 = arith.constant 0 : i32
    %c0_i32_0 = arith.constant 0 : i32
    %c0_i32_1 = arith.constant 0 : i32
    return %c0_i32, %c0_i32_0 : i32, i32
  }
  func.func @transform_3(%arg0: i32) -> (i32, i32, i32) {
    %c0_i32 = arith.constant 0 : i32
    %c0_i32_0 = arith.constant 0 : i32
    %c0_i32_1 = arith.constant 0 : i32
    %c0_i32_2 = arith.constant 0 : i32
    return %c0_i32, %c0_i32_0, %c0_i32_1 : i32, i32, i32
  }
  func.func @transform_4(%arg0: i32) -> (i32, i32) {
    %c0_i32 = arith.constant 0 : i32
    %c0_i32_0 = arith.constant 0 : i32
    %c0_i32_1 = arith.constant 0 : i32
    return %c0_i32, %c0_i32_0 : i32, i32
  }
  func.func @transform_5(%arg0: i32) -> (i32, i32, i32) {
    %c0_i32 = arith.constant 0 : i32
    %c0_i32_0 = arith.constant 0 : i32
    %c0_i32_1 = arith.constant 0 : i32
    %c0_i32_2 = arith.constant 0 : i32
    return %c0_i32, %c0_i32_0, %c0_i32_1 : i32, i32, i32
  }
  func.func @transform_6(%arg0: i32) -> (i32, i32) {
    %c0_i32 = arith.constant 0 : i32
    %c0_i32_0 = arith.constant 0 : i32
    %c0_i32_1 = arith.constant 0 : i32
    return %c0_i32, %c0_i32_0 : i32, i32
  }
  func.func @transform_7(%arg0: i32) -> (i32, i32, i32) {
    %c0_i32 = arith.constant 0 : i32
    %c0_i32_0 = arith.constant 0 : i32
    %c0_i32_1 = arith.constant 0 : i32
    %c0_i32_2 = arith.constant 0 : i32
    return %c0_i32, %c0_i32_0, %c0_i32_1 : i32, i32, i32
  }
  func.func @transform_8(%arg0: i32) -> (i32, i32) {
    %c0_i32 = arith.constant 0 : i32
    %c0_i32_0 = arith.constant 0 : i32
    %c0_i32_1 = arith.constant 0 : i32
    return %c0_i32, %c0_i32_0 : i32, i32
  }
  func.func @transform_9(%arg0: i32) -> (i32, i32, i32) {
    %c0_i32 = arith.constant 0 : i32
    %c0_i32_0 = arith.constant 0 : i32
    %c0_i32_1 = arith.constant 0 : i32
    return %arg0, %c0_i32, %c0_i32_0 : i32, i32, i32
  }
}

</mosaic_0001>

<llo_original>
// kernel: tpu_custom_call.1
$region0: #{tpu_custom_call.1}
  #allocation0 [shape = 'u32[]', space=smem, size = 0x4, offset = 0x4, fixed_abs, tag = 'smem constant byte address 0x4 - core index']
  #allocation1 [shape = 'u32[144,128]{1,0:T(1,128)}', space=vmem, size = 0x12000, scoped, tag = 'internal scratch']
  #allocation2 [shape = 'f32[8,18,64]{2,1,0:T(8,128)}', space=vmem, size = 0x18000, scoped, tag = 'scratch operand']
  %s0 = inlined_call_operand.vmem [shape: f32[8,8,2], index: 0, kind: input, shape index: {}]
  %s1 = inlined_call_operand.vmem [shape: f32[5,2,32], index: 1, kind: input, shape index: {}]
  %s2 = inlined_call_operand.vmem [shape: f32[1,32], index: 2, kind: input, shape index: {}]
  %s3 = inlined_call_operand.vmem [shape: f32[5,32,64], index: 3, kind: input, shape index: {}]
  %s4 = inlined_call_operand.vmem [shape: f32[1,64], index: 4, kind: input, shape index: {}]
  %s5 = inlined_call_operand.vmem [shape: f32[5,64,32], index: 5, kind: input, shape index: {}]
  %s6 = inlined_call_operand.vmem [shape: f32[1,32], index: 6, kind: input, shape index: {}]
  %s7 = inlined_call_operand.vmem [shape: f32[5,32,2], index: 7, kind: input, shape index: {}]
  %s8 = inlined_call_operand.vmem [shape: f32[1,2], index: 8, kind: input, shape index: {}]
  %s9 = inlined_call_operand.vmem [shape: f32[8,8,2], index: 9, kind: output, shape index: {}]
  %s10 = sld [smem:[#allocation0]]
  $region46: #{tpu_custom_call.1} parent=0
    _
  %s12 = ssub.s32 1, %s10
  %s13 = scalar_select 0, %s12, %s10
  // Predicated region
  $region2: #{tpu_custom_call.1} parent=0 // pred_check
    _
  $region3: #{tpu_custom_call.1} parent=0 // pred_check_branch
    %15 = sbr.rel (0) target = $region5
  $region4: #{tpu_custom_call.1} parent=0 // pred_region
    _
  $region5: #{tpu_custom_call.1} parent=0 // pred_fallthru
    _
  // Predicated region
  $region6: #{tpu_custom_call.1} parent=0 // pred_check
    _
  $region7: #{tpu_custom_call.1} parent=0 // pred_check_branch
    %17 = sbr.rel (0) target = $region9
  $region8: #{tpu_custom_call.1} parent=0 // pred_region
    _
  $region9: #{tpu_custom_call.1} parent=0 // pred_fallthru
    _
  // Predicated region
  $region10: #{tpu_custom_call.1} parent=0 // pred_check
    _
  $region11: #{tpu_custom_call.1} parent=0 // pred_check_branch
    %19 = sbr.rel (0) target = $region13
  $region12: #{tpu_custom_call.1} parent=0 // pred_region
    _
  $region13: #{tpu_custom_call.1} parent=0 // pred_fallthru
    _
  // Predicated region
  $region14: #{tpu_custom_call.1} parent=0 // pred_check
    _
  $region15: #{tpu_custom_call.1} parent=0 // pred_check_branch
    %21 = sbr.rel (0) target = $region17
  $region16: #{tpu_custom_call.1} parent=0 // pred_region
    _
  $region17: #{tpu_custom_call.1} parent=0 // pred_fallthru
    _
  // Predicated region
  $region18: #{tpu_custom_call.1} parent=0 // pred_check
    _
  $region19: #{tpu_custom_call.1} parent=0 // pred_check_branch
    %23 = sbr.rel (0) target = $region21
  $region20: #{tpu_custom_call.1} parent=0 // pred_region
    _
  $region21: #{tpu_custom_call.1} parent=0 // pred_fallthru
    _
  // Predicated region
  $region22: #{tpu_custom_call.1} parent=0 // pred_check
    _
  $region23: #{tpu_custom_call.1} parent=0 // pred_check_branch
    %25 = sbr.rel (0) target = $region25
  $region24: #{tpu_custom_call.1} parent=0 // pred_region
    _
  $region25: #{tpu_custom_call.1} parent=0 // pred_fallthru
    _
  // Predicated region
  $region26: #{tpu_custom_call.1} parent=0 // pred_check
    _
  $region27: #{tpu_custom_call.1} parent=0 // pred_check_branch
    %27 = sbr.rel (0) target = $region29
  $region28: #{tpu_custom_call.1} parent=0 // pred_region
    _
  $region29: #{tpu_custom_call.1} parent=0 // pred_fallthru
    _
  // Predicated region
  $region30: #{tpu_custom_call.1} parent=0 // pred_check
    _
  $region31: #{tpu_custom_call.1} parent=0 // pred_check_branch
    %29 = sbr.rel (0) target = $region33
  $region32: #{tpu_custom_call.1} parent=0 // pred_region
    _
  $region33: #{tpu_custom_call.1} parent=0 // pred_fallthru
    _
  // Predicated region
  $region34: #{tpu_custom_call.1} parent=0 // pred_check
    _
  $region35: #{tpu_custom_call.1} parent=0 // pred_check_branch
    %31 = sbr.rel (0) target = $region37
  $region36: #{tpu_custom_call.1} parent=0 // pred_region
    _
  $region37: #{tpu_custom_call.1} parent=0 // pred_fallthru
    _
  %vm32 = vcmask 517120
  %33 = vst.msk [vmem:[#allocation2 + $0x6] sm:$0x3] %vm32, 0.0
  %34 = vst.msk [vmem:[#allocation2 + $0x1e] sm:$0x3] %vm32, 0.0
  %35 = vst.msk [vmem:[#allocation2 + $0x36] sm:$0x3] %vm32, 0.0
  %36 = vst.msk [vmem:[#allocation2 + $0x4e] sm:$0x3] %vm32, 0.0
  %37 = vst.msk [vmem:[#allocation2 + $0x66] sm:$0x3] %vm32, 0.0
  %38 = vst.msk [vmem:[#allocation2 + $0x7e] sm:$0x3] %vm32, 0.0
  %39 = vst.msk [vmem:[#allocation2 + $0x96] sm:$0x3] %vm32, 0.0
  %40 = vst.msk [vmem:[#allocation2 + $0xae] sm:$0x3] %vm32, 0.0
  %41 = vst.msk [vmem:[#allocation2 + $0x10] sm:$0x3] %vm32, 0.0
  %42 = vst.msk [vmem:[#allocation2 + $0x28] sm:$0x3] %vm32, 0.0
  %43 = vst.msk [vmem:[#allocation2 + $0x40] sm:$0x3] %vm32, 0.0
  %44 = vst.msk [vmem:[#allocation2 + $0x58] sm:$0x3] %vm32, 0.0
  %45 = vst.msk [vmem:[#allocation2 + $0x70] sm:$0x3] %vm32, 0.0
  %46 = vst.msk [vmem:[#allocation2 + $0x88] sm:$0x3] %vm32, 0.0
  %47 = vst.msk [vmem:[#allocation2 + $0xa0] sm:$0x3] %vm32, 0.0
  %48 = vst.msk [vmem:[#allocation2 + $0xb8] sm:$0x3] %vm32, 0.0
  %v49 = vld [vmem:[%s0] sm:$0xff]
  %v50 = vld [vmem:[%s0 + $0x8] sm:$0xff]
  %v51 = vld [vmem:[%s0 + $0x10] sm:$0xff]
  %v52 = vld [vmem:[%s0 + $0x18] sm:$0xff]
  %v53 = vld [vmem:[%s0 + $0x20] sm:$0xff]
  %v54 = vld [vmem:[%s0 + $0x28] sm:$0xff]
  %v55 = vld [vmem:[%s0 + $0x30] sm:$0xff]
  %v56 = vld [vmem:[%s0 + $0x38] sm:$0xff]
  %vm57 = vcmask 15360
  %58 = vst.msk [vmem:[#allocation2 + $0x8] sm:$0xff] %vm57, %v49
  %59 = vst.msk [vmem:[#allocation2 + $0x20] sm:$0xff] %vm57, %v50
  %60 = vst.msk [vmem:[#allocation2 + $0x38] sm:$0xff] %vm57, %v51
  %61 = vst.msk [vmem:[#allocation2 + $0x50] sm:$0xff] %vm57, %v52
  %62 = vst.msk [vmem:[#allocation2 + $0x68] sm:$0xff] %vm57, %v53
  %63 = vst.msk [vmem:[#allocation2 + $0x80] sm:$0xff] %vm57, %v54
  %64 = vst.msk [vmem:[#allocation2 + $0x98] sm:$0xff] %vm57, %v55
  %65 = vst.msk [vmem:[#allocation2 + $0xb0] sm:$0xff] %vm57, %v56
  %v66 = vld [vmem:[#allocation2 + $0x6] sm:$0xff]
  %v67 = vld [vmem:[#allocation2 + $0x1e] sm:$0xff]
  %v68 = vld [vmem:[#allocation2 + $0x36] sm:$0xff]
  %v69 = vld [vmem:[#allocation2 + $0x4e] sm:$0xff]
  %v70 = vld [vmem:[#allocation2 + $0x66] sm:$0xff]
  %v71 = vld [vmem:[#allocation2 + $0x7e] sm:$0xff]
  %v72 = vld [vmem:[#allocation2 + $0x96] sm:$0xff]
  %v73 = vld [vmem:[#allocation2 + $0xae] sm:$0xff]
  %v74 = vld [vmem:[%s1] sm:$0x3]
  %v75 = vld [vmem:[#allocation2 + $0x7] sm:$0xff]
  %v76 = vld [vmem:[#allocation2 + $0x1f] sm:$0xff]
  %v77 = vld [vmem:[#allocation2 + $0x37] sm:$0xff]
  %v78 = vld [vmem:[#allocation2 + $0x4f] sm:$0xff]
  %v79 = vld [vmem:[#allocation2 + $0x67] sm:$0xff]
  %v80 = vld [vmem:[#allocation2 + $0x7f] sm:$0xff]
  %v81 = vld [vmem:[#allocation2 + $0x97] sm:$0xff]
  %v82 = vld [vmem:[#allocation2 + $0xaf] sm:$0xff]
  %s83 = scalar_lea.vmem %s1, 2
  %v84 = vld [vmem:[%s83] sm:$0x3]
  %v86 = vsel %vm57, %v75, 0
  %v89 = vsel %vm57, %v76, 0
  %v92 = vsel %vm57, %v77, 0
  %v95 = vsel %vm57, %v78, 0
  %v98 = vsel %vm57, %v79, 0
  %v101 = vsel %vm57, %v80, 0
  %v104 = vsel %vm57, %v81, 0
  %v107 = vsel %vm57, %v82, 0
  %vm109 = vcmask 1041408
  %v111 = vsel %vm109, %v84, 0
  %113 = vmatprep.subr.mxu0 0.0
  %114 = vmatpush1.msra.mxu0 %v111
  %115 = vmatprep.subr.mxu0 0.0
  %116 = vmatpush1.msra.mxu0 0.0
  %117 = vmatprep.subr.mxu0 0.0
  %118 = vmatpush1.msra.mxu0 0.0
  %119 = vmatprep.subr.mxu0 0.0
  %120 = vmatpush1.msra.mxu0 0.0
  %121 = vmatprep.subr.mxu0 0.0
  %122 = vmatpush1.msra.mxu0 0.0
  %123 = vmatprep.subr.mxu0 0.0
  %124 = vmatpush1.msra.mxu0 0.0
  %125 = vmatprep.subr.mxu0 0.0
  %126 = vmatpush1.msra.mxu0 0.0
  %127 = vmatprep.subr.mxu0 0.0
  %128 = vmatpush1.msra.mxu0 0.0
  %129 = vmatprep.subr.mxu0 0.0
  %130 = vmatpush1.msra.mxu0 0.0
  %131 = vmatprep.subr.mxu0 0.0
  %132 = vmatpush1.msra.mxu0 0.0
  %133 = vmatprep.subr.mxu0 0.0
  %134 = vmatpush1.msra.mxu0 0.0
  %135 = vmatprep.subr.mxu0 0.0
  %136 = vmatpush1.msra.mxu0 0.0
  %137 = vmatprep.subr.mxu0 0.0
  %138 = vmatpush1.msra.mxu0 0.0
  %139 = vmatprep.subr.mxu0 0.0
  %140 = vmatpush1.msra.mxu0 0.0
  %141 = vmatprep.subr.mxu0 0.0
  %142 = vmatpush1.msra.mxu0 0.0
  %143 = vmatprep.subr.mxu0 0.0
  %144 = vmatpush1.msra.mxu0 0.0
  %145 = vmatprep.subr.mxu0 0.0
  %146 = vmatpush1.msra.mxu0 0.0
  %147 = vmatprep.subr.mxu0 0.0
  %148 = vmatpush1.msra.mxu0 0.0
  %149 = vmatprep.subr.mxu0 0.0
  %150 = vmatpush1.msra.mxu0 0.0
  %151 = vmatprep.subr.mxu0 0.0
  %152 = vmatpush1.msra.mxu0 0.0
  %153 = vmatprep.subr.mxu0 0.0
  %154 = vmatpush1.msra.mxu0 0.0
  %155 = vmatprep.subr.mxu0 0.0
  %156 = vmatpush1.msra.mxu0 0.0
  %157 = vmatprep.subr.mxu0 0.0
  %158 = vmatpush1.msra.mxu0 0.0
  %159 = vmatprep.subr.mxu0 0.0
  %160 = vmatpush1.msra.mxu0 0.0
  %161 = vmatprep.subr.mxu0 0.0
  %162 = vmatpush1.msra.mxu0 0.0
  %163 = vmatprep.subr.mxu0 0.0
  %164 = vmatpush1.msra.mxu0 0.0
  %165 = vmatprep.subr.mxu0 0.0
  %166 = vmatpush1.msra.mxu0 0.0
  %167 = vmatprep.subr.mxu0 0.0
  %168 = vmatpush1.msra.mxu0 0.0
  %169 = vmatprep.subr.mxu0 0.0
  %170 = vmatpush1.msra.mxu0 0.0
  %171 = vmatprep.subr.mxu0 0.0
  %172 = vmatpush1.msra.mxu0 0.0
  %173 = vmatprep.subr.mxu0 0.0
  %174 = vmatpush1.msra.mxu0 0.0
  %175 = vmatprep.subr.mxu0 0.0
  %176 = vmatpush1.msra.mxu0 0.0
  %177 = vmatprep.mubr.f32.mxu0 0.0
  %178 = vmatmul.mubr.f32.gmra.mrb[0].mxu0 %v86
  %v179 = vpop.f32.mrb[0].mxu0
  %v180 = vadd.f32 0.0, %v179
  %v181 = vpop.f32.mrb[0].mxu0
  %182 = vmatprep.mubr.f32.mxu0 0.0
  %183 = vmatmul.mubr.f32.gmra.mrb[0].mxu0 %v89
  %v184 = vpop.f32.mrb[0].mxu0
  %v185 = vadd.f32 0.0, %v184
  %v186 = vpop.f32.mrb[0].mxu0
  %187 = vmatprep.mubr.f32.mxu0 0.0
  %188 = vmatmul.mubr.f32.gmra.mrb[0].mxu0 %v92
  %v189 = vpop.f32.mrb[0].mxu0
  %v190 = vadd.f32 0.0, %v189
  %v191 = vpop.f32.mrb[0].mxu0
  %192 = vmatprep.mubr.f32.mxu0 0.0
  %193 = vmatmul.mubr.f32.gmra.mrb[0].mxu0 %v95
  %v194 = vpop.f32.mrb[0].mxu0
  %v195 = vadd.f32 0.0, %v194
  %v196 = vpop.f32.mrb[0].mxu0
  %197 = vmatprep.mubr.f32.mxu0 0.0
  %198 = vmatmul.mubr.f32.gmra.mrb[0].mxu0 %v98
  %v199 = vpop.f32.mrb[0].mxu0
  %v200 = vadd.f32 0.0, %v199
  %v201 = vpop.f32.mrb[0].mxu0
  %202 = vmatprep.mubr.f32.mxu0 0.0
  %203 = vmatmul.mubr.f32.gmra.mrb[0].mxu0 %v101
  %v204 = vpop.f32.mrb[0].mxu0
  %v205 = vadd.f32 0.0, %v204
  %v206 = vpop.f32.mrb[0].mxu0
  %207 = vmatprep.mubr.f32.mxu0 0.0
  %208 = vmatmul.mubr.f32.gmra.mrb[0].mxu0 %v104
  %v209 = vpop.f32.mrb[0].mxu0
  %v210 = vadd.f32 0.0, %v209
  %v211 = vpop.f32.mrb[0].mxu0
  %212 = vmatprep.mubr.f32.mxu0 0.0
  %213 = vmatmul.mubr.f32.gmra.mrb[0].mxu0 %v107
  %v214 = vpop.f32.mrb[0].mxu0
  %v215 = vadd.f32 0.0, %v214
  %v216 = vpop.f32.mrb[0].mxu0
  %217 = vdwg.mxu0
  %v219 = vsel %vm57, %v66, 0
  %v222 = vsel %vm57, %v67, 0
  %v225 = vsel %vm57, %v68, 0
  %v228 = vsel %vm57, %v69, 0
  %v231 = vsel %vm57, %v70, 0
  %v234 = vsel %vm57, %v71, 0
  %v237 = vsel %vm57, %v72, 0
  %v240 = vsel %vm57, %v73, 0
  %v243 = vsel %vm109, %v74, 0
  %245 = vmatprep.subr.mxu0 0.0
  %246 = vmatpush1.msra.mxu0 %v243
  %247 = vmatprep.subr.mxu0 0.0
  %248 = vmatpush1.msra.mxu0 0.0
  %249 = vmatprep.subr.mxu0 0.0
  %250 = vmatpush1.msra.mxu0 0.0
  %251 = vmatprep.subr.mxu0 0.0
  %252 = vmatpush1.msra.mxu0 0.0
  %253 = vmatprep.subr.mxu0 0.0
  %254 = vmatpush1.msra.mxu0 0.0
  %255 = vmatprep.subr.mxu0 0.0
  %256 = vmatpush1.msra.mxu0 0.0
  %257 = vmatprep.subr.mxu0 0.0
  %258 = vmatpush1.msra.mxu0 0.0
  %259 = vmatprep.subr.mxu0 0.0
  %260 = vmatpush1.msra.mxu0 0.0
  %261 = vmatprep.subr.mxu0 0.0
  %262 = vmatpush1.msra.mxu0 0.0
  %263 = vmatprep.subr.mxu0 0.0
  %264 = vmatpush1.msra.mxu0 0.0
  %265 = vmatprep.subr.mxu0 0.0
  %266 = vmatpush1.msra.mxu0 0.0
  %267 = vmatprep.subr.mxu0 0.0
  %268 = vmatpush1.msra.mxu0 0.0
  %269 = vmatprep.subr.mxu0 0.0
  %270 = vmatpush1.msra.mxu0 0.0
  %271 = vmatprep.subr.mxu0 0.0
  %272 = vmatpush1.msra.mxu0 0.0
  %273 = vmatprep.subr.mxu0 0.0
  %274 = vmatpush1.msra.mxu0 0.0
  %275 = vmatprep.subr.mxu0 0.0
  %276 = vmatpush1.msra.mxu0 0.0
  %277 = vmatprep.subr.mxu0 0.0
  %278 = vmatpush1.msra.mxu0 0.0
  %279 = vmatprep.subr.mxu0 0.0
  %280 = vmatpush1.msra.mxu0 0.0
  %281 = vmatprep.subr.mxu0 0.0
  %282 = vmatpush1.msra.mxu0 0.0
  %283 = vmatprep.subr.mxu0 0.0
  %284 = vmatpush1.msra.mxu0 0.0
  %285 = vmatprep.subr.mxu0 0.0
  %286 = vmatpush1.msra.mxu0 0.0
  %287 = vmatprep.subr.mxu0 0.0
  %288 = vmatpush1.msra.mxu0 0.0
  %289 = vmatprep.subr.mxu0 0.0
  %290 = vmatpush1.msra.mxu0 0.0
  %291 = vmatprep.subr.mxu0 0.0
  %292 = vmatpush1.msra.mxu0 0.0
  %293 = vmatprep.subr.mxu0 0.0
  %294 = vmatpush1.msra.mxu0 0.0
  %295 = vmatprep.subr.mxu0 0.0
  %296 = vmatpush1.msra.mxu0 0.0
  %297 = vmatprep.subr.mxu0 0.0
  %298 = vmatpush1.msra.mxu0 0.0
  %299 = vmatprep.subr.mxu0 0.0
  %300 = vmatpush1.msra.mxu0 0.0
  %301 = vmatprep.subr.mxu0 0.0
  %302 = vmatpush1.msra.mxu0 0.0
  %303 = vmatprep.subr.mxu0 0.0
  %304 = vmatpush1.msra.mxu0 0.0
  %305 = vmatprep.subr.mxu0 0.0
  %306 = vmatpush1.msra.mxu0 0.0
  %307 = vmatprep.subr.mxu0 0.0
  %308 = vmatpush1.msra.mxu0 0.0
  %309 = vmatprep.mubr.f32.mxu0 0.0
  %310 = vmatmul.mubr.f32.gmra.mrb[0].mxu0 %v219
  %v311 = vpop.f32.mrb[0].mxu0
  %v312 = vadd.f32 %v180, %v311
  %v313 = vpop.f32.mrb[0].mxu0
  %314 = vmatprep.mubr.f32.mxu0 0.0
  %315 = vmatmul.mubr.f32.gmra.mrb[0].mxu0 %v222
  %v316 = vpop.f32.mrb[0].mxu0
  %v317 = vadd.f32 %v185, %v316
  %v318 = vpop.f32.mrb[0].mxu0
  %319 = vmatprep.mubr.f32.mxu0 0.0
  %320 = vmatmul.mubr.f32.gmra.mrb[0].mxu0 %v225
  %v321 = vpop.f32.mrb[0].mxu0
  %v322 = vadd.f32 %v190, %v321
  %v323 = vpop.f32.mrb[0].mxu0
  %324 = vmatprep.mubr.f32.mxu0 0.0
  %325 = vmatmul.mubr.f32.gmra.mrb[0].mxu0 %v228
  %v326 = vpop.f32.mrb[0].mxu0
  %v327 = vadd.f32 %v195, %v326
  %v328 = vpop.f32.mrb[0].mxu0
  %329 = vmatprep.mubr.f32.mxu0 0.0
  %330 = vmatmul.mubr.f32.gmra.mrb[0].mxu0 %v231
  %v331 = vpop.f32.mrb[0].mxu0
  %v332 = vadd.f32 %v200, %v331
  %v333 = vpop.f32.mrb[0].mxu0
  %334 = vmatprep.mubr.f32.mxu0 0.0
  %335 = vmatmul.mubr.f32.gmra.mrb[0].mxu0 %v234
  %v336 = vpop.f32.mrb[0].mxu0
  %v337 = vadd.f32 %v205, %v336
  %v338 = vpop.f32.mrb[0].mxu0
  %339 = vmatprep.mubr.f32.mxu0 0.0
  %340 = vmatmul.mubr.f32.gmra.mrb[0].mxu0 %v237
  %v341 = vpop.f32.mrb[0].mxu0
  %v342 = vadd.f32 %v210, %v341
  %v343 = vpop.f32.mrb[0].mxu0
  %344 = vmatprep.mubr.f32.mxu0 0.0
  %345 = vmatmul.mubr.f32.gmra.mrb[0].mxu0 %v240
  %v346 = vpop.f32.mrb[0].mxu0
  %v347 = vadd.f32 %v215, %v346
  %v348 = vpop.f32.mrb[0].mxu0
  %349 = vdwg.mxu0
  %v350 = vld [vmem:[#allocation2 + $0x8] sm:$0xff]
  %v351 = vld [vmem:[#allocation2 + $0x20] sm:$0xff]
  %v352 = vld [vmem:[#allocation2 + $0x38] sm:$0xff]
  %v353 = vld [vmem:[#allocation2 + $0x50] sm:$0xff]
  %v354 = vld [vmem:[#allocation2 + $0x68] sm:$0xff]
  %v355 = vld [vmem:[#allocation2 + $0x80] sm:$0xff]
  %v356 = vld [vmem:[#allocation2 + $0x98] sm:$0xff]
  %v357 = vld [vmem:[#allocation2 + $0xb0] sm:$0xff]
  %s358 = scalar_lea.vmem %s1, 4
  %v359 = vld [vmem:[%s358] sm:$0x3]
  %v361 = vsel %vm57, %v350, 0
  %v364 = vsel %vm57, %v351, 0
  %v367 = vsel %vm57, %v352, 0
  %v370 = vsel %vm57, %v353, 0
  %v373 = vsel %vm57, %v354, 0
  %v376 = vsel %vm57, %v355, 0
  %v379 = vsel %vm57, %v356, 0
  %v382 = vsel %vm57, %v357, 0
  %v385 = vsel %vm109, %v359, 0
  %387 = vmatprep.subr.mxu0 0.0
  %388 = vmatpush1.msra.mxu0 %v385
  %389 = vmatprep.subr.mxu0 0.0
  %390 = vmatpush1.msra.mxu0 0.0
  %391 = vmatprep.subr.mxu0 0.0
  %392 = vmatpush1.msra.mxu0 0.0
  %393 = vmatprep.subr.mxu0 0.0
  %394 = vmatpush1.msra.mxu0 0.0
  %395 = vmatprep.subr.mxu0 0.0
  %396 = vmatpush1.msra.mxu0 0.0
  %397 = vmatprep.subr.mxu0 0.0
  %398 = vmatpush1.msra.mxu0 0.0
  %399 = vmatprep.subr.mxu0 0.0
  %400 = vmatpush1.msra.mxu0 0.0
  %401 = vmatprep.subr.mxu0 0.0
  %402 = vmatpush1.msra.mxu0 0.0
  %403 = vmatprep.subr.mxu0 0.0
  %404 = vmatpush1.msra.mxu0 0.0
  %405 = vmatprep.subr.mxu0 0.0
  %406 = vmatpush1.msra.mxu0 0.0
  %407 = vmatprep.subr.mxu0 0.0
  %408 = vmatpush1.msra.mxu0 0.0
  %409 = vmatprep.subr.mxu0 0.0
  %410 = vmatpush1.msra.mxu0 0.0
  %411 = vmatprep.subr.mxu0 0.0
  %412 = vmatpush1.msra.mxu0 0.0
  %413 = vmatprep.subr.mxu0 0.0
  %414 = vmatpush1.msra.mxu0 0.0
  %415 = vmatprep.subr.mxu0 0.0
  %416 = vmatpush1.msra.mxu0 0.0
  %417 = vmatprep.subr.mxu0 0.0
  %418 = vmatpush1.msra.mxu0 0.0
  %419 = vmatprep.subr.mxu0 0.0
  %420 = vmatpush1.msra.mxu0 0.0
  %421 = vmatprep.subr.mxu0 0.0
  %422 = vmatpush1.msra.mxu0 0.0
  %423 = vmatprep.subr.mxu0 0.0
  %424 = vmatpush1.msra.mxu0 0.0
  %425 = vmatprep.subr.mxu0 0.0
  %426 = vmatpush1.msra.mxu0 0.0
  %427 = vmatprep.subr.mxu0 0.0
  %428 = vmatpush1.msra.mxu0 0.0
  %429 = vmatprep.subr.mxu0 0.0
  %430 = vmatpush1.msra.mxu0 0.0
  %431 = vmatprep.subr.mxu0 0.0
  %432 = vmatpush1.msra.mxu0 0.0
  %433 = vmatprep.subr.mxu0 0.0
  %434 = vmatpush1.msra.mxu0 0.0
  %435 = vmatprep.subr.mxu0 0.0
  %436 = vmatpush1.msra.mxu0 0.0
  %437 = vmatprep.subr.mxu0 0.0
  %438 = vmatpush1.msra.mxu0 0.0
  %439 = vmatprep.subr.mxu0 0.0
  %440 = vmatpush1.msra.mxu0 0.0
  %441 = vmatprep.subr.mxu0 0.0
  %442 = vmatpush1.msra.mxu0 0.0
  %443 = vmatprep.subr.mxu0 0.0
  %444 = vmatpush1.msra.mxu0 0.0
  %445 = vmatprep.subr.mxu0 0.0
  %446 = vmatpush1.msra.mxu0 0.0
  %447 = vmatprep.subr.mxu0 0.0
  %448 = vmatpush1.msra.mxu0 0.0
  %449 = vmatprep.subr.mxu0 0.0
  %450 = vmatpush1.msra.mxu0 0.0
  %451 = vmatprep.mubr.f32.mxu0 0.0
  %452 = vmatmul.mubr.f32.gmra.mrb[0].mxu0 %v361
  %v453 = vpop.f32.mrb[0].mxu0
  %v454 = vadd.f32 0.0, %v453
  %v455 = vpop.f32.mrb[0].mxu0
  %456 = vmatprep.mubr.f32.mxu0 0.0
  %457 = vmatmul.mubr.f32.gmra.mrb[0].mxu0 %v364
  %v458 = vpop.f32.mrb[0].mxu0
  %v459 = vadd.f32 0.0, %v458
  %v460 = vpop.f32.mrb[0].mxu0
  %461 = vmatprep.mubr.f32.mxu0 0.0
  %462 = vmatmul.mubr.f32.gmra.mrb[0].mxu0 %v367
  %v463 = vpop.f32.mrb[0].mxu0
  %v464 = vadd.f32 0.0, %v463
  %v465 = vpop.f32.mrb[0].mxu0
  %466 = vmatprep.mubr.f32.mxu0 0.0
  %467 = vmatmul.mubr.f32.gmra.mrb[0].mxu0 %v370
  %v468 = vpop.f32.mrb[0].mxu0
  %v469 = vadd.f32 0.0, %v468
  %v470 = vpop.f32.mrb[0].mxu0
  %471 = vmatprep.mubr.f32.mxu0 0.0
  %472 = vmatmul.mubr.f32.gmra.mrb[0].mxu0 %v373
  %v473 = vpop.f32.mrb[0].mxu0
  %v474 = vadd.f32 0.0, %v473
  %v475 = vpop.f32.mrb[0].mxu0
  %476 = vmatprep.mubr.f32.mxu0 0.0
  %477 = vmatmul.mubr.f32.gmra.mrb[0].mxu0 %v376
  %v478 = vpop.f32.mrb[0].mxu0
  %v479 = vadd.f32 0.0, %v478
  %v480 = vpop.f32.mrb[0].mxu0
  %481 = vmatprep.mubr.f32.mxu0 0.0
  %482 = vmatmul.mubr.f32.gmra.mrb[0].mxu0 %v379
  %v483 = vpop.f32.mrb[0].mxu0
  %v484 = vadd.f32 0.0, %v483
  %v485 = vpop.f32.mrb[0].mxu0
  %486 = vmatprep.mubr.f32.mxu0 0.0
  %487 = vmatmul.mubr.f32.gmra.mrb[0].mxu0 %v382
  %v488 = vpop.f32.mrb[0].mxu0
  %v489 = vadd.f32 0.0, %v488
  %v490 = vpop.f32.mrb[0].mxu0
  %491 = vdwg.mxu0
  %v492 = vadd.f32 %v312, %v454
  %v493 = vadd.f32 %v317, %v459
  %v494 = vadd.f32 %v322, %v464
  %v495 = vadd.f32 %v327, %v469
  %v496 = vadd.f32 %v332, %v474
  %v497 = vadd.f32 %v337, %v479
  %v498 = vadd.f32 %v342, %v484
  %v499 = vadd.f32 %v347, %v489
  %v500 = vld [vmem:[#allocation2 + $0x9] sm:$0xff]
  %v501 = vld [vmem:[#allocation2 + $0x21] sm:$0xff]
  %v502 = vld [vmem:[#allocation2 + $0x39] sm:$0xff]
  %v503 = vld [vmem:[#allocation2 + $0x51] sm:$0xff]
  %v504 = vld [vmem:[#allocation2 + $0x69] sm:$0xff]
  %v505 = vld [vmem:[#allocation2 + $0x81] sm:$0xff]
  %v506 = vld [vmem:[#allocation2 + $0x99] sm:$0xff]
  %v507 = vld [vmem:[#allocation2 + $0xb1] sm:$0xff]
  %s508 = scalar_lea.vmem %s1, 6
  %v509 = vld [vmem:[%s508] sm:$0x3]
  %v511 = vsel %vm57, %v500, 0
  %v514 = vsel %vm57, %v501, 0
  %v517 = vsel %vm57, %v502, 0
  %v520 = vsel %vm57, %v503, 0
  %v523 = vsel %vm57, %v504, 0
  %v526 = vsel %vm57, %v505, 0
  %v529 = vsel %vm57, %v506, 0
  %v532 = vsel %vm57, %v507, 0
  %v535 = vsel %vm109, %v509, 0
  %537 = vmatprep.subr.mxu0 0.0
  %538 = vmatpush1.msra.mxu0 %v535
  %539 = vmatprep.subr.mxu0 0.0
  %540 = vmatpush1.msra.mxu0 0.0
  %541 = vmatprep.subr.mxu0 0.0
  %542 = vmatpush1.msra.mxu0 0.0
  %543 = vmatprep.subr.mxu0 0.0
  %544 = vmatpush1.msra.mxu0 0.0
  %545 = vmatprep.subr.mxu0 0.0
  %546 = vmatpush1.msra.mxu0 0.0
  %547 = vmatprep.subr.mxu0 0.0
  %548 = vmatpush1.msra.mxu0 0.0
  %549 = vmatprep.subr.mxu0 0.0
  %550 = vmatpush1.msra.mxu0 0.0
  %551 = vmatprep.subr.mxu0 0.0
  %552 = vmatpush1.msra.mxu0 0.0
  %553 = vmatprep.subr.mxu0 0.0
  %554 = vmatpush1.msra.mxu0 0.0
  %555 = vmatprep.subr.mxu0 0.0
  %556 = vmatpush1.msra.mxu0 0.0
  %557 = vmatprep.subr.mxu0 0.0
  %558 = vmatpush1.msra.mxu0 0.0
  %559 = vmatprep.subr.mxu0 0.0
  %560 = vmatpush1.msra.mxu0 0.0
  %561 = vmatprep.subr.mxu0 0.0
  %562 = vmatpush1.msra.mxu0 0.0
  %563 = vmatprep.subr.mxu0 0.0
  %564 = vmatpush1.msra.mxu0 0.0
  %565 = vmatprep.subr.mxu0 0.0
  %566 = vmatpush1.msra.mxu0 0.0
  %567 = vmatprep.subr.mxu0 0.0
  %568 = vmatpush1.msra.mxu0 0.0
  %569 = vmatprep.subr.mxu0 0.0
  %570 = vmatpush1.msra.mxu0 0.0
  %571 = vmatprep.subr.mxu0 0.0
  %572 = vmatpush1.msra.mxu0 0.0
  %573 = vmatprep.subr.mxu0 0.0
  %574 = vmatpush1.msra.mxu0 0.0
  %575 = vmatprep.subr.mxu0 0.0
  %576 = vmatpush1.msra.mxu0 0.0
  %577 = vmatprep.subr.mxu0 0.0
  %578 = vmatpush1.msra.mxu0 0.0
  %579 = vmatprep.subr.mxu0 0.0
  %580 = vmatpush1.msra.mxu0 0.0
  %581 = vmatprep.subr.mxu0 0.0
  %582 = vmatpush1.msra.mxu0 0.0
  %583 = vmatprep.subr.mxu0 0.0
  %584 = vmatpush1.msra.mxu0 0.0
  %585 = vmatprep.subr.mxu0 0.0
  %586 = vmatpush1.msra.mxu0 0.0
  %587 = vmatprep.subr.mxu0 0.0
  %588 = vmatpush1.msra.mxu0 0.0
  %589 = vmatprep.subr.mxu0 0.0
  %590 = vmatpush1.msra.mxu0 0.0
  %591 = vmatprep.subr.mxu0 0.0
  %592 = vmatpush1.msra.mxu0 0.0
  %593 = vmatprep.subr.mxu0 0.0
  %594 = vmatpush1.msra.mxu0 0.0
  %595 = vmatprep.subr.mxu0 0.0
  %596 = vmatpush1.msra.mxu0 0.0
  %597 = vmatprep.subr.mxu0 0.0
  %598 = vmatpush1.msra.mxu0 0.0
  %599 = vmatprep.subr.mxu0 0.0
  %600 = vmatpush1.msra.mxu0 0.0
  %601 = vmatprep.mubr.f32.mxu0 0.0
  %602 = vmatmul.mubr.f32.gmra.mrb[0].mxu0 %v511
  %v603 = vpop.f32.mrb[0].mxu0
  %v604 = vadd.f32 0.0, %v603
  %v605 = vpop.f32.mrb[0].mxu0
  %606 = vmatprep.mubr.f32.mxu0 0.0
  %607 = vmatmul.mubr.f32.gmra.mrb[0].mxu0 %v514
  %v608 = vpop.f32.mrb[0].mxu0
  %v609 = vadd.f32 0.0, %v608
  %v610 = vpop.f32.mrb[0].mxu0
  %611 = vmatprep.mubr.f32.mxu0 0.0
  %612 = vmatmul.mubr.f32.gmra.mrb[0].mxu0 %v517
  %v613 = vpop.f32.mrb[0].mxu0
  %v614 = vadd.f32 0.0, %v613
  %v615 = vpop.f32.mrb[0].mxu0
  %616 = vmatprep.mubr.f32.mxu0 0.0
  %617 = vmatmul.mubr.f32.gmra.mrb[0].mxu0 %v520
  %v618 = vpop.f32.mrb[0].mxu0
  %v619 = vadd.f32 0.0, %v618
  %v620 = vpop.f32.mrb[0].mxu0
  %621 = vmatprep.mubr.f32.mxu0 0.0
  %622 = vmatmul.mubr.f32.gmra.mrb[0].mxu0 %v523
  %v623 = vpop.f32.mrb[0].mxu0
  %v624 = vadd.f32 0.0, %v623
  %v625 = vpop.f32.mrb[0].mxu0
  %626 = vmatprep.mubr.f32.mxu0 0.0
  %627 = vmatmul.mubr.f32.gmra.mrb[0].mxu0 %v526
  %v628 = vpop.f32.mrb[0].mxu0
  %v629 = vadd.f32 0.0, %v628
  %v630 = vpop.f32.mrb[0].mxu0
  %631 = vmatprep.mubr.f32.mxu0 0.0
  %632 = vmatmul.mubr.f32.gmra.mrb[0].mxu0 %v529
  %v633 = vpop.f32.mrb[0].mxu0
  %v634 = vadd.f32 0.0, %v633
  %v635 = vpop.f32.mrb[0].mxu0
  %636 = vmatprep.mubr.f32.mxu0 0.0
  %637 = vmatmul.mubr.f32.gmra.mrb[0].mxu0 %v532
  %v638 = vpop.f32.mrb[0].mxu0
  %v639 = vadd.f32 0.0, %v638
  %v640 = vpop.f32.mrb[0].mxu0
  %641 = vdwg.mxu0
  %v642 = vadd.f32 %v492, %v604
  %v643 = vadd.f32 %v493, %v609
  %v644 = vadd.f32 %v494, %v614
  %v645 = vadd.f32 %v495, %v619
  %v646 = vadd.f32 %v496, %v624
  %v647 = vadd.f32 %v497, %v629
  %v648 = vadd.f32 %v498, %v634
  %v649 = vadd.f32 %v499, %v639
  %v650 = vld [vmem:[#allocation2 + $0xa] sm:$0xff]
  %v651 = vld [vmem:[#allocation2 + $0x22] sm:$0xff]
  %v652 = vld [vmem:[#allocation2 + $0x3a] sm:$0xff]
  %v653 = vld [vmem:[#allocation2 + $0x52] sm:$0xff]
  %v654 = vld [vmem:[#allocation2 + $0x6a] sm:$0xff]
  %v655 = vld [vmem:[#allocation2 + $0x82] sm:$0xff]
  %v656 = vld [vmem:[#allocation2 + $0x9a] sm:$0xff]
  %v657 = vld [vmem:[#allocation2 + $0xb2] sm:$0xff]
  %s658 = scalar_lea.vmem %s1, 8
  %v659 = vld [vmem:[%s658] sm:$0x3]
  %v661 = vsel %vm57, %v650, 0
  %v664 = vsel %vm57, %v651, 0
  %v667 = vsel %vm57, %v652, 0
  %v670 = vsel %vm57, %v653, 0
  %v673 = vsel %vm57, %v654, 0
  %v676 = vsel %vm57, %v655, 0
  %v679 = vsel %vm57, %v656, 0
  %v682 = vsel %vm57, %v657, 0
  %v685 = vsel %vm109, %v659, 0
  %687 = vmatprep.subr.mxu0 0.0
  %688 = vmatpush1.msra.mxu0 %v685
  %689 = vmatprep.subr.mxu0 0.0
  %690 = vmatpush1.msra.mxu0 0.0
  %691 = vmatprep.subr.mxu0 0.0
  %692 = vmatpush1.msra.mxu0 0.0
  %693 = vmatprep.subr.mxu0 0.0
  %694 = vmatpush1.msra.mxu0 0.0
  %695 = vmatprep.subr.mxu0 0.0
  %696 = vmatpush1.msra.mxu0 0.0
  %697 = vmatprep.subr.mxu0 0.0
  %698 = vmatpush1.msra.mxu0 0.0
  %699 = vmatprep.subr.mxu0 0.0
  %700 = vmatpush1.msra.mxu0 0.0
  %701 = vmatprep.subr.mxu0 0.0
  %702 = vmatpush1.msra.mxu0 0.0
  %703 = vmatprep.subr.mxu0 0.0
  %704 = vmatpush1.msra.mxu0 0.0
  %705 = vmatprep.subr.mxu0 0.0
  %706 = vmatpush1.msra.mxu0 0.0
  %707 = vmatprep.subr.mxu0 0.0
  %708 = vmatpush1.msra.mxu0 0.0
  %709 = vmatprep.subr.mxu0 0.0
  %710 = vmatpush1.msra.mxu0 0.0
  %711 = vmatprep.subr.mxu0 0.0
  %712 = vmatpush1.msra.mxu0 0.0
  %713 = vmatprep.subr.mxu0 0.0
  %714 = vmatpush1.msra.mxu0 0.0
  %715 = vmatprep.subr.mxu0 0.0
  %716 = vmatpush1.msra.mxu0 0.0
  %717 = vmatprep.subr.mxu0 0.0
  %718 = vmatpush1.msra.mxu0 0.0
  %719 = vmatprep.subr.mxu0 0.0
  %720 = vmatpush1.msra.mxu0 0.0
  %721 = vmatprep.subr.mxu0 0.0
  %722 = vmatpush1.msra.mxu0 0.0
  %723 = vmatprep.subr.mxu0 0.0
  %724 = vmatpush1.msra.mxu0 0.0
  %725 = vmatprep.subr.mxu0 0.0
  %726 = vmatpush1.msra.mxu0 0.0
  %727 = vmatprep.subr.mxu0 0.0
  %728 = vmatpush1.msra.mxu0 0.0
  %729 = vmatprep.subr.mxu0 0.0
  %730 = vmatpush1.msra.mxu0 0.0
  %731 = vmatprep.subr.mxu0 0.0
  %732 = vmatpush1.msra.mxu0 0.0
  %733 = vmatprep.subr.mxu0 0.0
  %734 = vmatpush1.msra.mxu0 0.0
  %735 = vmatprep.subr.mxu0 0.0
  %736 = vmatpush1.msra.mxu0 0.0
  %737 = vmatprep.subr.mxu0 0.0
  %738 = vmatpush1.msra.mxu0 0.0
  %739 = vmatprep.subr.mxu0 0.0
  %740 = vmatpush1.msra.mxu0 0.0
  %741 = vmatprep.subr.mxu0 0.0
  %742 = vmatpush1.msra.mxu0 0.0
  %743 = vmatprep.subr.mxu0 0.0
  %744 = vmatpush1.msra.mxu0 0.0
  %745 = vmatprep.subr.mxu0 0.0
  %746 = vmatpush1.msra.mxu0 0.0
  %747 = vmatprep.subr.mxu0 0.0
  %748 = vmatpush1.msra.mxu0 0.0
  %749 = vmatprep.subr.mxu0 0.0
  %750 = vmatpush1.msra.mxu0 0.0
  %751 = vmatprep.mubr.f32.mxu0 0.0
  %752 = vmatmul.mubr.f32.gmra.mrb[0].mxu0 %v661
  %v753 = vpop.f32.mrb[0].mxu0
  %v754 = vadd.f32 0.0, %v753
  %v755 = vpop.f32.mrb[0].mxu0
  %756 = vmatprep.mubr.f32.mxu0 0.0
  %757 = vmatmul.mubr.f32.gmra.mrb[0].mxu0 %v664
  %v758 = vpop.f32.mrb[0].mxu0
  %v759 = vadd.f32 0.0, %v758
  %v760 = vpop.f32.mrb[0].mxu0
  %761 = vmatprep.mubr.f32.mxu0 0.0
  %762 = vmatmul.mubr.f32.gmra.mrb[0].mxu0 %v667
  %v763 = vpop.f32.mrb[0].mxu0
  %v764 = vadd.f32 0.0, %v763
  %v765 = vpop.f32.mrb[0].mxu0
  %766 = vmatprep.mubr.f32.mxu0 0.0
  %767 = vmatmul.mubr.f32.gmra.mrb[0].mxu0 %v670
  %v768 = vpop.f32.mrb[0].mxu0
  %v769 = vadd.f32 0.0, %v768
  %v770 = vpop.f32.mrb[0].mxu0
  %771 = vmatprep.mubr.f32.mxu0 0.0
  %772 = vmatmul.mubr.f32.gmra.mrb[0].mxu0 %v673
  %v773 = vpop.f32.mrb[0].mxu0
  %v774 = vadd.f32 0.0, %v773
  %v775 = vpop.f32.mrb[0].mxu0
  %776 = vmatprep.mubr.f32.mxu0 0.0
  %777 = vmatmul.mubr.f32.gmra.mrb[0].mxu0 %v676
  %v778 = vpop.f32.mrb[0].mxu0
  %v779 = vadd.f32 0.0, %v778
  %v780 = vpop.f32.mrb[0].mxu0
  %781 = vmatprep.mubr.f32.mxu0 0.0
  %782 = vmatmul.mubr.f32.gmra.mrb[0].mxu0 %v679
  %v783 = vpop.f32.mrb[0].mxu0
  %v784 = vadd.f32 0.0, %v783
  %v785 = vpop.f32.mrb[0].mxu0
  %786 = vmatprep.mubr.f32.mxu0 0.0
  %787 = vmatmul.mubr.f32.gmra.mrb[0].mxu0 %v682
  %v788 = vpop.f32.mrb[0].mxu0
  %v789 = vadd.f32 0.0, %v788
  %v790 = vpop.f32.mrb[0].mxu0
  %791 = vdwg.mxu0
  %v792 = vadd.f32 %v642, %v754
  %v793 = vadd.f32 %v643, %v759
  %v794 = vadd.f32 %v644, %v764
  %v795 = vadd.f32 %v645, %v769
  %v796 = vadd.f32 %v646, %v774
  %v797 = vadd.f32 %v647, %v779
  %v798 = vadd.f32 %v648, %v784
  %v799 = vadd.f32 %v649, %v789
  %v800 = vld [vmem:[%s2] sm:$0x1]
  %v802 = vlaneseq
  %v803 = vshrl.u32 %v802, 7
  %v804 = vsub.s32 0, %v803
  %v805 = vrot.slane %v800, %v804
  %v807 = vadd.f32 %v792, %v805
  %v808 = vadd.f32 %v793, %v805
  %v809 = vadd.f32 %v794, %v805
  %v810 = vadd.f32 %v795, %v805
  %v811 = vadd.f32 %v796, %v805
  %v812 = vadd.f32 %v797, %v805
  %v813 = vadd.f32 %v798, %v805
  %v814 = vadd.f32 %v799, %v805
  %v815 = vmax.f32 %v807, 0.0
  %v816 = vmax.f32 %v808, 0.0
  %v817 = vmax.f32 %v809, 0.0
  %v818 = vmax.f32 %v810, 0.0
  %v819 = vmax.f32 %v811, 0.0
  %v820 = vmax.f32 %v812, 0.0
  %v821 = vmax.f32 %v813, 0.0
  %v822 = vmax.f32 %v814, 0.0
  %vm823 = vcmask 261120
  %824 = vst.msk [vmem:[#allocation2 + $0x8] sm:$0xff] %vm823, %v815
  %825 = vst.msk [vmem:[#allocation2 + $0x20] sm:$0xff] %vm823, %v816
  %826 = vst.msk [vmem:[#allocation2 + $0x38] sm:$0xff] %vm823, %v817
  %827 = vst.msk [vmem:[#allocation2 + $0x50] sm:$0xff] %vm823, %v818
  %828 = vst.msk [vmem:[#allocation2 + $0x68] sm:$0xff] %vm823, %v819
  %829 = vst.msk [vmem:[#allocation2 + $0x80] sm:$0xff] %vm823, %v820
  %830 = vst.msk [vmem:[#allocation2 + $0x98] sm:$0xff] %vm823, %v821
  %831 = vst.msk [vmem:[#allocation2 + $0xb0] sm:$0xff] %vm823, %v822
  %v832 = vld [vmem:[#allocation2 + $0x6] sm:$0xff]
  %v833 = vld [vmem:[#allocation2 + $0x1e] sm:$0xff]
  %v834 = vld [vmem:[#allocation2 + $0x36] sm:$0xff]
  %v835 = vld [vmem:[#allocation2 + $0x4e] sm:$0xff]
  %v836 = vld [vmem:[#allocation2 + $0x66] sm:$0xff]
  %v837 = vld [vmem:[#allocation2 + $0x7e] sm:$0xff]
  %v838 = vld [vmem:[#allocation2 + $0x96] sm:$0xff]
  %v839 = vld [vmem:[#allocation2 + $0xae] sm:$0xff]
  %v840 = vld [vmem:[%s3] sm:$0xff]
  %v841 = vld [vmem:[%s3 + $0x8] sm:$0xff]
  %v842 = vld [vmem:[%s3 + $0x10] sm:$0xff]
  %v843 = vld [vmem:[%s3 + $0x18] sm:$0xff]
  %v844 = vld [vmem:[#allocation2 + $0x7] sm:$0xff]
  %v845 = vld [vmem:[#allocation2 + $0x1f] sm:$0xff]
  %v846 = vld [vmem:[#allocation2 + $0x37] sm:$0xff]
  %v847 = vld [vmem:[#allocation2 + $0x4f] sm:$0xff]
  %v848 = vld [vmem:[#allocation2 + $0x67] sm:$0xff]
  %v849 = vld [vmem:[#allocation2 + $0x7f] sm:$0xff]
  %v850 = vld [vmem:[#allocation2 + $0x97] sm:$0xff]
  %v851 = vld [vmem:[#allocation2 + $0xaf] sm:$0xff]
  %s852 = scalar_lea.vmem %s3, 32
  %v853 = vld [vmem:[%s852] sm:$0xff]
  %v854 = vld [vmem:[%s852 + $0x8] sm:$0xff]
  %v855 = vld [vmem:[%s852 + $0x10] sm:$0xff]
  %v856 = vld [vmem:[%s852 + $0x18] sm:$0xff]
  %v858 = vsel %vm823, %v844, 0
  %v861 = vsel %vm823, %v845, 0
  %v864 = vsel %vm823, %v846, 0
  %v867 = vsel %vm823, %v847, 0
  %v870 = vsel %vm823, %v848, 0
  %v873 = vsel %vm823, %v849, 0
  %v876 = vsel %vm823, %v850, 0
  %v879 = vsel %vm823, %v851, 0
  %881 = vmatprep.subr.mxu0 0.0
  %882 = vmatpush1.msra.mxu0 %v853
  %883 = vmatprep.subr.mxu0 0.0
  %884 = vmatpush1.msra.mxu0 %v854
  %885 = vmatprep.subr.mxu0 0.0
  %886 = vmatpush1.msra.mxu0 %v855
  %887 = vmatprep.subr.mxu0 0.0
  %888 = vmatpush1.msra.mxu0 %v856
  %889 = vmatprep.subr.mxu0 0.0
  %890 = vmatpush1.msra.mxu0 0.0
  %891 = vmatprep.subr.mxu0 0.0
  %892 = vmatpush1.msra.mxu0 0.0
  %893 = vmatprep.subr.mxu0 0.0
  %894 = vmatpush1.msra.mxu0 0.0
  %895 = vmatprep.subr.mxu0 0.0
  %896 = vmatpush1.msra.mxu0 0.0
  %897 = vmatprep.subr.mxu0 0.0
  %898 = vmatpush1.msra.mxu0 0.0
  %899 = vmatprep.subr.mxu0 0.0
  %900 = vmatpush1.msra.mxu0 0.0
  %901 = vmatprep.subr.mxu0 0.0
  %902 = vmatpush1.msra.mxu0 0.0
  %903 = vmatprep.subr.mxu0 0.0
  %904 = vmatpush1.msra.mxu0 0.0
  %905 = vmatprep.subr.mxu0 0.0
  %906 = vmatpush1.msra.mxu0 0.0
  %907 = vmatprep.subr.mxu0 0.0
  %908 = vmatpush1.msra.mxu0 0.0
  %909 = vmatprep.subr.mxu0 0.0
  %910 = vmatpush1.msra.mxu0 0.0
  %911 = vmatprep.subr.mxu0 0.0
  %912 = vmatpush1.msra.mxu0 0.0
  %913 = vmatprep.subr.mxu0 0.0
  %914 = vmatpush1.msra.mxu0 0.0
  %915 = vmatprep.subr.mxu0 0.0
  %916 = vmatpush1.msra.mxu0 0.0
  %917 = vmatprep.subr.mxu0 0.0
  %918 = vmatpush1.msra.mxu0 0.0
  %919 = vmatprep.subr.mxu0 0.0
  %920 = vmatpush1.msra.mxu0 0.0
  %921 = vmatprep.subr.mxu0 0.0
  %922 = vmatpush1.msra.mxu0 0.0
  %923 = vmatprep.subr.mxu0 0.0
  %924 = vmatpush1.msra.mxu0 0.0
  %925 = vmatprep.subr.mxu0 0.0
  %926 = vmatpush1.msra.mxu0 0.0
  %927 = vmatprep.subr.mxu0 0.0
  %928 = vmatpush1.msra.mxu0 0.0
  %929 = vmatprep.subr.mxu0 0.0
  %930 = vmatpush1.msra.mxu0 0.0
  %931 = vmatprep.subr.mxu0 0.0
  %932 = vmatpush1.msra.mxu0 0.0
  %933 = vmatprep.subr.mxu0 0.0
  %934 = vmatpush1.msra.mxu0 0.0
  %935 = vmatprep.subr.mxu0 0.0
  %936 = vmatpush1.msra.mxu0 0.0
  %937 = vmatprep.subr.mxu0 0.0
  %938 = vmatpush1.msra.mxu0 0.0
  %939 = vmatprep.subr.mxu0 0.0
  %940 = vmatpush1.msra.mxu0 0.0
  %941 = vmatprep.subr.mxu0 0.0
  %942 = vmatpush1.msra.mxu0 0.0
  %943 = vmatprep.subr.mxu0 0.0
  %944 = vmatpush1.msra.mxu0 0.0
  %945 = vmatprep.mubr.f32.mxu0 0.0
  %946 = vmatmul.mubr.f32.gmra.mrb[0].mxu0 %v858
  %v947 = vpop.f32.mrb[0].mxu0
  %v948 = vadd.f32 0.0, %v947
  %v949 = vpop.f32.mrb[0].mxu0
  %950 = vmatprep.mubr.f32.mxu0 0.0
  %951 = vmatmul.mubr.f32.gmra.mrb[0].mxu0 %v861
  %v952 = vpop.f32.mrb[0].mxu0
  %v953 = vadd.f32 0.0, %v952
  %v954 = vpop.f32.mrb[0].mxu0
  %955 = vmatprep.mubr.f32.mxu0 0.0
  %956 = vmatmul.mubr.f32.gmra.mrb[0].mxu0 %v864
  %v957 = vpop.f32.mrb[0].mxu0
  %v958 = vadd.f32 0.0, %v957
  %v959 = vpop.f32.mrb[0].mxu0
  %960 = vmatprep.mubr.f32.mxu0 0.0
  %961 = vmatmul.mubr.f32.gmra.mrb[0].mxu0 %v867
  %v962 = vpop.f32.mrb[0].mxu0
  %v963 = vadd.f32 0.0, %v962
  %v964 = vpop.f32.mrb[0].mxu0
  %965 = vmatprep.mubr.f32.mxu0 0.0
  %966 = vmatmul.mubr.f32.gmra.mrb[0].mxu0 %v870
  %v967 = vpop.f32.mrb[0].mxu0
  %v968 = vadd.f32 0.0, %v967
  %v969 = vpop.f32.mrb[0].mxu0
  %970 = vmatprep.mubr.f32.mxu0 0.0
  %971 = vmatmul.mubr.f32.gmra.mrb[0].mxu0 %v873
  %v972 = vpop.f32.mrb[0].mxu0
  %v973 = vadd.f32 0.0, %v972
  %v974 = vpop.f32.mrb[0].mxu0
  %975 = vmatprep.mubr.f32.mxu0 0.0
  %976 = vmatmul.mubr.f32.gmra.mrb[0].mxu0 %v876
  %v977 = vpop.f32.mrb[0].mxu0
  %v978 = vadd.f32 0.0, %v977
  %v979 = vpop.f32.mrb[0].mxu0
  %980 = vmatprep.mubr.f32.mxu0 0.0
  %981 = vmatmul.mubr.f32.gmra.mrb[0].mxu0 %v879
  %v982 = vpop.f32.mrb[0].mxu0
  %v983 = vadd.f32 0.0, %v982
  %v984 = vpop.f32.mrb[0].mxu0
  %985 = vdwg.mxu0
  %v987 = vsel %vm823, %v832, 0
  %v990 = vsel %vm823, %v833, 0
  %v993 = vsel %vm823, %v834, 0
  %v996 = vsel %vm823, %v835, 0
  %v999 = vsel %vm823, %v836, 0
  %v1002 = vsel %vm823, %v837, 0
  %v1005 = vsel %vm823, %v838, 0
  %v1008 = vsel %vm823, %v839, 0
  %1010 = vmatprep.subr.mxu0 0.0
  %1011 = vmatpush1.msra.mxu0 %v840
  %1012 = vmatprep.subr.mxu0 0.0
  %1013 = vmatpush1.msra.mxu0 %v841
  %1014 = vmatprep.subr.mxu0 0.0
  %1015 = vmatpush1.msra.mxu0 %v842
  %1016 = vmatprep.subr.mxu0 0.0
  %1017 = vmatpush1.msra.mxu0 %v843
  %1018 = vmatprep.subr.mxu0 0.0
  %1019 = vmatpush1.msra.mxu0 0.0
  %1020 = vmatprep.subr.mxu0 0.0
  %1021 = vmatpush1.msra.mxu0 0.0
  %1022 = vmatprep.subr.mxu0 0.0
  %1023 = vmatpush1.msra.mxu0 0.0
  %1024 = vmatprep.subr.mxu0 0.0
  %1025 = vmatpush1.msra.mxu0 0.0
  %1026 = vmatprep.subr.mxu0 0.0
  %1027 = vmatpush1.msra.mxu0 0.0
  %1028 = vmatprep.subr.mxu0 0.0
  %1029 = vmatpush1.msra.mxu0 0.0
  %1030 = vmatprep.subr.mxu0 0.0
  %1031 = vmatpush1.msra.mxu0 0.0
  %1032 = vmatprep.subr.mxu0 0.0
  %1033 = vmatpush1.msra.mxu0 0.0
  %1034 = vmatprep.subr.mxu0 0.0
  %1035 = vmatpush1.msra.mxu0 0.0
  %1036 = vmatprep.subr.mxu0 0.0
  %1037 = vmatpush1.msra.mxu0 0.0
  %1038 = vmatprep.subr.mxu0 0.0
  %1039 = vmatpush1.msra.mxu0 0.0
  %1040 = vmatprep.subr.mxu0 0.0
  %1041 = vmatpush1.msra.mxu0 0.0
  %1042 = vmatprep.subr.mxu0 0.0
  %1043 = vmatpush1.msra.mxu0 0.0
  %1044 = vmatprep.subr.mxu0 0.0
  %1045 = vmatpush1.msra.mxu0 0.0
  %1046 = vmatprep.subr.mxu0 0.0
  %1047 = vmatpush1.msra.mxu0 0.0
  %1048 = vmatprep.subr.mxu0 0.0
  %1049 = vmatpush1.msra.mxu0 0.0
  %1050 = vmatprep.subr.mxu0 0.0
  %1051 = vmatpush1.msra.mxu0 0.0
  %1052 = vmatprep.subr.mxu0 0.0
  %1053 = vmatpush1.msra.mxu0 0.0
  %1054 = vmatprep.subr.mxu0 0.0
  %1055 = vmatpush1.msra.mxu0 0.0
  %1056 = vmatprep.subr.mxu0 0.0
  %1057 = vmatpush1.msra.mxu0 0.0
  %1058 = vmatprep.subr.mxu0 0.0
  %1059 = vmatpush1.msra.mxu0 0.0
  %1060 = vmatprep.subr.mxu0 0.0
  %1061 = vmatpush1.msra.mxu0 0.0
  %1062 = vmatprep.subr.mxu0 0.0
  %1063 = vmatpush1.msra.mxu0 0.0
  %1064 = vmatprep.subr.mxu0 0.0
  %1065 = vmatpush1.msra.mxu0 0.0
  %1066 = vmatprep.subr.mxu0 0.0
  %1067 = vmatpush1.msra.mxu0 0.0
  %1068 = vmatprep.subr.mxu0 0.0
  %1069 = vmatpush1.msra.mxu0 0.0
  %1070 = vmatprep.subr.mxu0 0.0
  %1071 = vmatpush1.msra.mxu0 0.0
  %1072 = vmatprep.subr.mxu0 0.0
  %1073 = vmatpush1.msra.mxu0 0.0
  %1074 = vmatprep.mubr.f32.mxu0 0.0
  %1075 = vmatmul.mubr.f32.gmra.mrb[0].mxu0 %v987
  %v1076 = vpop.f32.mrb[0].mxu0
  %v1077 = vadd.f32 %v948, %v1076
  %v1078 = vpop.f32.mrb[0].mxu0
  %1079 = vmatprep.mubr.f32.mxu0 0.0
  %1080 = vmatmul.mubr.f32.gmra.mrb[0].mxu0 %v990
  %v1081 = vpop.f32.mrb[0].mxu0
  %v1082 = vadd.f32 %v953, %v1081
  %v1083 = vpop.f32.mrb[0].mxu0
  %1084 = vmatprep.mubr.f32.mxu0 0.0
  %1085 = vmatmul.mubr.f32.gmra.mrb[0].mxu0 %v993
  %v1086 = vpop.f32.mrb[0].mxu0
  %v1087 = vadd.f32 %v958, %v1086
  %v1088 = vpop.f32.mrb[0].mxu0
  %1089 = vmatprep.mubr.f32.mxu0 0.0
  %1090 = vmatmul.mubr.f32.gmra.mrb[0].mxu0 %v996
  %v1091 = vpop.f32.mrb[0].mxu0
  %v1092 = vadd.f32 %v963, %v1091
  %v1093 = vpop.f32.mrb[0].mxu0
  %1094 = vmatprep.mubr.f32.mxu0 0.0
  %1095 = vmatmul.mubr.f32.gmra.mrb[0].mxu0 %v999
  %v1096 = vpop.f32.mrb[0].mxu0
  %v1097 = vadd.f32 %v968, %v1096
  %v1098 = vpop.f32.mrb[0].mxu0
  %1099 = vmatprep.mubr.f32.mxu0 0.0
  %1100 = vmatmul.mubr.f32.gmra.mrb[0].mxu0 %v1002
  %v1101 = vpop.f32.mrb[0].mxu0
  %v1102 = vadd.f32 %v973, %v1101
  %v1103 = vpop.f32.mrb[0].mxu0
  %1104 = vmatprep.mubr.f32.mxu0 0.0
  %1105 = vmatmul.mubr.f32.gmra.mrb[0].mxu0 %v1005
  %v1106 = vpop.f32.mrb[0].mxu0
  %v1107 = vadd.f32 %v978, %v1106
  %v1108 = vpop.f32.mrb[0].mxu0
  %1109 = vmatprep.mubr.f32.mxu0 0.0
  %1110 = vmatmul.mubr.f32.gmra.mrb[0].mxu0 %v1008
  %v1111 = vpop.f32.mrb[0].mxu0
  %v1112 = vadd.f32 %v983, %v1111
  %v1113 = vpop.f32.mrb[0].mxu0
  %1114 = vdwg.mxu0
  %v1115 = vld [vmem:[#allocation2 + $0x8] sm:$0xff]
  %v1116 = vld [vmem:[#allocation2 + $0x20] sm:$0xff]
  %v1117 = vld [vmem:[#allocation2 + $0x38] sm:$0xff]
  %v1118 = vld [vmem:[#allocation2 + $0x50] sm:$0xff]
  %v1119 = vld [vmem:[#allocation2 + $0x68] sm:$0xff]
  %v1120 = vld [vmem:[#allocation2 + $0x80] sm:$0xff]
  %v1121 = vld [vmem:[#allocation2 + $0x98] sm:$0xff]
  %v1122 = vld [vmem:[#allocation2 + $0xb0] sm:$0xff]
  %s1123 = scalar_lea.vmem %s3, 64
  %v1124 = vld [vmem:[%s1123] sm:$0xff]
  %v1125 = vld [vmem:[%s1123 + $0x8] sm:$0xff]
  %v1126 = vld [vmem:[%s1123 + $0x10] sm:$0xff]
  %v1127 = vld [vmem:[%s1123 + $0x18] sm:$0xff]
  %v1129 = vsel %vm823, %v1115, 0
  %v1132 = vsel %vm823, %v1116, 0
  %v1135 = vsel %vm823, %v1117, 0
  %v1138 = vsel %vm823, %v1118, 0
  %v1141 = vsel %vm823, %v1119, 0
  %v1144 = vsel %vm823, %v1120, 0
  %v1147 = vsel %vm823, %v1121, 0
  %v1150 = vsel %vm823, %v1122, 0
  %1152 = vmatprep.subr.mxu0 0.0
  %1153 = vmatpush1.msra.mxu0 %v1124
  %1154 = vmatprep.subr.mxu0 0.0
  %1155 = vmatpush1.msra.mxu0 %v1125
  %1156 = vmatprep.subr.mxu0 0.0
  %1157 = vmatpush1.msra.mxu0 %v1126
  %1158 = vmatprep.subr.mxu0 0.0
  %1159 = vmatpush1.msra.mxu0 %v1127
  %1160 = vmatprep.subr.mxu0 0.0
  %1161 = vmatpush1.msra.mxu0 0.0
  %1162 = vmatprep.subr.mxu0 0.0
  %1163 = vmatpush1.msra.mxu0 0.0
  %1164 = vmatprep.subr.mxu0 0.0
  %1165 = vmatpush1.msra.mxu0 0.0
  %1166 = vmatprep.subr.mxu0 0.0
  %1167 = vmatpush1.msra.mxu0 0.0
  %1168 = vmatprep.subr.mxu0 0.0
  %1169 = vmatpush1.msra.mxu0 0.0
  %1170 = vmatprep.subr.mxu0 0.0
  %1171 = vmatpush1.msra.mxu0 0.0
  %1172 = vmatprep.subr.mxu0 0.0
  %1173 = vmatpush1.msra.mxu0 0.0
  %1174 = vmatprep.subr.mxu0 0.0
  %1175 = vmatpush1.msra.mxu0 0.0
  %1176 = vmatprep.subr.mxu0 0.0
  %1177 = vmatpush1.msra.mxu0 0.0
  %1178 = vmatprep.subr.mxu0 0.0
  %1179 = vmatpush1.msra.mxu0 0.0
  %1180 = vmatprep.subr.mxu0 0.0
  %1181 = vmatpush1.msra.mxu0 0.0
  %1182 = vmatprep.subr.mxu0 0.0
  %1183 = vmatpush1.msra.mxu0 0.0
  %1184 = vmatprep.subr.mxu0 0.0
  %1185 = vmatpush1.msra.mxu0 0.0
  %1186 = vmatprep.subr.mxu0 0.0
  %1187 = vmatpush1.msra.mxu0 0.0
  %1188 = vmatprep.subr.mxu0 0.0
  %1189 = vmatpush1.msra.mxu0 0.0
  %1190 = vmatprep.subr.mxu0 0.0
  %1191 = vmatpush1.msra.mxu0 0.0
  %1192 = vmatprep.subr.mxu0 0.0
  %1193 = vmatpush1.msra.mxu0 0.0
  %1194 = vmatprep.subr.mxu0 0.0
  %1195 = vmatpush1.msra.mxu0 0.0
  %1196 = vmatprep.subr.mxu0 0.0
  %1197 = vmatpush1.msra.mxu0 0.0
  %1198 = vmatprep.subr.mxu0 0.0
  %1199 = vmatpush1.msra.mxu0 0.0
  %1200 = vmatprep.subr.mxu0 0.0
  %1201 = vmatpush1.msra.mxu0 0.0
  %1202 = vmatprep.subr.mxu0 0.0
  %1203 = vmatpush1.msra.mxu0 0.0
  %1204 = vmatprep.subr.mxu0 0.0
  %1205 = vmatpush1.msra.mxu0 0.0
  %1206 = vmatprep.subr.mxu0 0.0
  %1207 = vmatpush1.msra.mxu0 0.0
  %1208 = vmatprep.subr.mxu0 0.0
  %1209 = vmatpush1.msra.mxu0 0.0
  %1210 = vmatprep.subr.mxu0 0.0
  %1211 = vmatpush1.msra.mxu0 0.0
  %1212 = vmatprep.subr.mxu0 0.0
  %1213 = vmatpush1.msra.mxu0 0.0
  %1214 = vmatprep.subr.mxu0 0.0
  %1215 = vmatpush1.msra.mxu0 0.0
  %1216 = vmatprep.mubr.f32.mxu0 0.0
  %1217 = vmatmul.mubr.f32.gmra.mrb[0].mxu0 %v1129
  %v1218 = vpop.f32.mrb[0].mxu0
  %v1219 = vadd.f32 0.0, %v1218
  %v1220 = vpop.f32.mrb[0].mxu0
  %1221 = vmatprep.mubr.f32.mxu0 0.0
  %1222 = vmatmul.mubr.f32.gmra.mrb[0].mxu0 %v1132
  %v1223 = vpop.f32.mrb[0].mxu0
  %v1224 = vadd.f32 0.0, %v1223
  %v1225 = vpop.f32.mrb[0].mxu0
  %1226 = vmatprep.mubr.f32.mxu0 0.0
  %1227 = vmatmul.mubr.f32.gmra.mrb[0].mxu0 %v1135
  %v1228 = vpop.f32.mrb[0].mxu0
  %v1229 = vadd.f32 0.0, %v1228
  %v1230 = vpop.f32.mrb[0].mxu0
  %1231 = vmatprep.mubr.f32.mxu0 0.0
  %1232 = vmatmul.mubr.f32.gmra.mrb[0].mxu0 %v1138
  %v1233 = vpop.f32.mrb[0].mxu0
  %v1234 = vadd.f32 0.0, %v1233
  %v1235 = vpop.f32.mrb[0].mxu0
  %1236 = vmatprep.mubr.f32.mxu0 0.0
  %1237 = vmatmul.mubr.f32.gmra.mrb[0].mxu0 %v1141
  %v1238 = vpop.f32.mrb[0].mxu0
  %v1239 = vadd.f32 0.0, %v1238
  %v1240 = vpop.f32.mrb[0].mxu0
  %1241 = vmatprep.mubr.f32.mxu0 0.0
  %1242 = vmatmul.mubr.f32.gmra.mrb[0].mxu0 %v1144
  %v1243 = vpop.f32.mrb[0].mxu0
  %v1244 = vadd.f32 0.0, %v1243
  %v1245 = vpop.f32.mrb[0].mxu0
  %1246 = vmatprep.mubr.f32.mxu0 0.0
  %1247 = vmatmul.mubr.f32.gmra.mrb[0].mxu0 %v1147
  %v1248 = vpop.f32.mrb[0].mxu0
  %v1249 = vadd.f32 0.0, %v1248
  %v1250 = vpop.f32.mrb[0].mxu0
  %1251 = vmatprep.mubr.f32.mxu0 0.0
  %1252 = vmatmul.mubr.f32.gmra.mrb[0].mxu0 %v1150
  %v1253 = vpop.f32.mrb[0].mxu0
  %v1254 = vadd.f32 0.0, %v1253
  %v1255 = vpop.f32.mrb[0].mxu0
  %1256 = vdwg.mxu0
  %v1257 = vadd.f32 %v1077, %v1219
  %v1258 = vadd.f32 %v1082, %v1224
  %v1259 = vadd.f32 %v1087, %v1229
  %v1260 = vadd.f32 %v1092, %v1234
  %v1261 = vadd.f32 %v1097, %v1239
  %v1262 = vadd.f32 %v1102, %v1244
  %v1263 = vadd.f32 %v1107, %v1249
  %v1264 = vadd.f32 %v1112, %v1254
  %v1265 = vld [vmem:[#allocation2 + $0x9] sm:$0xff]
  %v1266 = vld [vmem:[#allocation2 + $0x21] sm:$0xff]
  %v1267 = vld [vmem:[#allocation2 + $0x39] sm:$0xff]
  %v1268 = vld [vmem:[#allocation2 + $0x51] sm:$0xff]
  %v1269 = vld [vmem:[#allocation2 + $0x69] sm:$0xff]
  %v1270 = vld [vmem:[#allocation2 + $0x81] sm:$0xff]
  %v1271 = vld [vmem:[#allocation2 + $0x99] sm:$0xff]
  %v1272 = vld [vmem:[#allocation2 + $0xb1] sm:$0xff]
  %s1273 = scalar_lea.vmem %s3, 96
  %v1274 = vld [vmem:[%s1273] sm:$0xff]
  %v1275 = vld [vmem:[%s1273 + $0x8] sm:$0xff]
  %v1276 = vld [vmem:[%s1273 + $0x10] sm:$0xff]
  %v1277 = vld [vmem:[%s1273 + $0x18] sm:$0xff]
  %v1279 = vsel %vm823, %v1265, 0
  %v1282 = vsel %vm823, %v1266, 0
  %v1285 = vsel %vm823, %v1267, 0
  %v1288 = vsel %vm823, %v1268, 0
  %v1291 = vsel %vm823, %v1269, 0
  %v1294 = vsel %vm823, %v1270, 0
  %v1297 = vsel %vm823, %v1271, 0
  %v1300 = vsel %vm823, %v1272, 0
  %1302 = vmatprep.subr.mxu0 0.0
  %1303 = vmatpush1.msra.mxu0 %v1274
  %1304 = vmatprep.subr.mxu0 0.0
  %1305 = vmatpush1.msra.mxu0 %v1275
  %1306 = vmatprep.subr.mxu0 0.0
  %1307 = vmatpush1.msra.mxu0 %v1276
  %1308 = vmatprep.subr.mxu0 0.0
  %1309 = vmatpush1.msra.mxu0 %v1277
  %1310 = vmatprep.subr.mxu0 0.0
  %1311 = vmatpush1.msra.mxu0 0.0
  %1312 = vmatprep.subr.mxu0 0.0
  %1313 = vmatpush1.msra.mxu0 0.0
  %1314 = vmatprep.subr.mxu0 0.0
  %1315 = vmatpush1.msra.mxu0 0.0
  %1316 = vmatprep.subr.mxu0 0.0
  %1317 = vmatpush1.msra.mxu0 0.0
  %1318 = vmatprep.subr.mxu0 0.0
  %1319 = vmatpush1.msra.mxu0 0.0
  %1320 = vmatprep.subr.mxu0 0.0
  %1321 = vmatpush1.msra.mxu0 0.0
  %1322 = vmatprep.subr.mxu0 0.0
  %1323 = vmatpush1.msra.mxu0 0.0
  %1324 = vmatprep.subr.mxu0 0.0
  %1325 = vmatpush1.msra.mxu0 0.0
  %1326 = vmatprep.subr.mxu0 0.0
  %1327 = vmatpush1.msra.mxu0 0.0
  %1328 = vmatprep.subr.mxu0 0.0
  %1329 = vmatpush1.msra.mxu0 0.0
  %1330 = vmatprep.subr.mxu0 0.0
  %1331 = vmatpush1.msra.mxu0 0.0
  %1332 = vmatprep.subr.mxu0 0.0
  %1333 = vmatpush1.msra.mxu0 0.0
  %1334 = vmatprep.subr.mxu0 0.0
  %1335 = vmatpush1.msra.mxu0 0.0
  %1336 = vmatprep.subr.mxu0 0.0
  %1337 = vmatpush1.msra.mxu0 0.0
  %1338 = vmatprep.subr.mxu0 0.0
  %1339 = vmatpush1.msra.mxu0 0.0
  %1340 = vmatprep.subr.mxu0 0.0
  %1341 = vmatpush1.msra.mxu0 0.0
  %1342 = vmatprep.subr.mxu0 0.0
  %1343 = vmatpush1.msra.mxu0 0.0
  %1344 = vmatprep.subr.mxu0 0.0
  %1345 = vmatpush1.msra.mxu0 0.0
  %1346 = vmatprep.subr.mxu0 0.0
  %1347 = vmatpush1.msra.mxu0 0.0
  %1348 = vmatprep.subr.mxu0 0.0
  %1349 = vmatpush1.msra.mxu0 0.0
  %1350 = vmatprep.subr.mxu0 0.0
  %1351 = vmatpush1.msra.mxu0 0.0
  %1352 = vmatprep.subr.mxu0 0.0
  %1353 = vmatpush1.msra.mxu0 0.0
  %1354 = vmatprep.subr.mxu0 0.0
  %1355 = vmatpush1.msra.mxu0 0.0
  %1356 = vmatprep.subr.mxu0 0.0
  %1357 = vmatpush1.msra.mxu0 0.0
  %1358 = vmatprep.subr.mxu0 0.0
  %1359 = vmatpush1.msra.mxu0 0.0
  %1360 = vmatprep.subr.mxu0 0.0
  %1361 = vmatpush1.msra.mxu0 0.0
  %1362 = vmatprep.subr.mxu0 0.0
  %1363 = vmatpush1.msra.mxu0 0.0
  %1364 = vmatprep.subr.mxu0 0.0
  %1365 = vmatpush1.msra.mxu0 0.0
  %1366 = vmatprep.mubr.f32.mxu0 0.0
  %1367 = vmatmul.mubr.f32.gmra.mrb[0].mxu0 %v1279
  %v1368 = vpop.f32.mrb[0].mxu0
  %v1369 = vadd.f32 0.0, %v1368
  %v1370 = vpop.f32.mrb[0].mxu0
  %1371 = vmatprep.mubr.f32.mxu0 0.0
  %1372 = vmatmul.mubr.f32.gmra.mrb[0].mxu0 %v1282
  %v1373 = vpop.f32.mrb[0].mxu0
  %v1374 = vadd.f32 0.0, %v1373
  %v1375 = vpop.f32.mrb[0].mxu0
  %1376 = vmatprep.mubr.f32.mxu0 0.0
  %1377 = vmatmul.mubr.f32.gmra.mrb[0].mxu0 %v1285
  %v1378 = vpop.f32.mrb[0].mxu0
  %v1379 = vadd.f32 0.0, %v1378
  %v1380 = vpop.f32.mrb[0].mxu0
  %1381 = vmatprep.mubr.f32.mxu0 0.0
  %1382 = vmatmul.mubr.f32.gmra.mrb[0].mxu0 %v1288
  %v1383 = vpop.f32.mrb[0].mxu0
  %v1384 = vadd.f32 0.0, %v1383
  %v1385 = vpop.f32.mrb[0].mxu0
  %1386 = vmatprep.mubr.f32.mxu0 0.0
  %1387 = vmatmul.mubr.f32.gmra.mrb[0].mxu0 %v1291
  %v1388 = vpop.f32.mrb[0].mxu0
  %v1389 = vadd.f32 0.0, %v1388
  %v1390 = vpop.f32.mrb[0].mxu0
  %1391 = vmatprep.mubr.f32.mxu0 0.0
  %1392 = vmatmul.mubr.f32.gmra.mrb[0].mxu0 %v1294
  %v1393 = vpop.f32.mrb[0].mxu0
  %v1394 = vadd.f32 0.0, %v1393
  %v1395 = vpop.f32.mrb[0].mxu0
  %1396 = vmatprep.mubr.f32.mxu0 0.0
  %1397 = vmatmul.mubr.f32.gmra.mrb[0].mxu0 %v1297
  %v1398 = vpop.f32.mrb[0].mxu0
  %v1399 = vadd.f32 0.0, %v1398
  %v1400 = vpop.f32.mrb[0].mxu0
  %1401 = vmatprep.mubr.f32.mxu0 0.0
  %1402 = vmatmul.mubr.f32.gmra.mrb[0].mxu0 %v1300
  %v1403 = vpop.f32.mrb[0].mxu0
  %v1404 = vadd.f32 0.0, %v1403
  %v1405 = vpop.f32.mrb[0].mxu0
  %1406 = vdwg.mxu0
  %v1407 = vadd.f32 %v1257, %v1369
  %v1408 = vadd.f32 %v1258, %v1374
  %v1409 = vadd.f32 %v1259, %v1379
  %v1410 = vadd.f32 %v1260, %v1384
  %v1411 = vadd.f32 %v1261, %v1389
  %v1412 = vadd.f32 %v1262, %v1394
  %v1413 = vadd.f32 %v1263, %v1399
  %v1414 = vadd.f32 %v1264, %v1404
  %v1415 = vld [vmem:[#allocation2 + $0xa] sm:$0xff]
  %v1416 = vld [vmem:[#allocation2 + $0x22] sm:$0xff]
  %v1417 = vld [vmem:[#allocation2 + $0x3a] sm:$0xff]
  %v1418 = vld [vmem:[#allocation2 + $0x52] sm:$0xff]
  %v1419 = vld [vmem:[#allocation2 + $0x6a] sm:$0xff]
  %v1420 = vld [vmem:[#allocation2 + $0x82] sm:$0xff]
  %v1421 = vld [vmem:[#allocation2 + $0x9a] sm:$0xff]
  %v1422 = vld [vmem:[#allocation2 + $0xb2] sm:$0xff]
  %s1423 = scalar_lea.vmem %s3, 128
  %v1424 = vld [vmem:[%s1423] sm:$0xff]
  %v1425 = vld [vmem:[%s1423 + $0x8] sm:$0xff]
  %v1426 = vld [vmem:[%s1423 + $0x10] sm:$0xff]
  %v1427 = vld [vmem:[%s1423 + $0x18] sm:$0xff]
  %v1429 = vsel %vm823, %v1415, 0
  %v1432 = vsel %vm823, %v1416, 0
  %v1435 = vsel %vm823, %v1417, 0
  %v1438 = vsel %vm823, %v1418, 0
  %v1441 = vsel %vm823, %v1419, 0
  %v1444 = vsel %vm823, %v1420, 0
  %v1447 = vsel %vm823, %v1421, 0
  %v1450 = vsel %vm823, %v1422, 0
  %1452 = vmatprep.subr.mxu0 0.0
  %1453 = vmatpush1.msra.mxu0 %v1424
  %1454 = vmatprep.subr.mxu0 0.0
  %1455 = vmatpush1.msra.mxu0 %v1425
  %1456 = vmatprep.subr.mxu0 0.0
  %1457 = vmatpush1.msra.mxu0 %v1426
  %1458 = vmatprep.subr.mxu0 0.0
  %1459 = vmatpush1.msra.mxu0 %v1427
  %1460 = vmatprep.subr.mxu0 0.0
  %1461 = vmatpush1.msra.mxu0 0.0
  %1462 = vmatprep.subr.mxu0 0.0
  %1463 = vmatpush1.msra.mxu0 0.0
  %1464 = vmatprep.subr.mxu0 0.0
  %1465 = vmatpush1.msra.mxu0 0.0
  %1466 = vmatprep.subr.mxu0 0.0
  %1467 = vmatpush1.msra.mxu0 0.0
  %1468 = vmatprep.subr.mxu0 0.0
  %1469 = vmatpush1.msra.mxu0 0.0
  %1470 = vmatprep.subr.mxu0 0.0
  %1471 = vmatpush1.msra.mxu0 0.0
  %1472 = vmatprep.subr.mxu0 0.0
  %1473 = vmatpush1.msra.mxu0 0.0
  %1474 = vmatprep.subr.mxu0 0.0
  %1475 = vmatpush1.msra.mxu0 0.0
  %1476 = vmatprep.subr.mxu0 0.0
  %1477 = vmatpush1.msra.mxu0 0.0
  %1478 = vmatprep.subr.mxu0 0.0
  %1479 = vmatpush1.msra.mxu0 0.0
  %1480 = vmatprep.subr.mxu0 0.0
  %1481 = vmatpush1.msra.mxu0 0.0
  %1482 = vmatprep.subr.mxu0 0.0
  %1483 = vmatpush1.msra.mxu0 0.0
  %1484 = vmatprep.subr.mxu0 0.0
  %1485 = vmatpush1.msra.mxu0 0.0
  %1486 = vmatprep.subr.mxu0 0.0
  %1487 = vmatpush1.msra.mxu0 0.0
  %1488 = vmatprep.subr.mxu0 0.0
  %1489 = vmatpush1.msra.mxu0 0.0
  %1490 = vmatprep.subr.mxu0 0.0
  %1491 = vmatpush1.msra.mxu0 0.0
  %1492 = vmatprep.subr.mxu0 0.0
  %1493 = vmatpush1.msra.mxu0 0.0
  %1494 = vmatprep.subr.mxu0 0.0
  %1495 = vmatpush1.msra.mxu0 0.0
  %1496 = vmatprep.subr.mxu0 0.0
  %1497 = vmatpush1.msra.mxu0 0.0
  %1498 = vmatprep.subr.mxu0 0.0
  %1499 = vmatpush1.msra.mxu0 0.0
  %1500 = vmatprep.subr.mxu0 0.0
  %1501 = vmatpush1.msra.mxu0 0.0
  %1502 = vmatprep.subr.mxu0 0.0
  %1503 = vmatpush1.msra.mxu0 0.0
  %1504 = vmatprep.subr.mxu0 0.0
  %1505 = vmatpush1.msra.mxu0 0.0
  %1506 = vmatprep.subr.mxu0 0.0
  %1507 = vmatpush1.msra.mxu0 0.0
  %1508 = vmatprep.subr.mxu0 0.0
  %1509 = vmatpush1.msra.mxu0 0.0
  %1510 = vmatprep.subr.mxu0 0.0
  %1511 = vmatpush1.msra.mxu0 0.0
  %1512 = vmatprep.subr.mxu0 0.0
  %1513 = vmatpush1.msra.mxu0 0.0
  %1514 = vmatprep.subr.mxu0 0.0
  %1515 = vmatpush1.msra.mxu0 0.0
  %1516 = vmatprep.mubr.f32.mxu0 0.0
  %1517 = vmatmul.mubr.f32.gmra.mrb[0].mxu0 %v1429
  %v1518 = vpop.f32.mrb[0].mxu0
  %v1519 = vadd.f32 0.0, %v1518
  %v1520 = vpop.f32.mrb[0].mxu0
  %1521 = vmatprep.mubr.f32.mxu0 0.0
  %1522 = vmatmul.mubr.f32.gmra.mrb[0].mxu0 %v1432
  %v1523 = vpop.f32.mrb[0].mxu0
  %v1524 = vadd.f32 0.0, %v1523
  %v1525 = vpop.f32.mrb[0].mxu0
  %1526 = vmatprep.mubr.f32.mxu0 0.0
  %1527 = vmatmul.mubr.f32.gmra.mrb[0].mxu0 %v1435
  %v1528 = vpop.f32.mrb[0].mxu0
  %v1529 = vadd.f32 0.0, %v1528
  %v1530 = vpop.f32.mrb[0].mxu0
  %1531 = vmatprep.mubr.f32.mxu0 0.0
  %1532 = vmatmul.mubr.f32.gmra.mrb[0].mxu0 %v1438
  %v1533 = vpop.f32.mrb[0].mxu0
  %v1534 = vadd.f32 0.0, %v1533
  %v1535 = vpop.f32.mrb[0].mxu0
  %1536 = vmatprep.mubr.f32.mxu0 0.0
  %1537 = vmatmul.mubr.f32.gmra.mrb[0].mxu0 %v1441
  %v1538 = vpop.f32.mrb[0].mxu0
  %v1539 = vadd.f32 0.0, %v1538
  %v1540 = vpop.f32.mrb[0].mxu0
  %1541 = vmatprep.mubr.f32.mxu0 0.0
  %1542 = vmatmul.mubr.f32.gmra.mrb[0].mxu0 %v1444
  %v1543 = vpop.f32.mrb[0].mxu0
  %v1544 = vadd.f32 0.0, %v1543
  %v1545 = vpop.f32.mrb[0].mxu0
  %1546 = vmatprep.mubr.f32.mxu0 0.0
  %1547 = vmatmul.mubr.f32.gmra.mrb[0].mxu0 %v1447
  %v1548 = vpop.f32.mrb[0].mxu0
  %v1549 = vadd.f32 0.0, %v1548
  %v1550 = vpop.f32.mrb[0].mxu0
  %1551 = vmatprep.mubr.f32.mxu0 0.0
  %1552 = vmatmul.mubr.f32.gmra.mrb[0].mxu0 %v1450
  %v1553 = vpop.f32.mrb[0].mxu0
  %v1554 = vadd.f32 0.0, %v1553
  %v1555 = vpop.f32.mrb[0].mxu0
  %1556 = vdwg.mxu0
  %v1557 = vadd.f32 %v1407, %v1519
  %v1558 = vadd.f32 %v1408, %v1524
  %v1559 = vadd.f32 %v1409, %v1529
  %v1560 = vadd.f32 %v1410, %v1534
  %v1561 = vadd.f32 %v1411, %v1539
  %v1562 = vadd.f32 %v1412, %v1544
  %v1563 = vadd.f32 %v1413, %v1549
  %v1564 = vadd.f32 %v1414, %v1554
  %v1565 = vld [vmem:[%s4] sm:$0x1]
  %v1567 = vlaneseq
  %v1568 = vshrl.u32 %v1567, 7
  %v1569 = vsub.s32 0, %v1568
  %v1570 = vrot.slane %v1565, %v1569
  %v1572 = vadd.f32 %v1557, %v1570
  %v1573 = vadd.f32 %v1558, %v1570
  %v1574 = vadd.f32 %v1559, %v1570
  %v1575 = vadd.f32 %v1560, %v1570
  %v1576 = vadd.f32 %v1561, %v1570
  %v1577 = vadd.f32 %v1562, %v1570
  %v1578 = vadd.f32 %v1563, %v1570
  %v1579 = vadd.f32 %v1564, %v1570
  %v1580 = vmax.f32 %v1572, 0.0
  %v1581 = vmax.f32 %v1573, 0.0
  %v1582 = vmax.f32 %v1574, 0.0
  %v1583 = vmax.f32 %v1575, 0.0
  %v1584 = vmax.f32 %v1576, 0.0
  %v1585 = vmax.f32 %v1577, 0.0
  %v1586 = vmax.f32 %v1578, 0.0
  %v1587 = vmax.f32 %v1579, 0.0
  %vm1588 = vcmask 523264
  %1589 = vst.msk [vmem:[#allocation2 + $0x8] sm:$0xff] %vm1588, %v1580
  %1590 = vst.msk [vmem:[#allocation2 + $0x20] sm:$0xff] %vm1588, %v1581
  %1591 = vst.msk [vmem:[#allocation2 + $0x38] sm:$0xff] %vm1588, %v1582
  %1592 = vst.msk [vmem:[#allocation2 + $0x50] sm:$0xff] %vm1588, %v1583
  %1593 = vst.msk [vmem:[#allocation2 + $0x68] sm:$0xff] %vm1588, %v1584
  %1594 = vst.msk [vmem:[#allocation2 + $0x80] sm:$0xff] %vm1588, %v1585
  %1595 = vst.msk [vmem:[#allocation2 + $0x98] sm:$0xff] %vm1588, %v1586
  %1596 = vst.msk [vmem:[#allocation2 + $0xb0] sm:$0xff] %vm1588, %v1587
  %v1597 = vld [vmem:[#allocation2 + $0x6] sm:$0xff]
  %v1598 = vld [vmem:[#allocation2 + $0x1e] sm:$0xff]
  %v1599 = vld [vmem:[#allocation2 + $0x36] sm:$0xff]
  %v1600 = vld [vmem:[#allocation2 + $0x4e] sm:$0xff]
  %v1601 = vld [vmem:[#allocation2 + $0x66] sm:$0xff]
  %v1602 = vld [vmem:[#allocation2 + $0x7e] sm:$0xff]
  %v1603 = vld [vmem:[#allocation2 + $0x96] sm:$0xff]
  %v1604 = vld [vmem:[#allocation2 + $0xae] sm:$0xff]
  %v1605 = vld [vmem:[%s5] sm:$0xff]
  %v1606 = vld [vmem:[%s5 + $0x8] sm:$0xff]
  %v1607 = vld [vmem:[%s5 + $0x10] sm:$0xff]
  %v1608 = vld [vmem:[%s5 + $0x18] sm:$0xff]
  %v1609 = vld [vmem:[%s5 + $0x20] sm:$0xff]
  %v1610 = vld [vmem:[%s5 + $0x28] sm:$0xff]
  %v1611 = vld [vmem:[%s5 + $0x30] sm:$0xff]
  %v1612 = vld [vmem:[%s5 + $0x38] sm:$0xff]
  %v1613 = vld [vmem:[#allocation2 + $0x7] sm:$0xff]
  %v1614 = vld [vmem:[#allocation2 + $0x1f] sm:$0xff]
  %v1615 = vld [vmem:[#allocation2 + $0x37] sm:$0xff]
  %v1616 = vld [vmem:[#allocation2 + $0x4f] sm:$0xff]
  %v1617 = vld [vmem:[#allocation2 + $0x67] sm:$0xff]
  %v1618 = vld [vmem:[#allocation2 + $0x7f] sm:$0xff]
  %v1619 = vld [vmem:[#allocation2 + $0x97] sm:$0xff]
  %v1620 = vld [vmem:[#allocation2 + $0xaf] sm:$0xff]
  %s1621 = scalar_lea.vmem %s5, 64
  %v1622 = vld [vmem:[%s1621] sm:$0xff]
  %v1623 = vld [vmem:[%s1621 + $0x8] sm:$0xff]
  %v1624 = vld [vmem:[%s1621 + $0x10] sm:$0xff]
  %v1625 = vld [vmem:[%s1621 + $0x18] sm:$0xff]
  %v1626 = vld [vmem:[%s1621 + $0x20] sm:$0xff]
  %v1627 = vld [vmem:[%s1621 + $0x28] sm:$0xff]
  %v1628 = vld [vmem:[%s1621 + $0x30] sm:$0xff]
  %v1629 = vld [vmem:[%s1621 + $0x38] sm:$0xff]
  %v1631 = vsel %vm1588, %v1613, 0
  %v1634 = vsel %vm1588, %v1614, 0
  %v1637 = vsel %vm1588, %v1615, 0
  %v1640 = vsel %vm1588, %v1616, 0
  %v1643 = vsel %vm1588, %v1617, 0
  %v1646 = vsel %vm1588, %v1618, 0
  %v1649 = vsel %vm1588, %v1619, 0
  %v1652 = vsel %vm1588, %v1620, 0
  %1654 = vmatprep.subr.mxu0 0.0
  %1655 = vmatpush1.msra.mxu0 %v1622
  %1656 = vmatprep.subr.mxu0 0.0
  %1657 = vmatpush1.msra.mxu0 %v1623
  %1658 = vmatprep.subr.mxu0 0.0
  %1659 = vmatpush1.msra.mxu0 %v1624
  %1660 = vmatprep.subr.mxu0 0.0
  %1661 = vmatpush1.msra.mxu0 %v1625
  %1662 = vmatprep.subr.mxu0 0.0
  %1663 = vmatpush1.msra.mxu0 %v1626
  %1664 = vmatprep.subr.mxu0 0.0
  %1665 = vmatpush1.msra.mxu0 %v1627
  %1666 = vmatprep.subr.mxu0 0.0
  %1667 = vmatpush1.msra.mxu0 %v1628
  %1668 = vmatprep.subr.mxu0 0.0
  %1669 = vmatpush1.msra.mxu0 %v1629
  %1670 = vmatprep.subr.mxu0 0.0
  %1671 = vmatpush1.msra.mxu0 0.0
  %1672 = vmatprep.subr.mxu0 0.0
  %1673 = vmatpush1.msra.mxu0 0.0
  %1674 = vmatprep.subr.mxu0 0.0
  %1675 = vmatpush1.msra.mxu0 0.0
  %1676 = vmatprep.subr.mxu0 0.0
  %1677 = vmatpush1.msra.mxu0 0.0
  %1678 = vmatprep.subr.mxu0 0.0
  %1679 = vmatpush1.msra.mxu0 0.0
  %1680 = vmatprep.subr.mxu0 0.0
  %1681 = vmatpush1.msra.mxu0 0.0
  %1682 = vmatprep.subr.mxu0 0.0
  %1683 = vmatpush1.msra.mxu0 0.0
  %1684 = vmatprep.subr.mxu0 0.0
  %1685 = vmatpush1.msra.mxu0 0.0
  %1686 = vmatprep.subr.mxu0 0.0
  %1687 = vmatpush1.msra.mxu0 0.0
  %1688 = vmatprep.subr.mxu0 0.0
  %1689 = vmatpush1.msra.mxu0 0.0
  %1690 = vmatprep.subr.mxu0 0.0
  %1691 = vmatpush1.msra.mxu0 0.0
  %1692 = vmatprep.subr.mxu0 0.0
  %1693 = vmatpush1.msra.mxu0 0.0
  %1694 = vmatprep.subr.mxu0 0.0
  %1695 = vmatpush1.msra.mxu0 0.0
  %1696 = vmatprep.subr.mxu0 0.0
  %1697 = vmatpush1.msra.mxu0 0.0
  %1698 = vmatprep.subr.mxu0 0.0
  %1699 = vmatpush1.msra.mxu0 0.0
  %1700 = vmatprep.subr.mxu0 0.0
  %1701 = vmatpush1.msra.mxu0 0.0
  %1702 = vmatprep.subr.mxu0 0.0
  %1703 = vmatpush1.msra.mxu0 0.0
  %1704 = vmatprep.subr.mxu0 0.0
  %1705 = vmatpush1.msra.mxu0 0.0
  %1706 = vmatprep.subr.mxu0 0.0
  %1707 = vmatpush1.msra.mxu0 0.0
  %1708 = vmatprep.subr.mxu0 0.0
  %1709 = vmatpush1.msra.mxu0 0.0
  %1710 = vmatprep.subr.mxu0 0.0
  %1711 = vmatpush1.msra.mxu0 0.0
  %1712 = vmatprep.subr.mxu0 0.0
  %1713 = vmatpush1.msra.mxu0 0.0
  %1714 = vmatprep.subr.mxu0 0.0
  %1715 = vmatpush1.msra.mxu0 0.0
  %1716 = vmatprep.subr.mxu0 0.0
  %1717 = vmatpush1.msra.mxu0 0.0
  %1718 = vmatprep.mubr.f32.mxu0 0.0
  %1719 = vmatmul.mubr.f32.gmra.mrb[0].mxu0 %v1631
  %v1720 = vpop.f32.mrb[0].mxu0
  %v1721 = vadd.f32 0.0, %v1720
  %v1722 = vpop.f32.mrb[0].mxu0
  %1723 = vmatprep.mubr.f32.mxu0 0.0
  %1724 = vmatmul.mubr.f32.gmra.mrb[0].mxu0 %v1634
  %v1725 = vpop.f32.mrb[0].mxu0
  %v1726 = vadd.f32 0.0, %v1725
  %v1727 = vpop.f32.mrb[0].mxu0
  %1728 = vmatprep.mubr.f32.mxu0 0.0
  %1729 = vmatmul.mubr.f32.gmra.mrb[0].mxu0 %v1637
  %v1730 = vpop.f32.mrb[0].mxu0
  %v1731 = vadd.f32 0.0, %v1730
  %v1732 = vpop.f32.mrb[0].mxu0
  %1733 = vmatprep.mubr.f32.mxu0 0.0
  %1734 = vmatmul.mubr.f32.gmra.mrb[0].mxu0 %v1640
  %v1735 = vpop.f32.mrb[0].mxu0
  %v1736 = vadd.f32 0.0, %v1735
  %v1737 = vpop.f32.mrb[0].mxu0
  %1738 = vmatprep.mubr.f32.mxu0 0.0
  %1739 = vmatmul.mubr.f32.gmra.mrb[0].mxu0 %v1643
  %v1740 = vpop.f32.mrb[0].mxu0
  %v1741 = vadd.f32 0.0, %v1740
  %v1742 = vpop.f32.mrb[0].mxu0
  %1743 = vmatprep.mubr.f32.mxu0 0.0
  %1744 = vmatmul.mubr.f32.gmra.mrb[0].mxu0 %v1646
  %v1745 = vpop.f32.mrb[0].mxu0
  %v1746 = vadd.f32 0.0, %v1745
  %v1747 = vpop.f32.mrb[0].mxu0
  %1748 = vmatprep.mubr.f32.mxu0 0.0
  %1749 = vmatmul.mubr.f32.gmra.mrb[0].mxu0 %v1649
  %v1750 = vpop.f32.mrb[0].mxu0
  %v1751 = vadd.f32 0.0, %v1750
  %v1752 = vpop.f32.mrb[0].mxu0
  %1753 = vmatprep.mubr.f32.mxu0 0.0
  %1754 = vmatmul.mubr.f32.gmra.mrb[0].mxu0 %v1652
  %v1755 = vpop.f32.mrb[0].mxu0
  %v1756 = vadd.f32 0.0, %v1755
  %v1757 = vpop.f32.mrb[0].mxu0
  %1758 = vdwg.mxu0
  %v1760 = vsel %vm1588, %v1597, 0
  %v1763 = vsel %vm1588, %v1598, 0
  %v1766 = vsel %vm1588, %v1599, 0
  %v1769 = vsel %vm1588, %v1600, 0
  %v1772 = vsel %vm1588, %v1601, 0
  %v1775 = vsel %vm1588, %v1602, 0
  %v1778 = vsel %vm1588, %v1603, 0
  %v1781 = vsel %vm1588, %v1604, 0
  %1783 = vmatprep.subr.mxu0 0.0
  %1784 = vmatpush1.msra.mxu0 %v1605
  %1785 = vmatprep.subr.mxu0 0.0
  %1786 = vmatpush1.msra.mxu0 %v1606
  %1787 = vmatprep.subr.mxu0 0.0
  %1788 = vmatpush1.msra.mxu0 %v1607
  %1789 = vmatprep.subr.mxu0 0.0
  %1790 = vmatpush1.msra.mxu0 %v1608
  %1791 = vmatprep.subr.mxu0 0.0
  %1792 = vmatpush1.msra.mxu0 %v1609
  %1793 = vmatprep.subr.mxu0 0.0
  %1794 = vmatpush1.msra.mxu0 %v1610
  %1795 = vmatprep.subr.mxu0 0.0
  %1796 = vmatpush1.msra.mxu0 %v1611
  %1797 = vmatprep.subr.mxu0 0.0
  %1798 = vmatpush1.msra.mxu0 %v1612
  %1799 = vmatprep.subr.mxu0 0.0
  %1800 = vmatpush1.msra.mxu0 0.0
  %1801 = vmatprep.subr.mxu0 0.0
  %1802 = vmatpush1.msra.mxu0 0.0
  %1803 = vmatprep.subr.mxu0 0.0
  %1804 = vmatpush1.msra.mxu0 0.0
  %1805 = vmatprep.subr.mxu0 0.0
  %1806 = vmatpush1.msra.mxu0 0.0
  %1807 = vmatprep.subr.mxu0 0.0
  %1808 = vmatpush1.msra.mxu0 0.0
  %1809 = vmatprep.subr.mxu0 0.0
  %1810 = vmatpush1.msra.mxu0 0.0
  %1811 = vmatprep.subr.mxu0 0.0
  %1812 = vmatpush1.msra.mxu0 0.0
  %1813 = vmatprep.subr.mxu0 0.0
  %1814 = vmatpush1.msra.mxu0 0.0
  %1815 = vmatprep.subr.mxu0 0.0
  %1816 = vmatpush1.msra.mxu0 0.0
  %1817 = vmatprep.subr.mxu0 0.0
  %1818 = vmatpush1.msra.mxu0 0.0
  %1819 = vmatprep.subr.mxu0 0.0
  %1820 = vmatpush1.msra.mxu0 0.0
  %1821 = vmatprep.subr.mxu0 0.0
  %1822 = vmatpush1.msra.mxu0 0.0
  %1823 = vmatprep.subr.mxu0 0.0
  %1824 = vmatpush1.msra.mxu0 0.0
  %1825 = vmatprep.subr.mxu0 0.0
  %1826 = vmatpush1.msra.mxu0 0.0
  %1827 = vmatprep.subr.mxu0 0.0
  %1828 = vmatpush1.msra.mxu0 0.0
  %1829 = vmatprep.subr.mxu0 0.0
  %1830 = vmatpush1.msra.mxu0 0.0
  %1831 = vmatprep.subr.mxu0 0.0
  %1832 = vmatpush1.msra.mxu0 0.0
  %1833 = vmatprep.subr.mxu0 0.0
  %1834 = vmatpush1.msra.mxu0 0.0
  %1835 = vmatprep.subr.mxu0 0.0
  %1836 = vmatpush1.msra.mxu0 0.0
  %1837 = vmatprep.subr.mxu0 0.0
  %1838 = vmatpush1.msra.mxu0 0.0
  %1839 = vmatprep.subr.mxu0 0.0
  %1840 = vmatpush1.msra.mxu0 0.0
  %1841 = vmatprep.subr.mxu0 0.0
  %1842 = vmatpush1.msra.mxu0 0.0
  %1843 = vmatprep.subr.mxu0 0.0
  %1844 = vmatpush1.msra.mxu0 0.0
  %1845 = vmatprep.subr.mxu0 0.0
  %1846 = vmatpush1.msra.mxu0 0.0
  %1847 = vmatprep.mubr.f32.mxu0 0.0
  %1848 = vmatmul.mubr.f32.gmra.mrb[0].mxu0 %v1760
  %v1849 = vpop.f32.mrb[0].mxu0
  %v1850 = vadd.f32 %v1721, %v1849
  %v1851 = vpop.f32.mrb[0].mxu0
  %1852 = vmatprep.mubr.f32.mxu0 0.0
  %1853 = vmatmul.mubr.f32.gmra.mrb[0].mxu0 %v1763
  %v1854 = vpop.f32.mrb[0].mxu0
  %v1855 = vadd.f32 %v1726, %v1854
  %v1856 = vpop.f32.mrb[0].mxu0
  %1857 = vmatprep.mubr.f32.mxu0 0.0
  %1858 = vmatmul.mubr.f32.gmra.mrb[0].mxu0 %v1766
  %v1859 = vpop.f32.mrb[0].mxu0
  %v1860 = vadd.f32 %v1731, %v1859
  %v1861 = vpop.f32.mrb[0].mxu0
  %1862 = vmatprep.mubr.f32.mxu0 0.0
  %1863 = vmatmul.mubr.f32.gmra.mrb[0].mxu0 %v1769
  %v1864 = vpop.f32.mrb[0].mxu0
  %v1865 = vadd.f32 %v1736, %v1864
  %v1866 = vpop.f32.mrb[0].mxu0
  %1867 = vmatprep.mubr.f32.mxu0 0.0
  %1868 = vmatmul.mubr.f32.gmra.mrb[0].mxu0 %v1772
  %v1869 = vpop.f32.mrb[0].mxu0
  %v1870 = vadd.f32 %v1741, %v1869
  %v1871 = vpop.f32.mrb[0].mxu0
  %1872 = vmatprep.mubr.f32.mxu0 0.0
  %1873 = vmatmul.mubr.f32.gmra.mrb[0].mxu0 %v1775
  %v1874 = vpop.f32.mrb[0].mxu0
  %v1875 = vadd.f32 %v1746, %v1874
  %v1876 = vpop.f32.mrb[0].mxu0
  %1877 = vmatprep.mubr.f32.mxu0 0.0
  %1878 = vmatmul.mubr.f32.gmra.mrb[0].mxu0 %v1778
  %v1879 = vpop.f32.mrb[0].mxu0
  %v1880 = vadd.f32 %v1751, %v1879
  %v1881 = vpop.f32.mrb[0].mxu0
  %1882 = vmatprep.mubr.f32.mxu0 0.0
  %1883 = vmatmul.mubr.f32.gmra.mrb[0].mxu0 %v1781
  %v1884 = vpop.f32.mrb[0].mxu0
  %v1885 = vadd.f32 %v1756, %v1884
  %v1886 = vpop.f32.mrb[0].mxu0
  %1887 = vdwg.mxu0
  %v1888 = vld [vmem:[#allocation2 + $0x8] sm:$0xff]
  %v1889 = vld [vmem:[#allocation2 + $0x20] sm:$0xff]
  %v1890 = vld [vmem:[#allocation2 + $0x38] sm:$0xff]
  %v1891 = vld [vmem:[#allocation2 + $0x50] sm:$0xff]
  %v1892 = vld [vmem:[#allocation2 + $0x68] sm:$0xff]
  %v1893 = vld [vmem:[#allocation2 + $0x80] sm:$0xff]
  %v1894 = vld [vmem:[#allocation2 + $0x98] sm:$0xff]
  %v1895 = vld [vmem:[#allocation2 + $0xb0] sm:$0xff]
  %s1896 = scalar_lea.vmem %s5, 128
  %v1897 = vld [vmem:[%s1896] sm:$0xff]
  %v1898 = vld [vmem:[%s1896 + $0x8] sm:$0xff]
  %v1899 = vld [vmem:[%s1896 + $0x10] sm:$0xff]
  %v1900 = vld [vmem:[%s1896 + $0x18] sm:$0xff]
  %v1901 = vld [vmem:[%s1896 + $0x20] sm:$0xff]
  %v1902 = vld [vmem:[%s1896 + $0x28] sm:$0xff]
  %v1903 = vld [vmem:[%s1896 + $0x30] sm:$0xff]
  %v1904 = vld [vmem:[%s1896 + $0x38] sm:$0xff]
  %v1906 = vsel %vm1588, %v1888, 0
  %v1909 = vsel %vm1588, %v1889, 0
  %v1912 = vsel %vm1588, %v1890, 0
  %v1915 = vsel %vm1588, %v1891, 0
  %v1918 = vsel %vm1588, %v1892, 0
  %v1921 = vsel %vm1588, %v1893, 0
  %v1924 = vsel %vm1588, %v1894, 0
  %v1927 = vsel %vm1588, %v1895, 0
  %1929 = vmatprep.subr.mxu0 0.0
  %1930 = vmatpush1.msra.mxu0 %v1897
  %1931 = vmatprep.subr.mxu0 0.0
  %1932 = vmatpush1.msra.mxu0 %v1898
  %1933 = vmatprep.subr.mxu0 0.0
  %1934 = vmatpush1.msra.mxu0 %v1899
  %1935 = vmatprep.subr.mxu0 0.0
  %1936 = vmatpush1.msra.mxu0 %v1900
  %1937 = vmatprep.subr.mxu0 0.0
  %1938 = vmatpush1.msra.mxu0 %v1901
  %1939 = vmatprep.subr.mxu0 0.0
  %1940 = vmatpush1.msra.mxu0 %v1902
  %1941 = vmatprep.subr.mxu0 0.0
  %1942 = vmatpush1.msra.mxu0 %v1903
  %1943 = vmatprep.subr.mxu0 0.0
  %1944 = vmatpush1.msra.mxu0 %v1904
  %1945 = vmatprep.subr.mxu0 0.0
  %1946 = vmatpush1.msra.mxu0 0.0
  %1947 = vmatprep.subr.mxu0 0.0
  %1948 = vmatpush1.msra.mxu0 0.0
  %1949 = vmatprep.subr.mxu0 0.0
  %1950 = vmatpush1.msra.mxu0 0.0
  %1951 = vmatprep.subr.mxu0 0.0
  %1952 = vmatpush1.msra.mxu0 0.0
  %1953 = vmatprep.subr.mxu0 0.0
  %1954 = vmatpush1.msra.mxu0 0.0
  %1955 = vmatprep.subr.mxu0 0.0
  %1956 = vmatpush1.msra.mxu0 0.0
  %1957 = vmatprep.subr.mxu0 0.0
  %1958 = vmatpush1.msra.mxu0 0.0
  %1959 = vmatprep.subr.mxu0 0.0
  %1960 = vmatpush1.msra.mxu0 0.0
  %1961 = vmatprep.subr.mxu0 0.0
  %1962 = vmatpush1.msra.mxu0 0.0
  %1963 = vmatprep.subr.mxu0 0.0
  %1964 = vmatpush1.msra.mxu0 0.0
  %1965 = vmatprep.subr.mxu0 0.0
  %1966 = vmatpush1.msra.mxu0 0.0
  %1967 = vmatprep.subr.mxu0 0.0
  %1968 = vmatpush1.msra.mxu0 0.0
  %1969 = vmatprep.subr.mxu0 0.0
  %1970 = vmatpush1.msra.mxu0 0.0
  %1971 = vmatprep.subr.mxu0 0.0
  %1972 = vmatpush1.msra.mxu0 0.0
  %1973 = vmatprep.subr.mxu0 0.0
  %1974 = vmatpush1.msra.mxu0 0.0
  %1975 = vmatprep.subr.mxu0 0.0
  %1976 = vmatpush1.msra.mxu0 0.0
  %1977 = vmatprep.subr.mxu0 0.0
  %1978 = vmatpush1.msra.mxu0 0.0
  %1979 = vmatprep.subr.mxu0 0.0
  %1980 = vmatpush1.msra.mxu0 0.0
  %1981 = vmatprep.subr.mxu0 0.0
  %1982 = vmatpush1.msra.mxu0 0.0
  %1983 = vmatprep.subr.mxu0 0.0
  %1984 = vmatpush1.msra.mxu0 0.0
  %1985 = vmatprep.subr.mxu0 0.0
  %1986 = vmatpush1.msra.mxu0 0.0
  %1987 = vmatprep.subr.mxu0 0.0
  %1988 = vmatpush1.msra.mxu0 0.0
  %1989 = vmatprep.subr.mxu0 0.0
  %1990 = vmatpush1.msra.mxu0 0.0
  %1991 = vmatprep.subr.mxu0 0.0
  %1992 = vmatpush1.msra.mxu0 0.0
  %1993 = vmatprep.mubr.f32.mxu0 0.0
  %1994 = vmatmul.mubr.f32.gmra.mrb[0].mxu0 %v1906
  %v1995 = vpop.f32.mrb[0].mxu0
  %v1996 = vadd.f32 0.0, %v1995
  %v1997 = vpop.f32.mrb[0].mxu0
  %1998 = vmatprep.mubr.f32.mxu0 0.0
  %1999 = vmatmul.mubr.f32.gmra.mrb[0].mxu0 %v1909
  %v2000 = vpop.f32.mrb[0].mxu0
  %v2001 = vadd.f32 0.0, %v2000
  %v2002 = vpop.f32.mrb[0].mxu0
  %2003 = vmatprep.mubr.f32.mxu0 0.0
  %2004 = vmatmul.mubr.f32.gmra.mrb[0].mxu0 %v1912
  %v2005 = vpop.f32.mrb[0].mxu0
  %v2006 = vadd.f32 0.0, %v2005
  %v2007 = vpop.f32.mrb[0].mxu0
  %2008 = vmatprep.mubr.f32.mxu0 0.0
  %2009 = vmatmul.mubr.f32.gmra.mrb[0].mxu0 %v1915
  %v2010 = vpop.f32.mrb[0].mxu0
  %v2011 = vadd.f32 0.0, %v2010
  %v2012 = vpop.f32.mrb[0].mxu0
  %2013 = vmatprep.mubr.f32.mxu0 0.0
  %2014 = vmatmul.mubr.f32.gmra.mrb[0].mxu0 %v1918
  %v2015 = vpop.f32.mrb[0].mxu0
  %v2016 = vadd.f32 0.0, %v2015
  %v2017 = vpop.f32.mrb[0].mxu0
  %2018 = vmatprep.mubr.f32.mxu0 0.0
  %2019 = vmatmul.mubr.f32.gmra.mrb[0].mxu0 %v1921
  %v2020 = vpop.f32.mrb[0].mxu0
  %v2021 = vadd.f32 0.0, %v2020
  %v2022 = vpop.f32.mrb[0].mxu0
  %2023 = vmatprep.mubr.f32.mxu0 0.0
  %2024 = vmatmul.mubr.f32.gmra.mrb[0].mxu0 %v1924
  %v2025 = vpop.f32.mrb[0].mxu0
  %v2026 = vadd.f32 0.0, %v2025
  %v2027 = vpop.f32.mrb[0].mxu0
  %2028 = vmatprep.mubr.f32.mxu0 0.0
  %2029 = vmatmul.mubr.f32.gmra.mrb[0].mxu0 %v1927
  %v2030 = vpop.f32.mrb[0].mxu0
  %v2031 = vadd.f32 0.0, %v2030
  %v2032 = vpop.f32.mrb[0].mxu0
  %2033 = vdwg.mxu0
  %v2034 = vadd.f32 %v1850, %v1996
  %v2035 = vadd.f32 %v1855, %v2001
  %v2036 = vadd.f32 %v1860, %v2006
  %v2037 = vadd.f32 %v1865, %v2011
  %v2038 = vadd.f32 %v1870, %v2016
  %v2039 = vadd.f32 %v1875, %v2021
  %v2040 = vadd.f32 %v1880, %v2026
  %v2041 = vadd.f32 %v1885, %v2031
  %v2042 = vld [vmem:[#allocation2 + $0x9] sm:$0xff]
  %v2043 = vld [vmem:[#allocation2 + $0x21] sm:$0xff]
  %v2044 = vld [vmem:[#allocation2 + $0x39] sm:$0xff]
  %v2045 = vld [vmem:[#allocation2 + $0x51] sm:$0xff]
  %v2046 = vld [vmem:[#allocation2 + $0x69] sm:$0xff]
  %v2047 = vld [vmem:[#allocation2 + $0x81] sm:$0xff]
  %v2048 = vld [vmem:[#allocation2 + $0x99] sm:$0xff]
  %v2049 = vld [vmem:[#allocation2 + $0xb1] sm:$0xff]
  %s2050 = scalar_lea.vmem %s5, 192
  %v2051 = vld [vmem:[%s2050] sm:$0xff]
  %v2052 = vld [vmem:[%s2050 + $0x8] sm:$0xff]
  %v2053 = vld [vmem:[%s2050 + $0x10] sm:$0xff]
  %v2054 = vld [vmem:[%s2050 + $0x18] sm:$0xff]
  %v2055 = vld [vmem:[%s2050 + $0x20] sm:$0xff]
  %v2056 = vld [vmem:[%s2050 + $0x28] sm:$0xff]
  %v2057 = vld [vmem:[%s2050 + $0x30] sm:$0xff]
  %v2058 = vld [vmem:[%s2050 + $0x38] sm:$0xff]
  %v2060 = vsel %vm1588, %v2042, 0
  %v2063 = vsel %vm1588, %v2043, 0
  %v2066 = vsel %vm1588, %v2044, 0
  %v2069 = vsel %vm1588, %v2045, 0
  %v2072 = vsel %vm1588, %v2046, 0
  %v2075 = vsel %vm1588, %v2047, 0
  %v2078 = vsel %vm1588, %v2048, 0
  %v2081 = vsel %vm1588, %v2049, 0
  %2083 = vmatprep.subr.mxu0 0.0
  %2084 = vmatpush1.msra.mxu0 %v2051
  %2085 = vmatprep.subr.mxu0 0.0
  %2086 = vmatpush1.msra.mxu0 %v2052
  %2087 = vmatprep.subr.mxu0 0.0
  %2088 = vmatpush1.msra.mxu0 %v2053
  %2089 = vmatprep.subr.mxu0 0.0
  %2090 = vmatpush1.msra.mxu0 %v2054
  %2091 = vmatprep.subr.mxu0 0.0
  %2092 = vmatpush1.msra.mxu0 %v2055
  %2093 = vmatprep.subr.mxu0 0.0
  %2094 = vmatpush1.msra.mxu0 %v2056
  %2095 = vmatprep.subr.mxu0 0.0
  %2096 = vmatpush1.msra.mxu0 %v2057
  %2097 = vmatprep.subr.mxu0 0.0
  %2098 = vmatpush1.msra.mxu0 %v2058
  %2099 = vmatprep.subr.mxu0 0.0
  %2100 = vmatpush1.msra.mxu0 0.0
  %2101 = vmatprep.subr.mxu0 0.0
  %2102 = vmatpush1.msra.mxu0 0.0
  %2103 = vmatprep.subr.mxu0 0.0
  %2104 = vmatpush1.msra.mxu0 0.0
  %2105 = vmatprep.subr.mxu0 0.0
  %2106 = vmatpush1.msra.mxu0 0.0
  %2107 = vmatprep.subr.mxu0 0.0
  %2108 = vmatpush1.msra.mxu0 0.0
  %2109 = vmatprep.subr.mxu0 0.0
  %2110 = vmatpush1.msra.mxu0 0.0
  %2111 = vmatprep.subr.mxu0 0.0
  %2112 = vmatpush1.msra.mxu0 0.0
  %2113 = vmatprep.subr.mxu0 0.0
  %2114 = vmatpush1.msra.mxu0 0.0
  %2115 = vmatprep.subr.mxu0 0.0
  %2116 = vmatpush1.msra.mxu0 0.0
  %2117 = vmatprep.subr.mxu0 0.0
  %2118 = vmatpush1.msra.mxu0 0.0
  %2119 = vmatprep.subr.mxu0 0.0
  %2120 = vmatpush1.msra.mxu0 0.0
  %2121 = vmatprep.subr.mxu0 0.0
  %2122 = vmatpush1.msra.mxu0 0.0
  %2123 = vmatprep.subr.mxu0 0.0
  %2124 = vmatpush1.msra.mxu0 0.0
  %2125 = vmatprep.subr.mxu0 0.0
  %2126 = vmatpush1.msra.mxu0 0.0
  %2127 = vmatprep.subr.mxu0 0.0
  %2128 = vmatpush1.msra.mxu0 0.0
  %2129 = vmatprep.subr.mxu0 0.0
  %2130 = vmatpush1.msra.mxu0 0.0
  %2131 = vmatprep.subr.mxu0 0.0
  %2132 = vmatpush1.msra.mxu0 0.0
  %2133 = vmatprep.subr.mxu0 0.0
  %2134 = vmatpush1.msra.mxu0 0.0
  %2135 = vmatprep.subr.mxu0 0.0
  %2136 = vmatpush1.msra.mxu0 0.0
  %2137 = vmatprep.subr.mxu0 0.0
  %2138 = vmatpush1.msra.mxu0 0.0
  %2139 = vmatprep.subr.mxu0 0.0
  %2140 = vmatpush1.msra.mxu0 0.0
  %2141 = vmatprep.subr.mxu0 0.0
  %2142 = vmatpush1.msra.mxu0 0.0
  %2143 = vmatprep.subr.mxu0 0.0
  %2144 = vmatpush1.msra.mxu0 0.0
  %2145 = vmatprep.subr.mxu0 0.0
  %2146 = vmatpush1.msra.mxu0 0.0
  %2147 = vmatprep.mubr.f32.mxu0 0.0
  %2148 = vmatmul.mubr.f32.gmra.mrb[0].mxu0 %v2060
  %v2149 = vpop.f32.mrb[0].mxu0
  %v2150 = vadd.f32 0.0, %v2149
  %v2151 = vpop.f32.mrb[0].mxu0
  %2152 = vmatprep.mubr.f32.mxu0 0.0
  %2153 = vmatmul.mubr.f32.gmra.mrb[0].mxu0 %v2063
  %v2154 = vpop.f32.mrb[0].mxu0
  %v2155 = vadd.f32 0.0, %v2154
  %v2156 = vpop.f32.mrb[0].mxu0
  %2157 = vmatprep.mubr.f32.mxu0 0.0
  %2158 = vmatmul.mubr.f32.gmra.mrb[0].mxu0 %v2066
  %v2159 = vpop.f32.mrb[0].mxu0
  %v2160 = vadd.f32 0.0, %v2159
  %v2161 = vpop.f32.mrb[0].mxu0
  %2162 = vmatprep.mubr.f32.mxu0 0.0
  %2163 = vmatmul.mubr.f32.gmra.mrb[0].mxu0 %v2069
  %v2164 = vpop.f32.mrb[0].mxu0
  %v2165 = vadd.f32 0.0, %v2164
  %v2166 = vpop.f32.mrb[0].mxu0
  %2167 = vmatprep.mubr.f32.mxu0 0.0
  %2168 = vmatmul.mubr.f32.gmra.mrb[0].mxu0 %v2072
  %v2169 = vpop.f32.mrb[0].mxu0
  %v2170 = vadd.f32 0.0, %v2169
  %v2171 = vpop.f32.mrb[0].mxu0
  %2172 = vmatprep.mubr.f32.mxu0 0.0
  %2173 = vmatmul.mubr.f32.gmra.mrb[0].mxu0 %v2075
  %v2174 = vpop.f32.mrb[0].mxu0
  %v2175 = vadd.f32 0.0, %v2174
  %v2176 = vpop.f32.mrb[0].mxu0
  %2177 = vmatprep.mubr.f32.mxu0 0.0
  %2178 = vmatmul.mubr.f32.gmra.mrb[0].mxu0 %v2078
  %v2179 = vpop.f32.mrb[0].mxu0
  %v2180 = vadd.f32 0.0, %v2179
  %v2181 = vpop.f32.mrb[0].mxu0
  %2182 = vmatprep.mubr.f32.mxu0 0.0
  %2183 = vmatmul.mubr.f32.gmra.mrb[0].mxu0 %v2081
  %v2184 = vpop.f32.mrb[0].mxu0
  %v2185 = vadd.f32 0.0, %v2184
  %v2186 = vpop.f32.mrb[0].mxu0
  %2187 = vdwg.mxu0
  %v2188 = vadd.f32 %v2034, %v2150
  %v2189 = vadd.f32 %v2035, %v2155
  %v2190 = vadd.f32 %v2036, %v2160
  %v2191 = vadd.f32 %v2037, %v2165
  %v2192 = vadd.f32 %v2038, %v2170
  %v2193 = vadd.f32 %v2039, %v2175
  %v2194 = vadd.f32 %v2040, %v2180
  %v2195 = vadd.f32 %v2041, %v2185
  %v2196 = vld [vmem:[#allocation2 + $0xa] sm:$0xff]
  %v2197 = vld [vmem:[#allocation2 + $0x22] sm:$0xff]
  %v2198 = vld [vmem:[#allocation2 + $0x3a] sm:$0xff]
  %v2199 = vld [vmem:[#allocation2 + $0x52] sm:$0xff]
  %v2200 = vld [vmem:[#allocation2 + $0x6a] sm:$0xff]
  %v2201 = vld [vmem:[#allocation2 + $0x82] sm:$0xff]
  %v2202 = vld [vmem:[#allocation2 + $0x9a] sm:$0xff]
  %v2203 = vld [vmem:[#allocation2 + $0xb2] sm:$0xff]
  %s2204 = scalar_lea.vmem %s5, 256
  %v2205 = vld [vmem:[%s2204] sm:$0xff]
  %v2206 = vld [vmem:[%s2204 + $0x8] sm:$0xff]
  %v2207 = vld [vmem:[%s2204 + $0x10] sm:$0xff]
  %v2208 = vld [vmem:[%s2204 + $0x18] sm:$0xff]
  %v2209 = vld [vmem:[%s2204 + $0x20] sm:$0xff]
  %v2210 = vld [vmem:[%s2204 + $0x28] sm:$0xff]
  %v2211 = vld [vmem:[%s2204 + $0x30] sm:$0xff]
  %v2212 = vld [vmem:[%s2204 + $0x38] sm:$0xff]
  %v2214 = vsel %vm1588, %v2196, 0
  %v2217 = vsel %vm1588, %v2197, 0
  %v2220 = vsel %vm1588, %v2198, 0
  %v2223 = vsel %vm1588, %v2199, 0
  %v2226 = vsel %vm1588, %v2200, 0
  %v2229 = vsel %vm1588, %v2201, 0
  %v2232 = vsel %vm1588, %v2202, 0
  %v2235 = vsel %vm1588, %v2203, 0
  %2237 = vmatprep.subr.mxu0 0.0
  %2238 = vmatpush1.msra.mxu0 %v2205
  %2239 = vmatprep.subr.mxu0 0.0
  %2240 = vmatpush1.msra.mxu0 %v2206
  %2241 = vmatprep.subr.mxu0 0.0
  %2242 = vmatpush1.msra.mxu0 %v2207
  %2243 = vmatprep.subr.mxu0 0.0
  %2244 = vmatpush1.msra.mxu0 %v2208
  %2245 = vmatprep.subr.mxu0 0.0
  %2246 = vmatpush1.msra.mxu0 %v2209
  %2247 = vmatprep.subr.mxu0 0.0
  %2248 = vmatpush1.msra.mxu0 %v2210
  %2249 = vmatprep.subr.mxu0 0.0
  %2250 = vmatpush1.msra.mxu0 %v2211
  %2251 = vmatprep.subr.mxu0 0.0
  %2252 = vmatpush1.msra.mxu0 %v2212
  %2253 = vmatprep.subr.mxu0 0.0
  %2254 = vmatpush1.msra.mxu0 0.0
  %2255 = vmatprep.subr.mxu0 0.0
  %2256 = vmatpush1.msra.mxu0 0.0
  %2257 = vmatprep.subr.mxu0 0.0
  %2258 = vmatpush1.msra.mxu0 0.0
  %2259 = vmatprep.subr.mxu0 0.0
  %2260 = vmatpush1.msra.mxu0 0.0
  %2261 = vmatprep.subr.mxu0 0.0
  %2262 = vmatpush1.msra.mxu0 0.0
  %2263 = vmatprep.subr.mxu0 0.0
  %2264 = vmatpush1.msra.mxu0 0.0
  %2265 = vmatprep.subr.mxu0 0.0
  %2266 = vmatpush1.msra.mxu0 0.0
  %2267 = vmatprep.subr.mxu0 0.0
  %2268 = vmatpush1.msra.mxu0 0.0
  %2269 = vmatprep.subr.mxu0 0.0
  %2270 = vmatpush1.msra.mxu0 0.0
  %2271 = vmatprep.subr.mxu0 0.0
  %2272 = vmatpush1.msra.mxu0 0.0
  %2273 = vmatprep.subr.mxu0 0.0
  %2274 = vmatpush1.msra.mxu0 0.0
  %2275 = vmatprep.subr.mxu0 0.0
  %2276 = vmatpush1.msra.mxu0 0.0
  %2277 = vmatprep.subr.mxu0 0.0
  %2278 = vmatpush1.msra.mxu0 0.0
  %2279 = vmatprep.subr.mxu0 0.0
  %2280 = vmatpush1.msra.mxu0 0.0
  %2281 = vmatprep.subr.mxu0 0.0
  %2282 = vmatpush1.msra.mxu0 0.0
  %2283 = vmatprep.subr.mxu0 0.0
  %2284 = vmatpush1.msra.mxu0 0.0
  %2285 = vmatprep.subr.mxu0 0.0
  %2286 = vmatpush1.msra.mxu0 0.0
  %2287 = vmatprep.subr.mxu0 0.0
  %2288 = vmatpush1.msra.mxu0 0.0
  %2289 = vmatprep.subr.mxu0 0.0
  %2290 = vmatpush1.msra.mxu0 0.0
  %2291 = vmatprep.subr.mxu0 0.0
  %2292 = vmatpush1.msra.mxu0 0.0
  %2293 = vmatprep.subr.mxu0 0.0
  %2294 = vmatpush1.msra.mxu0 0.0
  %2295 = vmatprep.subr.mxu0 0.0
  %2296 = vmatpush1.msra.mxu0 0.0
  %2297 = vmatprep.subr.mxu0 0.0
  %2298 = vmatpush1.msra.mxu0 0.0
  %2299 = vmatprep.subr.mxu0 0.0
  %2300 = vmatpush1.msra.mxu0 0.0
  %2301 = vmatprep.mubr.f32.mxu0 0.0
  %2302 = vmatmul.mubr.f32.gmra.mrb[0].mxu0 %v2214
  %v2303 = vpop.f32.mrb[0].mxu0
  %v2304 = vadd.f32 0.0, %v2303
  %v2305 = vpop.f32.mrb[0].mxu0
  %2306 = vmatprep.mubr.f32.mxu0 0.0
  %2307 = vmatmul.mubr.f32.gmra.mrb[0].mxu0 %v2217
  %v2308 = vpop.f32.mrb[0].mxu0
  %v2309 = vadd.f32 0.0, %v2308
  %v2310 = vpop.f32.mrb[0].mxu0
  %2311 = vmatprep.mubr.f32.mxu0 0.0
  %2312 = vmatmul.mubr.f32.gmra.mrb[0].mxu0 %v2220
  %v2313 = vpop.f32.mrb[0].mxu0
  %v2314 = vadd.f32 0.0, %v2313
  %v2315 = vpop.f32.mrb[0].mxu0
  %2316 = vmatprep.mubr.f32.mxu0 0.0
  %2317 = vmatmul.mubr.f32.gmra.mrb[0].mxu0 %v2223
  %v2318 = vpop.f32.mrb[0].mxu0
  %v2319 = vadd.f32 0.0, %v2318
  %v2320 = vpop.f32.mrb[0].mxu0
  %2321 = vmatprep.mubr.f32.mxu0 0.0
  %2322 = vmatmul.mubr.f32.gmra.mrb[0].mxu0 %v2226
  %v2323 = vpop.f32.mrb[0].mxu0
  %v2324 = vadd.f32 0.0, %v2323
  %v2325 = vpop.f32.mrb[0].mxu0
  %2326 = vmatprep.mubr.f32.mxu0 0.0
  %2327 = vmatmul.mubr.f32.gmra.mrb[0].mxu0 %v2229
  %v2328 = vpop.f32.mrb[0].mxu0
  %v2329 = vadd.f32 0.0, %v2328
  %v2330 = vpop.f32.mrb[0].mxu0
  %2331 = vmatprep.mubr.f32.mxu0 0.0
  %2332 = vmatmul.mubr.f32.gmra.mrb[0].mxu0 %v2232
  %v2333 = vpop.f32.mrb[0].mxu0
  %v2334 = vadd.f32 0.0, %v2333
  %v2335 = vpop.f32.mrb[0].mxu0
  %2336 = vmatprep.mubr.f32.mxu0 0.0
  %2337 = vmatmul.mubr.f32.gmra.mrb[0].mxu0 %v2235
  %v2338 = vpop.f32.mrb[0].mxu0
  %v2339 = vadd.f32 0.0, %v2338
  %v2340 = vpop.f32.mrb[0].mxu0
  %2341 = vdwg.mxu0
  %v2342 = vadd.f32 %v2188, %v2304
  %v2343 = vadd.f32 %v2189, %v2309
  %v2344 = vadd.f32 %v2190, %v2314
  %v2345 = vadd.f32 %v2191, %v2319
  %v2346 = vadd.f32 %v2192, %v2324
  %v2347 = vadd.f32 %v2193, %v2329
  %v2348 = vadd.f32 %v2194, %v2334
  %v2349 = vadd.f32 %v2195, %v2339
  %v2350 = vld [vmem:[%s6] sm:$0x1]
  %v2352 = vlaneseq
  %v2353 = vshrl.u32 %v2352, 7
  %v2354 = vsub.s32 0, %v2353
  %v2355 = vrot.slane %v2350, %v2354
  %v2357 = vadd.f32 %v2342, %v2355
  %v2358 = vadd.f32 %v2343, %v2355
  %v2359 = vadd.f32 %v2344, %v2355
  %v2360 = vadd.f32 %v2345, %v2355
  %v2361 = vadd.f32 %v2346, %v2355
  %v2362 = vadd.f32 %v2347, %v2355
  %v2363 = vadd.f32 %v2348, %v2355
  %v2364 = vadd.f32 %v2349, %v2355
  %v2365 = vmax.f32 %v2357, 0.0
  %v2366 = vmax.f32 %v2358, 0.0
  %v2367 = vmax.f32 %v2359, 0.0
  %v2368 = vmax.f32 %v2360, 0.0
  %v2369 = vmax.f32 %v2361, 0.0
  %v2370 = vmax.f32 %v2362, 0.0
  %v2371 = vmax.f32 %v2363, 0.0
  %v2372 = vmax.f32 %v2364, 0.0
  %2373 = vst.msk [vmem:[#allocation2 + $0x8] sm:$0xff] %vm823, %v2365
  %2374 = vst.msk [vmem:[#allocation2 + $0x20] sm:$0xff] %vm823, %v2366
  %2375 = vst.msk [vmem:[#allocation2 + $0x38] sm:$0xff] %vm823, %v2367
  %2376 = vst.msk [vmem:[#allocation2 + $0x50] sm:$0xff] %vm823, %v2368
  %2377 = vst.msk [vmem:[#allocation2 + $0x68] sm:$0xff] %vm823, %v2369
  %2378 = vst.msk [vmem:[#allocation2 + $0x80] sm:$0xff] %vm823, %v2370
  %2379 = vst.msk [vmem:[#allocation2 + $0x98] sm:$0xff] %vm823, %v2371
  %2380 = vst.msk [vmem:[#allocation2 + $0xb0] sm:$0xff] %vm823, %v2372
  %v2381 = vld [vmem:[#allocation2 + $0x6] sm:$0xff]
  %v2382 = vld [vmem:[#allocation2 + $0x1e] sm:$0xff]
  %v2383 = vld [vmem:[#allocation2 + $0x36] sm:$0xff]
  %v2384 = vld [vmem:[#allocation2 + $0x4e] sm:$0xff]
  %v2385 = vld [vmem:[#allocation2 + $0x66] sm:$0xff]
  %v2386 = vld [vmem:[#allocation2 + $0x7e] sm:$0xff]
  %v2387 = vld [vmem:[#allocation2 + $0x96] sm:$0xff]
  %v2388 = vld [vmem:[#allocation2 + $0xae] sm:$0xff]
  %v2389 = vld [vmem:[%s7] sm:$0xff]
  %v2390 = vld [vmem:[%s7 + $0x8] sm:$0xff]
  %v2391 = vld [vmem:[%s7 + $0x10] sm:$0xff]
  %v2392 = vld [vmem:[%s7 + $0x18] sm:$0xff]
  %v2393 = vld [vmem:[#allocation2 + $0x7] sm:$0xff]
  %v2394 = vld [vmem:[#allocation2 + $0x1f] sm:$0xff]
  %v2395 = vld [vmem:[#allocation2 + $0x37] sm:$0xff]
  %v2396 = vld [vmem:[#allocation2 + $0x4f] sm:$0xff]
  %v2397 = vld [vmem:[#allocation2 + $0x67] sm:$0xff]
  %v2398 = vld [vmem:[#allocation2 + $0x7f] sm:$0xff]
  %v2399 = vld [vmem:[#allocation2 + $0x97] sm:$0xff]
  %v2400 = vld [vmem:[#allocation2 + $0xaf] sm:$0xff]
  %s2401 = scalar_lea.vmem %s7, 32
  %v2402 = vld [vmem:[%s2401] sm:$0xff]
  %v2403 = vld [vmem:[%s2401 + $0x8] sm:$0xff]
  %v2404 = vld [vmem:[%s2401 + $0x10] sm:$0xff]
  %v2405 = vld [vmem:[%s2401 + $0x18] sm:$0xff]
  %v2407 = vsel %vm823, %v2393, 0
  %v2410 = vsel %vm823, %v2394, 0
  %v2413 = vsel %vm823, %v2395, 0
  %v2416 = vsel %vm823, %v2396, 0
  %v2419 = vsel %vm823, %v2397, 0
  %v2422 = vsel %vm823, %v2398, 0
  %v2425 = vsel %vm823, %v2399, 0
  %v2428 = vsel %vm823, %v2400, 0
  %2430 = vmatprep.subr.mxu0 0.0
  %2431 = vmatpush1.msra.mxu0 %v2402
  %2432 = vmatprep.subr.mxu0 0.0
  %2433 = vmatpush1.msra.mxu0 %v2403
  %2434 = vmatprep.subr.mxu0 0.0
  %2435 = vmatpush1.msra.mxu0 %v2404
  %2436 = vmatprep.subr.mxu0 0.0
  %2437 = vmatpush1.msra.mxu0 %v2405
  %2438 = vmatprep.subr.mxu0 0.0
  %2439 = vmatpush1.msra.mxu0 0.0
  %2440 = vmatprep.subr.mxu0 0.0
  %2441 = vmatpush1.msra.mxu0 0.0
  %2442 = vmatprep.subr.mxu0 0.0
  %2443 = vmatpush1.msra.mxu0 0.0
  %2444 = vmatprep.subr.mxu0 0.0
  %2445 = vmatpush1.msra.mxu0 0.0
  %2446 = vmatprep.subr.mxu0 0.0
  %2447 = vmatpush1.msra.mxu0 0.0
  %2448 = vmatprep.subr.mxu0 0.0
  %2449 = vmatpush1.msra.mxu0 0.0
  %2450 = vmatprep.subr.mxu0 0.0
  %2451 = vmatpush1.msra.mxu0 0.0
  %2452 = vmatprep.subr.mxu0 0.0
  %2453 = vmatpush1.msra.mxu0 0.0
  %2454 = vmatprep.subr.mxu0 0.0
  %2455 = vmatpush1.msra.mxu0 0.0
  %2456 = vmatprep.subr.mxu0 0.0
  %2457 = vmatpush1.msra.mxu0 0.0
  %2458 = vmatprep.subr.mxu0 0.0
  %2459 = vmatpush1.msra.mxu0 0.0
  %2460 = vmatprep.subr.mxu0 0.0
  %2461 = vmatpush1.msra.mxu0 0.0
  %2462 = vmatprep.subr.mxu0 0.0
  %2463 = vmatpush1.msra.mxu0 0.0
  %2464 = vmatprep.subr.mxu0 0.0
  %2465 = vmatpush1.msra.mxu0 0.0
  %2466 = vmatprep.subr.mxu0 0.0
  %2467 = vmatpush1.msra.mxu0 0.0
  %2468 = vmatprep.subr.mxu0 0.0
  %2469 = vmatpush1.msra.mxu0 0.0
  %2470 = vmatprep.subr.mxu0 0.0
  %2471 = vmatpush1.msra.mxu0 0.0
  %2472 = vmatprep.subr.mxu0 0.0
  %2473 = vmatpush1.msra.mxu0 0.0
  %2474 = vmatprep.subr.mxu0 0.0
  %2475 = vmatpush1.msra.mxu0 0.0
  %2476 = vmatprep.subr.mxu0 0.0
  %2477 = vmatpush1.msra.mxu0 0.0
  %2478 = vmatprep.subr.mxu0 0.0
  %2479 = vmatpush1.msra.mxu0 0.0
  %2480 = vmatprep.subr.mxu0 0.0
  %2481 = vmatpush1.msra.mxu0 0.0
  %2482 = vmatprep.subr.mxu0 0.0
  %2483 = vmatpush1.msra.mxu0 0.0
  %2484 = vmatprep.subr.mxu0 0.0
  %2485 = vmatpush1.msra.mxu0 0.0
  %2486 = vmatprep.subr.mxu0 0.0
  %2487 = vmatpush1.msra.mxu0 0.0
  %2488 = vmatprep.subr.mxu0 0.0
  %2489 = vmatpush1.msra.mxu0 0.0
  %2490 = vmatprep.subr.mxu0 0.0
  %2491 = vmatpush1.msra.mxu0 0.0
  %2492 = vmatprep.subr.mxu0 0.0
  %2493 = vmatpush1.msra.mxu0 0.0
  %2494 = vmatprep.mubr.f32.mxu0 0.0
  %2495 = vmatmul.mubr.f32.gmra.mrb[0].mxu0 %v2407
  %v2496 = vpop.f32.mrb[0].mxu0
  %v2497 = vadd.f32 0.0, %v2496
  %v2498 = vpop.f32.mrb[0].mxu0
  %2499 = vmatprep.mubr.f32.mxu0 0.0
  %2500 = vmatmul.mubr.f32.gmra.mrb[0].mxu0 %v2410
  %v2501 = vpop.f32.mrb[0].mxu0
  %v2502 = vadd.f32 0.0, %v2501
  %v2503 = vpop.f32.mrb[0].mxu0
  %2504 = vmatprep.mubr.f32.mxu0 0.0
  %2505 = vmatmul.mubr.f32.gmra.mrb[0].mxu0 %v2413
  %v2506 = vpop.f32.mrb[0].mxu0
  %v2507 = vadd.f32 0.0, %v2506
  %v2508 = vpop.f32.mrb[0].mxu0
  %2509 = vmatprep.mubr.f32.mxu0 0.0
  %2510 = vmatmul.mubr.f32.gmra.mrb[0].mxu0 %v2416
  %v2511 = vpop.f32.mrb[0].mxu0
  %v2512 = vadd.f32 0.0, %v2511
  %v2513 = vpop.f32.mrb[0].mxu0
  %2514 = vmatprep.mubr.f32.mxu0 0.0
  %2515 = vmatmul.mubr.f32.gmra.mrb[0].mxu0 %v2419
  %v2516 = vpop.f32.mrb[0].mxu0
  %v2517 = vadd.f32 0.0, %v2516
  %v2518 = vpop.f32.mrb[0].mxu0
  %2519 = vmatprep.mubr.f32.mxu0 0.0
  %2520 = vmatmul.mubr.f32.gmra.mrb[0].mxu0 %v2422
  %v2521 = vpop.f32.mrb[0].mxu0
  %v2522 = vadd.f32 0.0, %v2521
  %v2523 = vpop.f32.mrb[0].mxu0
  %2524 = vmatprep.mubr.f32.mxu0 0.0
  %2525 = vmatmul.mubr.f32.gmra.mrb[0].mxu0 %v2425
  %v2526 = vpop.f32.mrb[0].mxu0
  %v2527 = vadd.f32 0.0, %v2526
  %v2528 = vpop.f32.mrb[0].mxu0
  %2529 = vmatprep.mubr.f32.mxu0 0.0
  %2530 = vmatmul.mubr.f32.gmra.mrb[0].mxu0 %v2428
  %v2531 = vpop.f32.mrb[0].mxu0
  %v2532 = vadd.f32 0.0, %v2531
  %v2533 = vpop.f32.mrb[0].mxu0
  %2534 = vdwg.mxu0
  %v2536 = vsel %vm823, %v2381, 0
  %v2539 = vsel %vm823, %v2382, 0
  %v2542 = vsel %vm823, %v2383, 0
  %v2545 = vsel %vm823, %v2384, 0
  %v2548 = vsel %vm823, %v2385, 0
  %v2551 = vsel %vm823, %v2386, 0
  %v2554 = vsel %vm823, %v2387, 0
  %v2557 = vsel %vm823, %v2388, 0
  %2559 = vmatprep.subr.mxu0 0.0
  %2560 = vmatpush1.msra.mxu0 %v2389
  %2561 = vmatprep.subr.mxu0 0.0
  %2562 = vmatpush1.msra.mxu0 %v2390
  %2563 = vmatprep.subr.mxu0 0.0
  %2564 = vmatpush1.msra.mxu0 %v2391
  %2565 = vmatprep.subr.mxu0 0.0
  %2566 = vmatpush1.msra.mxu0 %v2392
  %2567 = vmatprep.subr.mxu0 0.0
  %2568 = vmatpush1.msra.mxu0 0.0
  %2569 = vmatprep.subr.mxu0 0.0
  %2570 = vmatpush1.msra.mxu0 0.0
  %2571 = vmatprep.subr.mxu0 0.0
  %2572 = vmatpush1.msra.mxu0 0.0
  %2573 = vmatprep.subr.mxu0 0.0
  %2574 = vmatpush1.msra.mxu0 0.0
  %2575 = vmatprep.subr.mxu0 0.0
  %2576 = vmatpush1.msra.mxu0 0.0
  %2577 = vmatprep.subr.mxu0 0.0
  %2578 = vmatpush1.msra.mxu0 0.0
  %2579 = vmatprep.subr.mxu0 0.0
  %2580 = vmatpush1.msra.mxu0 0.0
  %2581 = vmatprep.subr.mxu0 0.0
  %2582 = vmatpush1.msra.mxu0 0.0
  %2583 = vmatprep.subr.mxu0 0.0
  %2584 = vmatpush1.msra.mxu0 0.0
  %2585 = vmatprep.subr.mxu0 0.0
  %2586 = vmatpush1.msra.mxu0 0.0
  %2587 = vmatprep.subr.mxu0 0.0
  %2588 = vmatpush1.msra.mxu0 0.0
  %2589 = vmatprep.subr.mxu0 0.0
  %2590 = vmatpush1.msra.mxu0 0.0
  %2591 = vmatprep.subr.mxu0 0.0
  %2592 = vmatpush1.msra.mxu0 0.0
  %2593 = vmatprep.subr.mxu0 0.0
  %2594 = vmatpush1.msra.mxu0 0.0
  %2595 = vmatprep.subr.mxu0 0.0
  %2596 = vmatpush1.msra.mxu0 0.0
  %2597 = vmatprep.subr.mxu0 0.0
  %2598 = vmatpush1.msra.mxu0 0.0
  %2599 = vmatprep.subr.mxu0 0.0
  %2600 = vmatpush1.msra.mxu0 0.0
  %2601 = vmatprep.subr.mxu0 0.0
  %2602 = vmatpush1.msra.mxu0 0.0
  %2603 = vmatprep.subr.mxu0 0.0
  %2604 = vmatpush1.msra.mxu0 0.0
  %2605 = vmatprep.subr.mxu0 0.0
  %2606 = vmatpush1.msra.mxu0 0.0
  %2607 = vmatprep.subr.mxu0 0.0
  %2608 = vmatpush1.msra.mxu0 0.0
  %2609 = vmatprep.subr.mxu0 0.0
  %2610 = vmatpush1.msra.mxu0 0.0
  %2611 = vmatprep.subr.mxu0 0.0
  %2612 = vmatpush1.msra.mxu0 0.0
  %2613 = vmatprep.subr.mxu0 0.0
  %2614 = vmatpush1.msra.mxu0 0.0
  %2615 = vmatprep.subr.mxu0 0.0
  %2616 = vmatpush1.msra.mxu0 0.0
  %2617 = vmatprep.subr.mxu0 0.0
  %2618 = vmatpush1.msra.mxu0 0.0
  %2619 = vmatprep.subr.mxu0 0.0
  %2620 = vmatpush1.msra.mxu0 0.0
  %2621 = vmatprep.subr.mxu0 0.0
  %2622 = vmatpush1.msra.mxu0 0.0
  %2623 = vmatprep.mubr.f32.mxu0 0.0
  %2624 = vmatmul.mubr.f32.gmra.mrb[0].mxu0 %v2536
  %v2625 = vpop.f32.mrb[0].mxu0
  %v2626 = vadd.f32 %v2497, %v2625
  %v2627 = vpop.f32.mrb[0].mxu0
  %2628 = vmatprep.mubr.f32.mxu0 0.0
  %2629 = vmatmul.mubr.f32.gmra.mrb[0].mxu0 %v2539
  %v2630 = vpop.f32.mrb[0].mxu0
  %v2631 = vadd.f32 %v2502, %v2630
  %v2632 = vpop.f32.mrb[0].mxu0
  %2633 = vmatprep.mubr.f32.mxu0 0.0
  %2634 = vmatmul.mubr.f32.gmra.mrb[0].mxu0 %v2542
  %v2635 = vpop.f32.mrb[0].mxu0
  %v2636 = vadd.f32 %v2507, %v2635
  %v2637 = vpop.f32.mrb[0].mxu0
  %2638 = vmatprep.mubr.f32.mxu0 0.0
  %2639 = vmatmul.mubr.f32.gmra.mrb[0].mxu0 %v2545
  %v2640 = vpop.f32.mrb[0].mxu0
  %v2641 = vadd.f32 %v2512, %v2640
  %v2642 = vpop.f32.mrb[0].mxu0
  %2643 = vmatprep.mubr.f32.mxu0 0.0
  %2644 = vmatmul.mubr.f32.gmra.mrb[0].mxu0 %v2548
  %v2645 = vpop.f32.mrb[0].mxu0
  %v2646 = vadd.f32 %v2517, %v2645
  %v2647 = vpop.f32.mrb[0].mxu0
  %2648 = vmatprep.mubr.f32.mxu0 0.0
  %2649 = vmatmul.mubr.f32.gmra.mrb[0].mxu0 %v2551
  %v2650 = vpop.f32.mrb[0].mxu0
  %v2651 = vadd.f32 %v2522, %v2650
  %v2652 = vpop.f32.mrb[0].mxu0
  %2653 = vmatprep.mubr.f32.mxu0 0.0
  %2654 = vmatmul.mubr.f32.gmra.mrb[0].mxu0 %v2554
  %v2655 = vpop.f32.mrb[0].mxu0
  %v2656 = vadd.f32 %v2527, %v2655
  %v2657 = vpop.f32.mrb[0].mxu0
  %2658 = vmatprep.mubr.f32.mxu0 0.0
  %2659 = vmatmul.mubr.f32.gmra.mrb[0].mxu0 %v2557
  %v2660 = vpop.f32.mrb[0].mxu0
  %v2661 = vadd.f32 %v2532, %v2660
  %v2662 = vpop.f32.mrb[0].mxu0
  %2663 = vdwg.mxu0
  %v2664 = vld [vmem:[#allocation2 + $0x8] sm:$0xff]
  %v2665 = vld [vmem:[#allocation2 + $0x20] sm:$0xff]
  %v2666 = vld [vmem:[#allocation2 + $0x38] sm:$0xff]
  %v2667 = vld [vmem:[#allocation2 + $0x50] sm:$0xff]
  %v2668 = vld [vmem:[#allocation2 + $0x68] sm:$0xff]
  %v2669 = vld [vmem:[#allocation2 + $0x80] sm:$0xff]
  %v2670 = vld [vmem:[#allocation2 + $0x98] sm:$0xff]
  %v2671 = vld [vmem:[#allocation2 + $0xb0] sm:$0xff]
  %s2672 = scalar_lea.vmem %s7, 64
  %v2673 = vld [vmem:[%s2672] sm:$0xff]
  %v2674 = vld [vmem:[%s2672 + $0x8] sm:$0xff]
  %v2675 = vld [vmem:[%s2672 + $0x10] sm:$0xff]
  %v2676 = vld [vmem:[%s2672 + $0x18] sm:$0xff]
  %v2678 = vsel %vm823, %v2664, 0
  %v2681 = vsel %vm823, %v2665, 0
  %v2684 = vsel %vm823, %v2666, 0
  %v2687 = vsel %vm823, %v2667, 0
  %v2690 = vsel %vm823, %v2668, 0
  %v2693 = vsel %vm823, %v2669, 0
  %v2696 = vsel %vm823, %v2670, 0
  %v2699 = vsel %vm823, %v2671, 0
  %2701 = vmatprep.subr.mxu0 0.0
  %2702 = vmatpush1.msra.mxu0 %v2673
  %2703 = vmatprep.subr.mxu0 0.0
  %2704 = vmatpush1.msra.mxu0 %v2674
  %2705 = vmatprep.subr.mxu0 0.0
  %2706 = vmatpush1.msra.mxu0 %v2675
  %2707 = vmatprep.subr.mxu0 0.0
  %2708 = vmatpush1.msra.mxu0 %v2676
  %2709 = vmatprep.subr.mxu0 0.0
  %2710 = vmatpush1.msra.mxu0 0.0
  %2711 = vmatprep.subr.mxu0 0.0
  %2712 = vmatpush1.msra.mxu0 0.0
  %2713 = vmatprep.subr.mxu0 0.0
  %2714 = vmatpush1.msra.mxu0 0.0
  %2715 = vmatprep.subr.mxu0 0.0
  %2716 = vmatpush1.msra.mxu0 0.0
  %2717 = vmatprep.subr.mxu0 0.0
  %2718 = vmatpush1.msra.mxu0 0.0
  %2719 = vmatprep.subr.mxu0 0.0
  %2720 = vmatpush1.msra.mxu0 0.0
  %2721 = vmatprep.subr.mxu0 0.0
  %2722 = vmatpush1.msra.mxu0 0.0
  %2723 = vmatprep.subr.mxu0 0.0
  %2724 = vmatpush1.msra.mxu0 0.0
  %2725 = vmatprep.subr.mxu0 0.0
  %2726 = vmatpush1.msra.mxu0 0.0
  %2727 = vmatprep.subr.mxu0 0.0
  %2728 = vmatpush1.msra.mxu0 0.0
  %2729 = vmatprep.subr.mxu0 0.0
  %2730 = vmatpush1.msra.mxu0 0.0
  %2731 = vmatprep.subr.mxu0 0.0
  %2732 = vmatpush1.msra.mxu0 0.0
  %2733 = vmatprep.subr.mxu0 0.0
  %2734 = vmatpush1.msra.mxu0 0.0
  %2735 = vmatprep.subr.mxu0 0.0
  %2736 = vmatpush1.msra.mxu0 0.0
  %2737 = vmatprep.subr.mxu0 0.0
  %2738 = vmatpush1.msra.mxu0 0.0
  %2739 = vmatprep.subr.mxu0 0.0
  %2740 = vmatpush1.msra.mxu0 0.0
  %2741 = vmatprep.subr.mxu0 0.0
  %2742 = vmatpush1.msra.mxu0 0.0
  %2743 = vmatprep.subr.mxu0 0.0
  %2744 = vmatpush1.msra.mxu0 0.0
  %2745 = vmatprep.subr.mxu0 0.0
  %2746 = vmatpush1.msra.mxu0 0.0
  %2747 = vmatprep.subr.mxu0 0.0
  %2748 = vmatpush1.msra.mxu0 0.0
  %2749 = vmatprep.subr.mxu0 0.0
  %2750 = vmatpush1.msra.mxu0 0.0
  %2751 = vmatprep.subr.mxu0 0.0
  %2752 = vmatpush1.msra.mxu0 0.0
  %2753 = vmatprep.subr.mxu0 0.0
  %2754 = vmatpush1.msra.mxu0 0.0
  %2755 = vmatprep.subr.mxu0 0.0
  %2756 = vmatpush1.msra.mxu0 0.0
  %2757 = vmatprep.subr.mxu0 0.0
  %2758 = vmatpush1.msra.mxu0 0.0
  %2759 = vmatprep.subr.mxu0 0.0
  %2760 = vmatpush1.msra.mxu0 0.0
  %2761 = vmatprep.subr.mxu0 0.0
  %2762 = vmatpush1.msra.mxu0 0.0
  %2763 = vmatprep.subr.mxu0 0.0
  %2764 = vmatpush1.msra.mxu0 0.0
  %2765 = vmatprep.mubr.f32.mxu0 0.0
  %2766 = vmatmul.mubr.f32.gmra.mrb[0].mxu0 %v2678
  %v2767 = vpop.f32.mrb[0].mxu0
  %v2768 = vadd.f32 0.0, %v2767
  %v2769 = vpop.f32.mrb[0].mxu0
  %2770 = vmatprep.mubr.f32.mxu0 0.0
  %2771 = vmatmul.mubr.f32.gmra.mrb[0].mxu0 %v2681
  %v2772 = vpop.f32.mrb[0].mxu0
  %v2773 = vadd.f32 0.0, %v2772
  %v2774 = vpop.f32.mrb[0].mxu0
  %2775 = vmatprep.mubr.f32.mxu0 0.0
  %2776 = vmatmul.mubr.f32.gmra.mrb[0].mxu0 %v2684
  %v2777 = vpop.f32.mrb[0].mxu0
  %v2778 = vadd.f32 0.0, %v2777
  %v2779 = vpop.f32.mrb[0].mxu0
  %2780 = vmatprep.mubr.f32.mxu0 0.0
  %2781 = vmatmul.mubr.f32.gmra.mrb[0].mxu0 %v2687
  %v2782 = vpop.f32.mrb[0].mxu0
  %v2783 = vadd.f32 0.0, %v2782
  %v2784 = vpop.f32.mrb[0].mxu0
  %2785 = vmatprep.mubr.f32.mxu0 0.0
  %2786 = vmatmul.mubr.f32.gmra.mrb[0].mxu0 %v2690
  %v2787 = vpop.f32.mrb[0].mxu0
  %v2788 = vadd.f32 0.0, %v2787
  %v2789 = vpop.f32.mrb[0].mxu0
  %2790 = vmatprep.mubr.f32.mxu0 0.0
  %2791 = vmatmul.mubr.f32.gmra.mrb[0].mxu0 %v2693
  %v2792 = vpop.f32.mrb[0].mxu0
  %v2793 = vadd.f32 0.0, %v2792
  %v2794 = vpop.f32.mrb[0].mxu0
  %2795 = vmatprep.mubr.f32.mxu0 0.0
  %2796 = vmatmul.mubr.f32.gmra.mrb[0].mxu0 %v2696
  %v2797 = vpop.f32.mrb[0].mxu0
  %v2798 = vadd.f32 0.0, %v2797
  %v2799 = vpop.f32.mrb[0].mxu0
  %2800 = vmatprep.mubr.f32.mxu0 0.0
  %2801 = vmatmul.mubr.f32.gmra.mrb[0].mxu0 %v2699
  %v2802 = vpop.f32.mrb[0].mxu0
  %v2803 = vadd.f32 0.0, %v2802
  %v2804 = vpop.f32.mrb[0].mxu0
  %2805 = vdwg.mxu0
  %v2806 = vadd.f32 %v2626, %v2768
  %v2807 = vadd.f32 %v2631, %v2773
  %v2808 = vadd.f32 %v2636, %v2778
  %v2809 = vadd.f32 %v2641, %v2783
  %v2810 = vadd.f32 %v2646, %v2788
  %v2811 = vadd.f32 %v2651, %v2793
  %v2812 = vadd.f32 %v2656, %v2798
  %v2813 = vadd.f32 %v2661, %v2803
  %v2814 = vld [vmem:[#allocation2 + $0x9] sm:$0xff]
  %v2815 = vld [vmem:[#allocation2 + $0x21] sm:$0xff]
  %v2816 = vld [vmem:[#allocation2 + $0x39] sm:$0xff]
  %v2817 = vld [vmem:[#allocation2 + $0x51] sm:$0xff]
  %v2818 = vld [vmem:[#allocation2 + $0x69] sm:$0xff]
  %v2819 = vld [vmem:[#allocation2 + $0x81] sm:$0xff]
  %v2820 = vld [vmem:[#allocation2 + $0x99] sm:$0xff]
  %v2821 = vld [vmem:[#allocation2 + $0xb1] sm:$0xff]
  %s2822 = scalar_lea.vmem %s7, 96
  %v2823 = vld [vmem:[%s2822] sm:$0xff]
  %v2824 = vld [vmem:[%s2822 + $0x8] sm:$0xff]
  %v2825 = vld [vmem:[%s2822 + $0x10] sm:$0xff]
  %v2826 = vld [vmem:[%s2822 + $0x18] sm:$0xff]
  %v2828 = vsel %vm823, %v2814, 0
  %v2831 = vsel %vm823, %v2815, 0
  %v2834 = vsel %vm823, %v2816, 0
  %v2837 = vsel %vm823, %v2817, 0
  %v2840 = vsel %vm823, %v2818, 0
  %v2843 = vsel %vm823, %v2819, 0
  %v2846 = vsel %vm823, %v2820, 0
  %v2849 = vsel %vm823, %v2821, 0
  %2851 = vmatprep.subr.mxu0 0.0
  %2852 = vmatpush1.msra.mxu0 %v2823
  %2853 = vmatprep.subr.mxu0 0.0
  %2854 = vmatpush1.msra.mxu0 %v2824
  %2855 = vmatprep.subr.mxu0 0.0
  %2856 = vmatpush1.msra.mxu0 %v2825
  %2857 = vmatprep.subr.mxu0 0.0
  %2858 = vmatpush1.msra.mxu0 %v2826
  %2859 = vmatprep.subr.mxu0 0.0
  %2860 = vmatpush1.msra.mxu0 0.0
  %2861 = vmatprep.subr.mxu0 0.0
  %2862 = vmatpush1.msra.mxu0 0.0
  %2863 = vmatprep.subr.mxu0 0.0
  %2864 = vmatpush1.msra.mxu0 0.0
  %2865 = vmatprep.subr.mxu0 0.0
  %2866 = vmatpush1.msra.mxu0 0.0
  %2867 = vmatprep.subr.mxu0 0.0
  %2868 = vmatpush1.msra.mxu0 0.0
  %2869 = vmatprep.subr.mxu0 0.0
  %2870 = vmatpush1.msra.mxu0 0.0
  %2871 = vmatprep.subr.mxu0 0.0
  %2872 = vmatpush1.msra.mxu0 0.0
  %2873 = vmatprep.subr.mxu0 0.0
  %2874 = vmatpush1.msra.mxu0 0.0
  %2875 = vmatprep.subr.mxu0 0.0
  %2876 = vmatpush1.msra.mxu0 0.0
  %2877 = vmatprep.subr.mxu0 0.0
  %2878 = vmatpush1.msra.mxu0 0.0
  %2879 = vmatprep.subr.mxu0 0.0
  %2880 = vmatpush1.msra.mxu0 0.0
  %2881 = vmatprep.subr.mxu0 0.0
  %2882 = vmatpush1.msra.mxu0 0.0
  %2883 = vmatprep.subr.mxu0 0.0
  %2884 = vmatpush1.msra.mxu0 0.0
  %2885 = vmatprep.subr.mxu0 0.0
  %2886 = vmatpush1.msra.mxu0 0.0
  %2887 = vmatprep.subr.mxu0 0.0
  %2888 = vmatpush1.msra.mxu0 0.0
  %2889 = vmatprep.subr.mxu0 0.0
  %2890 = vmatpush1.msra.mxu0 0.0
  %2891 = vmatprep.subr.mxu0 0.0
  %2892 = vmatpush1.msra.mxu0 0.0
  %2893 = vmatprep.subr.mxu0 0.0
  %2894 = vmatpush1.msra.mxu0 0.0
  %2895 = vmatprep.subr.mxu0 0.0
  %2896 = vmatpush1.msra.mxu0 0.0
  %2897 = vmatprep.subr.mxu0 0.0
  %2898 = vmatpush1.msra.mxu0 0.0
  %2899 = vmatprep.subr.mxu0 0.0
  %2900 = vmatpush1.msra.mxu0 0.0
  %2901 = vmatprep.subr.mxu0 0.0
  %2902 = vmatpush1.msra.mxu0 0.0
  %2903 = vmatprep.subr.mxu0 0.0
  %2904 = vmatpush1.msra.mxu0 0.0
  %2905 = vmatprep.subr.mxu0 0.0
  %2906 = vmatpush1.msra.mxu0 0.0
  %2907 = vmatprep.subr.mxu0 0.0
  %2908 = vmatpush1.msra.mxu0 0.0
  %2909 = vmatprep.subr.mxu0 0.0
  %2910 = vmatpush1.msra.mxu0 0.0
  %2911 = vmatprep.subr.mxu0 0.0
  %2912 = vmatpush1.msra.mxu0 0.0
  %2913 = vmatprep.subr.mxu0 0.0
  %2914 = vmatpush1.msra.mxu0 0.0
  %2915 = vmatprep.mubr.f32.mxu0 0.0
  %2916 = vmatmul.mubr.f32.gmra.mrb[0].mxu0 %v2828
  %v2917 = vpop.f32.mrb[0].mxu0
  %v2918 = vadd.f32 0.0, %v2917
  %v2919 = vpop.f32.mrb[0].mxu0
  %2920 = vmatprep.mubr.f32.mxu0 0.0
  %2921 = vmatmul.mubr.f32.gmra.mrb[0].mxu0 %v2831
  %v2922 = vpop.f32.mrb[0].mxu0
  %v2923 = vadd.f32 0.0, %v2922
  %v2924 = vpop.f32.mrb[0].mxu0
  %2925 = vmatprep.mubr.f32.mxu0 0.0
  %2926 = vmatmul.mubr.f32.gmra.mrb[0].mxu0 %v2834
  %v2927 = vpop.f32.mrb[0].mxu0
  %v2928 = vadd.f32 0.0, %v2927
  %v2929 = vpop.f32.mrb[0].mxu0
  %2930 = vmatprep.mubr.f32.mxu0 0.0
  %2931 = vmatmul.mubr.f32.gmra.mrb[0].mxu0 %v2837
  %v2932 = vpop.f32.mrb[0].mxu0
  %v2933 = vadd.f32 0.0, %v2932
  %v2934 = vpop.f32.mrb[0].mxu0
  %2935 = vmatprep.mubr.f32.mxu0 0.0
  %2936 = vmatmul.mubr.f32.gmra.mrb[0].mxu0 %v2840
  %v2937 = vpop.f32.mrb[0].mxu0
  %v2938 = vadd.f32 0.0, %v2937
  %v2939 = vpop.f32.mrb[0].mxu0
  %2940 = vmatprep.mubr.f32.mxu0 0.0
  %2941 = vmatmul.mubr.f32.gmra.mrb[0].mxu0 %v2843
  %v2942 = vpop.f32.mrb[0].mxu0
  %v2943 = vadd.f32 0.0, %v2942
  %v2944 = vpop.f32.mrb[0].mxu0
  %2945 = vmatprep.mubr.f32.mxu0 0.0
  %2946 = vmatmul.mubr.f32.gmra.mrb[0].mxu0 %v2846
  %v2947 = vpop.f32.mrb[0].mxu0
  %v2948 = vadd.f32 0.0, %v2947
  %v2949 = vpop.f32.mrb[0].mxu0
  %2950 = vmatprep.mubr.f32.mxu0 0.0
  %2951 = vmatmul.mubr.f32.gmra.mrb[0].mxu0 %v2849
  %v2952 = vpop.f32.mrb[0].mxu0
  %v2953 = vadd.f32 0.0, %v2952
  %v2954 = vpop.f32.mrb[0].mxu0
  %2955 = vdwg.mxu0
  %v2956 = vadd.f32 %v2806, %v2918
  %v2957 = vadd.f32 %v2807, %v2923
  %v2958 = vadd.f32 %v2808, %v2928
  %v2959 = vadd.f32 %v2809, %v2933
  %v2960 = vadd.f32 %v2810, %v2938
  %v2961 = vadd.f32 %v2811, %v2943
  %v2962 = vadd.f32 %v2812, %v2948
  %v2963 = vadd.f32 %v2813, %v2953
  %v2964 = vld [vmem:[#allocation2 + $0xa] sm:$0xff]
  %v2965 = vld [vmem:[#allocation2 + $0x22] sm:$0xff]
  %v2966 = vld [vmem:[#allocation2 + $0x3a] sm:$0xff]
  %v2967 = vld [vmem:[#allocation2 + $0x52] sm:$0xff]
  %v2968 = vld [vmem:[#allocation2 + $0x6a] sm:$0xff]
  %v2969 = vld [vmem:[#allocation2 + $0x82] sm:$0xff]
  %v2970 = vld [vmem:[#allocation2 + $0x9a] sm:$0xff]
  %v2971 = vld [vmem:[#allocation2 + $0xb2] sm:$0xff]
  %s2972 = scalar_lea.vmem %s7, 128
  %v2973 = vld [vmem:[%s2972] sm:$0xff]
  %v2974 = vld [vmem:[%s2972 + $0x8] sm:$0xff]
  %v2975 = vld [vmem:[%s2972 + $0x10] sm:$0xff]
  %v2976 = vld [vmem:[%s2972 + $0x18] sm:$0xff]
  %v2978 = vsel %vm823, %v2964, 0
  %v2981 = vsel %vm823, %v2965, 0
  %v2984 = vsel %vm823, %v2966, 0
  %v2987 = vsel %vm823, %v2967, 0
  %v2990 = vsel %vm823, %v2968, 0
  %v2993 = vsel %vm823, %v2969, 0
  %v2996 = vsel %vm823, %v2970, 0
  %v2999 = vsel %vm823, %v2971, 0
  %3001 = vmatprep.subr.mxu0 0.0
  %3002 = vmatpush1.msra.mxu0 %v2973
  %3003 = vmatprep.subr.mxu0 0.0
  %3004 = vmatpush1.msra.mxu0 %v2974
  %3005 = vmatprep.subr.mxu0 0.0
  %3006 = vmatpush1.msra.mxu0 %v2975
  %3007 = vmatprep.subr.mxu0 0.0
  %3008 = vmatpush1.msra.mxu0 %v2976
  %3009 = vmatprep.subr.mxu0 0.0
  %3010 = vmatpush1.msra.mxu0 0.0
  %3011 = vmatprep.subr.mxu0 0.0
  %3012 = vmatpush1.msra.mxu0 0.0
  %3013 = vmatprep.subr.mxu0 0.0
  %3014 = vmatpush1.msra.mxu0 0.0
  %3015 = vmatprep.subr.mxu0 0.0
  %3016 = vmatpush1.msra.mxu0 0.0
  %3017 = vmatprep.subr.mxu0 0.0
  %3018 = vmatpush1.msra.mxu0 0.0
  %3019 = vmatprep.subr.mxu0 0.0
  %3020 = vmatpush1.msra.mxu0 0.0
  %3021 = vmatprep.subr.mxu0 0.0
  %3022 = vmatpush1.msra.mxu0 0.0
  %3023 = vmatprep.subr.mxu0 0.0
  %3024 = vmatpush1.msra.mxu0 0.0
  %3025 = vmatprep.subr.mxu0 0.0
  %3026 = vmatpush1.msra.mxu0 0.0
  %3027 = vmatprep.subr.mxu0 0.0
  %3028 = vmatpush1.msra.mxu0 0.0
  %3029 = vmatprep.subr.mxu0 0.0
  %3030 = vmatpush1.msra.mxu0 0.0
  %3031 = vmatprep.subr.mxu0 0.0
  %3032 = vmatpush1.msra.mxu0 0.0
  %3033 = vmatprep.subr.mxu0 0.0
  %3034 = vmatpush1.msra.mxu0 0.0
  %3035 = vmatprep.subr.mxu0 0.0
  %3036 = vmatpush1.msra.mxu0 0.0
  %3037 = vmatprep.subr.mxu0 0.0
  %3038 = vmatpush1.msra.mxu0 0.0
  %3039 = vmatprep.subr.mxu0 0.0
  %3040 = vmatpush1.msra.mxu0 0.0
  %3041 = vmatprep.subr.mxu0 0.0
  %3042 = vmatpush1.msra.mxu0 0.0
  %3043 = vmatprep.subr.mxu0 0.0
  %3044 = vmatpush1.msra.mxu0 0.0
  %3045 = vmatprep.subr.mxu0 0.0
  %3046 = vmatpush1.msra.mxu0 0.0
  %3047 = vmatprep.subr.mxu0 0.0
  %3048 = vmatpush1.msra.mxu0 0.0
  %3049 = vmatprep.subr.mxu0 0.0
  %3050 = vmatpush1.msra.mxu0 0.0
  %3051 = vmatprep.subr.mxu0 0.0
  %3052 = vmatpush1.msra.mxu0 0.0
  %3053 = vmatprep.subr.mxu0 0.0
  %3054 = vmatpush1.msra.mxu0 0.0
  %3055 = vmatprep.subr.mxu0 0.0
  %3056 = vmatpush1.msra.mxu0 0.0
  %3057 = vmatprep.subr.mxu0 0.0
  %3058 = vmatpush1.msra.mxu0 0.0
  %3059 = vmatprep.subr.mxu0 0.0
  %3060 = vmatpush1.msra.mxu0 0.0
  %3061 = vmatprep.subr.mxu0 0.0
  %3062 = vmatpush1.msra.mxu0 0.0
  %3063 = vmatprep.subr.mxu0 0.0
  %3064 = vmatpush1.msra.mxu0 0.0
  %3065 = vmatprep.mubr.f32.mxu0 0.0
  %3066 = vmatmul.mubr.f32.gmra.mrb[0].mxu0 %v2978
  %v3067 = vpop.f32.mrb[0].mxu0
  %v3068 = vadd.f32 0.0, %v3067
  %v3069 = vpop.f32.mrb[0].mxu0
  %3070 = vmatprep.mubr.f32.mxu0 0.0
  %3071 = vmatmul.mubr.f32.gmra.mrb[0].mxu0 %v2981
  %v3072 = vpop.f32.mrb[0].mxu0
  %v3073 = vadd.f32 0.0, %v3072
  %v3074 = vpop.f32.mrb[0].mxu0
  %3075 = vmatprep.mubr.f32.mxu0 0.0
  %3076 = vmatmul.mubr.f32.gmra.mrb[0].mxu0 %v2984
  %v3077 = vpop.f32.mrb[0].mxu0
  %v3078 = vadd.f32 0.0, %v3077
  %v3079 = vpop.f32.mrb[0].mxu0
  %3080 = vmatprep.mubr.f32.mxu0 0.0
  %3081 = vmatmul.mubr.f32.gmra.mrb[0].mxu0 %v2987
  %v3082 = vpop.f32.mrb[0].mxu0
  %v3083 = vadd.f32 0.0, %v3082
  %v3084 = vpop.f32.mrb[0].mxu0
  %3085 = vmatprep.mubr.f32.mxu0 0.0
  %3086 = vmatmul.mubr.f32.gmra.mrb[0].mxu0 %v2990
  %v3087 = vpop.f32.mrb[0].mxu0
  %v3088 = vadd.f32 0.0, %v3087
  %v3089 = vpop.f32.mrb[0].mxu0
  %3090 = vmatprep.mubr.f32.mxu0 0.0
  %3091 = vmatmul.mubr.f32.gmra.mrb[0].mxu0 %v2993
  %v3092 = vpop.f32.mrb[0].mxu0
  %v3093 = vadd.f32 0.0, %v3092
  %v3094 = vpop.f32.mrb[0].mxu0
  %3095 = vmatprep.mubr.f32.mxu0 0.0
  %3096 = vmatmul.mubr.f32.gmra.mrb[0].mxu0 %v2996
  %v3097 = vpop.f32.mrb[0].mxu0
  %v3098 = vadd.f32 0.0, %v3097
  %v3099 = vpop.f32.mrb[0].mxu0
  %3100 = vmatprep.mubr.f32.mxu0 0.0
  %3101 = vmatmul.mubr.f32.gmra.mrb[0].mxu0 %v2999
  %v3102 = vpop.f32.mrb[0].mxu0
  %v3103 = vadd.f32 0.0, %v3102
  %v3104 = vpop.f32.mrb[0].mxu0
  %3105 = vdwg.mxu0
  %v3106 = vadd.f32 %v2956, %v3068
  %v3107 = vadd.f32 %v2957, %v3073
  %v3108 = vadd.f32 %v2958, %v3078
  %v3109 = vadd.f32 %v2959, %v3083
  %v3110 = vadd.f32 %v2960, %v3088
  %v3111 = vadd.f32 %v2961, %v3093
  %v3112 = vadd.f32 %v2962, %v3098
  %v3113 = vadd.f32 %v2963, %v3103
  %v3114 = vld [vmem:[%s8] sm:$0x1]
  %v3116 = vlaneseq
  %v3117 = vshrl.u32 %v3116, 7
  %v3118 = vsub.s32 0, %v3117
  %v3119 = vrot.slane %v3114, %v3118
  %v3121 = vadd.f32 %v3106, %v3119
  %v3122 = vadd.f32 %v3107, %v3119
  %v3123 = vadd.f32 %v3108, %v3119
  %v3124 = vadd.f32 %v3109, %v3119
  %v3125 = vadd.f32 %v3110, %v3119
  %v3126 = vadd.f32 %v3111, %v3119
  %v3127 = vadd.f32 %v3112, %v3119
  %v3128 = vadd.f32 %v3113, %v3119
  %3129 = vst.msk [vmem:[%s9] sm:$0xff] %vm57, %v3121
  %3130 = vst.msk [vmem:[%s9 + $0x8] sm:$0xff] %vm57, %v3122
  %3131 = vst.msk [vmem:[%s9 + $0x10] sm:$0xff] %vm57, %v3123
  %3132 = vst.msk [vmem:[%s9 + $0x18] sm:$0xff] %vm57, %v3124
  %3133 = vst.msk [vmem:[%s9 + $0x20] sm:$0xff] %vm57, %v3125
  %3134 = vst.msk [vmem:[%s9 + $0x28] sm:$0xff] %vm57, %v3126
  %3135 = vst.msk [vmem:[%s9 + $0x30] sm:$0xff] %vm57, %v3127
  %3136 = vst.msk [vmem:[%s9 + $0x38] sm:$0xff] %vm57, %v3128
  // Predicated region
  $region38: #{tpu_custom_call.1} parent=0 // pred_check
    _
  $region39: #{tpu_custom_call.1} parent=0 // pred_check_branch
    %3138 = sbr.rel (0) target = $region41
  $region40: #{tpu_custom_call.1} parent=0 // pred_region
    _
  $region41: #{tpu_custom_call.1} parent=0 // pred_fallthru
    _
  // Predicated region
  $region42: #{tpu_custom_call.1} parent=0 // pred_check
    _
  $region43: #{tpu_custom_call.1} parent=0 // pred_check_branch
    %3140 = sbr.rel (0) target = $region45
  $region44: #{tpu_custom_call.1} parent=0 // pred_region
    _
  $region45: #{tpu_custom_call.1} parent=0 // pred_fallthru
    _

</llo_original>
